<compile_context>
chip_gen: v7x
topology: tpu7x:2x2x1
jax: 0.10.0
libtpu: 0.0.40
codegen_flags: <defaults>
</compile_context>

<pallas_src>
import functools

import jax
import jax.numpy as jnp
from jax.experimental import pallas as pl
from jax.experimental.pallas import tpu as pltpu


# Set to jnp.bfloat16 on v6e/v7x for higher MXU throughput (accumulation stays
# f32 via preferred_element_type).  Kept f32 here to preserve exact reference
# numerics; on v5e keep elementwise math in f32 regardless.
MATMUL_INPUT_DTYPE = jnp.float32

_VMEM_LIMIT = 48 * 1024 * 1024  # explicit, with headroom for v7x's 64 MiB VMEM


def _row_tile(m):
    # Full rows if they fit comfortably, else 512-row tiles (divisible by 8).
    return m if m <= 512 else 512


# ----------------------------------------------------------------------------
# Linear kernels (FCNet) with fused epilogues
# ----------------------------------------------------------------------------
def _lin_kernel(x_ref, w_ref, b_ref, o_ref):
    x = x_ref[...].astype(MATMUL_INPUT_DTYPE)
    w = w_ref[...].astype(MATMUL_INPUT_DTYPE)
    o_ref[...] = jnp.dot(x, w, preferred_element_type=jnp.float32) + b_ref[...]


def _lin_mask_kernel(x_ref, w_ref, b_ref, s_ref, o_ref):
    # y = (x @ W + b) * row_scale    (row_scale = per-row mask, [tm, 1])
    x = x_ref[...].astype(MATMUL_INPUT_DTYPE)
    w = w_ref[...].astype(MATMUL_INPUT_DTYPE)
    y = jnp.dot(x, w, preferred_element_type=jnp.float32) + b_ref[...]
    o_ref[...] = y * s_ref[...]


def _lin_res_kernel(x1_ref, x2_ref, w_ref, b_ref, o_ref):
    # y = (x1 + x2) @ W + b          (residual add fused into the matmul input)
    x = (x1_ref[...] + x2_ref[...]).astype(MATMUL_INPUT_DTYPE)
    w = w_ref[...].astype(MATMUL_INPUT_DTYPE)
    o_ref[...] = jnp.dot(x, w, preferred_element_type=jnp.float32) + b_ref[...]


def _lin_cat_kernel(x1_ref, w1_ref, x2_ref, w2_ref, b_ref, o_ref):
    # y = concat(x1, x2) @ W + b  ==  x1 @ W1 + x2 @ W2 + b   (concat never built)
    y = jnp.dot(x1_ref[...].astype(MATMUL_INPUT_DTYPE),
                w1_ref[...].astype(MATMUL_INPUT_DTYPE),
                preferred_element_type=jnp.float32)
    y = y + jnp.dot(x2_ref[...].astype(MATMUL_INPUT_DTYPE),
                    w2_ref[...].astype(MATMUL_INPUT_DTYPE),
                    preferred_element_type=jnp.float32)
    o_ref[...] = y + b_ref[...]


def _compiler_params():
    return pltpu.CompilerParams(dimension_semantics=("parallel",),
                                vmem_limit_bytes=_VMEM_LIMIT)


def _row_spec(tm, ncols):
    return pl.BlockSpec((tm, ncols), lambda i: (i, 0))


def _full_spec(nrows, ncols):
    return pl.BlockSpec((nrows, ncols), lambda i: (0, 0))


def linear_pallas(x2d, w, b):
    """y = x @ W + b, tiled over rows."""
    m, din = x2d.shape
    dout = w.shape[1]
    tm = _row_tile(m)
    return pl.pallas_call(
        _lin_kernel,
        grid=(pl.cdiv(m, tm),),
        in_specs=[_row_spec(tm, din), _full_spec(din, dout), _full_spec(1, dout)],
        out_specs=_row_spec(tm, dout),
        out_shape=jax.ShapeDtypeStruct((m, dout), jnp.float32),
        compiler_params=_compiler_params(),
    )(x2d, w, b)


def linear_mask_pallas(x2d, w, b, row_scale):
    """y = (x @ W + b) * row_scale, tiled over rows."""
    m, din = x2d.shape
    dout = w.shape[1]
    tm = _row_tile(m)
    return pl.pallas_call(
        _lin_mask_kernel,
        grid=(pl.cdiv(m, tm),),
        in_specs=[_row_spec(tm, din), _full_spec(din, dout), _full_spec(1, dout),
                  _row_spec(tm, 1)],
        out_specs=_row_spec(tm, dout),
        out_shape=jax.ShapeDtypeStruct((m, dout), jnp.float32),
        compiler_params=_compiler_params(),
    )(x2d, w, b, row_scale)


def linear_res_pallas(x1, x2, w, b):
    """y = (x1 + x2) @ W + b, tiled over rows."""
    m, din = x1.shape
    dout = w.shape[1]
    tm = _row_tile(m)
    return pl.pallas_call(
        _lin_res_kernel,
        grid=(pl.cdiv(m, tm),),
        in_specs=[_row_spec(tm, din), _row_spec(tm, din),
                  _full_spec(din, dout), _full_spec(1, dout)],
        out_specs=_row_spec(tm, dout),
        out_shape=jax.ShapeDtypeStruct((m, dout), jnp.float32),
        compiler_params=_compiler_params(),
    )(x1, x2, w, b)


def linear_cat_pallas(x1, w1, x2, w2, b):
    """y = concat([x1, x2], -1) @ concat([w1; w2], 0) + b, concat fused away."""
    m, d1 = x1.shape
    _, d2 = x2.shape
    dout = w1.shape[1]
    tm = _row_tile(m)
    return pl.pallas_call(
        _lin_cat_kernel,
        grid=(pl.cdiv(m, tm),),
        in_specs=[_row_spec(tm, d1), _full_spec(d1, dout),
                  _row_spec(tm, d2), _full_spec(d2, dout),
                  _full_spec(1, dout)],
        out_specs=_row_spec(tm, dout),
        out_shape=jax.ShapeDtypeStruct((m, dout), jnp.float32),
        compiler_params=_compiler_params(),
    )(x1, w1, x2, w2, b)


# ----------------------------------------------------------------------------
# Multi-head masked attention kernel (all heads batched in one contraction)
# ----------------------------------------------------------------------------
def _attn_core(q, k, v, bias):
    # q: [H, Nt, dh]  k, v: [H, Ns, dh]  bias: [1, Ns] additive mask bias
    logits = jnp.einsum("htd,hsd->hts",
                        q.astype(MATMUL_INPUT_DTYPE), k.astype(MATMUL_INPUT_DTYPE),
                        preferred_element_type=jnp.float32)          # [H, Nt, Ns]
    logits = logits + bias[None, :, :]
    mx = jnp.max(logits, axis=-1, keepdims=True)
    e = jnp.exp(logits - mx)
    denom = jnp.sum(e, axis=-1, keepdims=True)
    p = e * pl.reciprocal(denom, approx=True)                        # softmax
    return jnp.einsum("hts,hsd->htd",
                      p.astype(MATMUL_INPUT_DTYPE), v.astype(MATMUL_INPUT_DTYPE),
                      preferred_element_type=jnp.float32)            # [H, Nt, dh]


def _mha_kernel(q_ref, k_ref, v_ref, bias_ref, o_ref, *, inv_scale):
    q = q_ref[0] * inv_scale                 # pre-scale q instead of logits/scale
    o_ref[0] = _attn_core(q, k_ref[0], v_ref[0], bias_ref[0])


def _mha_gated_kernel(q_ref, k_ref, v_ref, bias_ref, g_ref, o_ref, *, inv_scale):
    g = g_ref[0]                             # [H, 1, dh]  (= 1 + sigmoid gate)
    q = q_ref[0] * (g * inv_scale)
    k = k_ref[0] * g
    v = v_ref[0] * g
    o_ref[0] = _attn_core(q, k, v, bias_ref[0])


def mha_pallas(qry, key, val, src_mask, num_head, scale, gate=None):
    """softmax(mask(q_h k_h^T / scale)) @ v_h, heads batched; optional (1+gate)."""
    B, Nt, D = qry.shape
    _, Ns, _ = key.shape
    H = num_head
    dh = D // H
    inv_scale = 1.0 / float(scale)

    # Head-major layout [B, H, N, dh]; reshape/transpose stays in XLA and fuses
    # with the producing / consuming elementwise ops.
    qh = qry.reshape(B, Nt, H, dh).transpose(0, 2, 1, 3)
    kh = key.reshape(B, Ns, H, dh).transpose(0, 2, 1, 3)
    vh = val.reshape(B, Ns, H, dh).transpose(0, 2, 1, 3)
    # Additive mask bias: 0 where valid, -1e30 where masked (no inf/NaN risk).
    bias = ((src_mask.astype(jnp.float32) - 1.0) * 1e30).reshape(B, 1, Ns)

    in_specs = [
        pl.BlockSpec((1, H, Nt, dh), lambda b: (b, 0, 0, 0)),
        pl.BlockSpec((1, H, Ns, dh), lambda b: (b, 0, 0, 0)),
        pl.BlockSpec((1, H, Ns, dh), lambda b: (b, 0, 0, 0)),
        pl.BlockSpec((1, 1, Ns), lambda b: (b, 0, 0)),
    ]
    args = [qh, kh, vh, bias]
    if gate is None:
        kern = functools.partial(_mha_kernel, inv_scale=inv_scale)
    else:
        gh = gate.reshape(B, 1, H, dh).transpose(0, 2, 1, 3)   # [B, H, 1, dh]
        in_specs.append(pl.BlockSpec((1, H, 1, dh), lambda b: (b, 0, 0, 0)))
        args.append(gh)
        kern = functools.partial(_mha_gated_kernel, inv_scale=inv_scale)

    out = pl.pallas_call(
        kern,
        grid=(B,),
        in_specs=in_specs,
        out_specs=pl.BlockSpec((1, H, Nt, dh), lambda b: (b, 0, 0, 0)),
        out_shape=jax.ShapeDtypeStruct((B, H, Nt, dh), jnp.float32),
        compiler_params=_compiler_params(),
    )(*args)
    return out.transpose(0, 2, 1, 3).reshape(B, Nt, D)


# ----------------------------------------------------------------------------
# FCNet params (weight-normed Linear at init == plain Linear; drop=0.0 no-op)
# ----------------------------------------------------------------------------
def fcnet_init(key, din, dout):
    k1, k2 = jax.random.split(key)
    return {"w": jax.random.normal(k1, (din, dout), jnp.float32) * 0.05,
            "b": jax.random.normal(k2, (1, dout), jnp.float32) * 0.05}


def fcnet_apply(p, x):
    B, N, din = x.shape
    dout = p["w"].shape[1]
    return linear_pallas(x.reshape(B * N, din), p["w"], p["b"]).reshape(B, N, dout)


# ----------------------------------------------------------------------------
# OneSideInterModalityUpdate
# ----------------------------------------------------------------------------
def inter_init(key, src_size, tgt_size, output_size):
    k1, k2, k3 = jax.random.split(key, 3)
    return {"src_lin": fcnet_init(k1, src_size, output_size * 2),
            "tgt_lin": fcnet_init(k2, tgt_size, output_size),
            "tgt_output": fcnet_init(k3, output_size + tgt_size, output_size)}


def inter_apply(p, src, tgt, src_mask, tgt_mask, output_size, num_head):
    B, Ns, Ds = src.shape
    _, Nt, Dt = tgt.shape
    src_scale = src_mask.astype(jnp.float32).reshape(B * Ns, 1)
    tgt_scale = tgt_mask.astype(jnp.float32).reshape(B * Nt, 1)

    # projection with the row-mask multiply fused into the kernel
    src_trans = linear_mask_pallas(src.reshape(B * Ns, Ds), p["src_lin"]["w"],
                                   p["src_lin"]["b"], src_scale
                                   ).reshape(B, Ns, 2 * output_size)
    tgt_qry = linear_mask_pallas(tgt.reshape(B * Nt, Dt), p["tgt_lin"]["w"],
                                 p["tgt_lin"]["b"], tgt_scale
                                 ).reshape(B, Nt, output_size)
    src_key = src_trans[:, :, :output_size]
    src_val = src_trans[:, :, output_size:]

    scale = float(output_size // num_head) ** 0.5
    tgt_update = mha_pallas(tgt_qry, src_key, src_val, src_mask, num_head, scale)

    # tgt_output(concat([tgt, tgt_update])) with the concat fused (split weights)
    w = p["tgt_output"]["w"]
    out = linear_cat_pallas(tgt.reshape(B * Nt, Dt), w[:Dt],
                            tgt_update.reshape(B * Nt, output_size), w[Dt:],
                            p["tgt_output"]["b"])
    return out.reshape(B, Nt, output_size)


# ----------------------------------------------------------------------------
# DyIntraModalityUpdate
# ----------------------------------------------------------------------------
def intra_init(key, v_size, q_size, output_size):
    ks = jax.random.split(key, 6)
    return {"v4q_gate_lin": fcnet_init(ks[0], v_size, output_size),
            "q4v_gate_lin": fcnet_init(ks[1], q_size, output_size),
            "v_lin": fcnet_init(ks[2], v_size, output_size * 3),
            "q_lin": fcnet_init(ks[3], q_size, output_size * 3),
            "v_output": fcnet_init(ks[4], output_size, output_size),
            "q_output": fcnet_init(ks[5], output_size, output_size)}


def intra_apply(p, v, q, v_mask, q_mask, output_size, num_head):
    B, Nv, Dv = v.shape
    _, Nq, Dq = q.shape
    v_mask_f = v_mask.astype(jnp.float32)
    q_mask_f = q_mask.astype(jnp.float32)

    v_mean = (v * v_mask_f[:, :, None]).sum(1) / v_mask_f.sum(1)[:, None]   # [B, Dv]
    q_mean = (q * q_mask_f[:, :, None]).sum(1) / q_mask_f.sum(1)[:, None]   # [B, Dq]
    v4q_gate = jax.nn.sigmoid(linear_pallas(v_mean, p["v4q_gate_lin"]["w"],
                                            p["v4q_gate_lin"]["b"]))        # [B, D]
    q4v_gate = jax.nn.sigmoid(linear_pallas(q_mean, p["q4v_gate_lin"]["w"],
                                            p["q4v_gate_lin"]["b"]))        # [B, D]
    gv = 1.0 + q4v_gate   # applied to visual qry/key/val (inside the MHA kernel)
    gq = 1.0 + v4q_gate   # applied to question qry/key/val

    v_trans = linear_mask_pallas(v.reshape(B * Nv, Dv), p["v_lin"]["w"],
                                 p["v_lin"]["b"], v_mask_f.reshape(B * Nv, 1)
                                 ).reshape(B, Nv, 3 * output_size)
    q_trans = linear_mask_pallas(q.reshape(B * Nq, Dq), p["q_lin"]["w"],
                                 p["q_lin"]["b"], q_mask_f.reshape(B * Nq, 1)
                                 ).reshape(B, Nq, 3 * output_size)
    v_key, v_qry, v_val = (v_trans[:, :, :output_size],
                           v_trans[:, :, output_size:2 * output_size],
                           v_trans[:, :, 2 * output_size:])
    q_key, q_qry, q_val = (q_trans[:, :, :output_size],
                           q_trans[:, :, output_size:2 * output_size],
                           q_trans[:, :, 2 * output_size:])

    scale = float(output_size // num_head) ** 0.5
    v_update = mha_pallas(v_qry, v_key, v_val, v_mask, num_head, scale, gate=gv)
    q_update = mha_pallas(q_qry, q_key, q_val, q_mask, num_head, scale, gate=gq)

    # residual add fused into the output projection kernels
    updated_v = linear_res_pallas(v.reshape(B * Nv, Dv),
                                  v_update.reshape(B * Nv, output_size),
                                  p["v_output"]["w"], p["v_output"]["b"]
                                  ).reshape(B, Nv, output_size)
    updated_q = linear_res_pallas(q.reshape(B * Nq, Dq),
                                  q_update.reshape(B * Nq, output_size),
                                  p["q_output"]["w"], p["q_output"]["b"]
                                  ).reshape(B, Nq, output_size)
    return updated_v, updated_q


# ----------------------------------------------------------------------------
# SingleBlock (shared inter/intra blocks reused num_block times)
# ----------------------------------------------------------------------------
def singleblock_init(key, v_size, q_size, output_size):
    ks = jax.random.split(key, 5)
    return {"v_lin": fcnet_init(ks[0], v_size, output_size),
            "q_lin": fcnet_init(ks[1], q_size, output_size),
            "inter_vq": inter_init(ks[2], output_size, output_size, output_size),
            "inter_qv": inter_init(ks[3], output_size, output_size, output_size),
            "intra": intra_init(ks[4], output_size, output_size, output_size)}


def singleblock_apply(params, v, q, v_mask, q_mask, *, num_block, output_size,
                      num_inter_head, num_intra_head):
    v = fcnet_apply(params["v_lin"], v)
    q = fcnet_apply(params["q_lin"], q)
    v_container, q_container = [v], [q]
    result_v, result_q = [v], [q]
    for _ in range(num_block):
        q1 = inter_apply(params["inter_vq"], v_container[-1], q_container[-1],
                         v_mask, q_mask, output_size, num_inter_head)
        q_container.append(q1)
        v1 = inter_apply(params["inter_qv"], q_container[-1] + q_container[-2],
                         v_container[-1], q_mask, v_mask, output_size, num_inter_head)
        v_container.append(v1)
        v2, q2 = intra_apply(params["intra"], v_container[-1] + v_container[-2],
                             q_container[-1] + q_container[-2],
                             v_mask, q_mask, output_size, num_intra_head)
        v_container.append(v2)
        q_container.append(q2)
        result_v += [v1, v2]
        result_q += [q1, q2]
        v_container.append(v_container[-1] + v_container[-2] + v_container[-3])
        q_container.append(q_container[-1] + q_container[-2] + q_container[-3])
    return sum(result_v), sum(result_q)


# ----------------------------------------------------------------------------
# Main
# ----------------------------------------------------------------------------
if __name__ == "__main__":
    B, NUM_OBJ, MAX_LEN = 2, 8, 8
    V_SIZE, Q_SIZE = 16, 16
    OUTPUT_SIZE = 32
    NUM_INTER_HEAD, NUM_INTRA_HEAD = 4, 4
    NUM_BLOCK = 2

    root = jax.random.PRNGKey(0)
    k_params, k_v, k_q = jax.random.split(root, 3)

    params = singleblock_init(k_params, V_SIZE, Q_SIZE, OUTPUT_SIZE)
    v = jax.random.normal(k_v, (B, NUM_OBJ, V_SIZE), jnp.float32)
    q = jax.random.normal(k_q, (B, MAX_LEN, Q_SIZE), jnp.float32)

    # Masks: every row keeps at least one valid element (matches typical usage).
    v_mask = jnp.ones((B, NUM_OBJ), jnp.float32).at[1, 6:].set(0.0)
    q_mask = jnp.ones((B, MAX_LEN), jnp.float32).at[1, 5:].set(0.0)

    fwd = jax.jit(functools.partial(
        singleblock_apply, num_block=NUM_BLOCK, output_size=OUTPUT_SIZE,
        num_inter_head=NUM_INTER_HEAD, num_intra_head=NUM_INTRA_HEAD))

    out_v, out_q = fwd(params, v, q, v_mask, q_mask)
    out_v = jax.block_until_ready(out_v)
    out_q = jax.block_until_ready(out_q)

    assert out_v.shape == (B, NUM_OBJ, OUTPUT_SIZE)
    assert out_q.shape == (B, MAX_LEN, OUTPUT_SIZE)
    assert bool(jnp.all(jnp.isfinite(out_v))) and bool(jnp.all(jnp.isfinite(out_q)))
    print("KERNEL_OK")
</pallas_src>

<mosaic_0001>
module attributes {stable_mosaic.version = 11 : i64} {
  func.func @_lin_mask_kernel(%arg0: i32, %arg1: memref<16x32xf32, #tpu.memory_space<vmem>>, %arg2: memref<32x64xf32, #tpu.memory_space<vmem>>, %arg3: memref<1x64xf32, #tpu.memory_space<vmem>>, %arg4: memref<16x1xf32, #tpu.memory_space<vmem>>, %arg5: memref<16x64xf32, #tpu.memory_space<vmem>>) attributes {dimension_semantics = [#tpu.dimension_semantics<parallel>], iteration_bounds = array<i64: 1>, scalar_prefetch = 0 : i64, scratch_operands = 0 : i64, tpu.core_type = #tpu.core_type<tc>, window_params = [{transform_indices = @transform_0, window_bounds = array<i64: 16, 32>}, {pipeline_mode = #tpu.pipeline_mode<synchronous>, transform_indices = @transform_1, window_bounds = array<i64: 32, 64>}, {pipeline_mode = #tpu.pipeline_mode<synchronous>, transform_indices = @transform_2, window_bounds = array<i64: 1, 64>}, {transform_indices = @transform_3, window_bounds = array<i64: 16, 1>}, {transform_indices = @transform_4, window_bounds = array<i64: 16, 64>}]} {
    %c0 = arith.constant 0 : index
    %c0_0 = arith.constant 0 : index
    %0 = vector.load %arg1[%c0, %c0_0] : memref<16x32xf32, #tpu.memory_space<vmem>>, vector<16x32xf32>
    %c0_1 = arith.constant 0 : index
    %c0_2 = arith.constant 0 : index
    %1 = vector.load %arg2[%c0_1, %c0_2] : memref<32x64xf32, #tpu.memory_space<vmem>>, vector<32x64xf32>
    %cst = arith.constant dense<0.000000e+00> : vector<16x64xf32>
    %2 = tpu.matmul %0, %1, %cst {dimension_numbers = #tpu.dot_dimension_numbers<[1], [0], [0], [1], [0, 0, 1, 1], [], []>} : vector<16x32xf32>, vector<32x64xf32>, vector<16x64xf32> -> vector<16x64xf32>
    %c0_3 = arith.constant 0 : index
    %c0_4 = arith.constant 0 : index
    %3 = vector.load %arg3[%c0_3, %c0_4] : memref<1x64xf32, #tpu.memory_space<vmem>>, vector<1x64xf32>
    %4 = vector.broadcast %3 : vector<1x64xf32> to vector<16x64xf32>
    %5 = arith.addf %2, %4 : vector<16x64xf32>
    %c0_5 = arith.constant 0 : index
    %c0_6 = arith.constant 0 : index
    %6 = vector.load %arg4[%c0_5, %c0_6] : memref<16x1xf32, #tpu.memory_space<vmem>>, vector<16x1xf32>
    %7 = vector.broadcast %6 : vector<16x1xf32> to vector<16x64xf32>
    %8 = arith.mulf %5, %7 : vector<16x64xf32>
    %c0_7 = arith.constant 0 : index
    %c0_8 = arith.constant 0 : index
    %9 = vector.load %arg5[%c0_7, %c0_8] : memref<16x64xf32, #tpu.memory_space<vmem>>, vector<16x64xf32>
    tpu.vector_store %arg5[%c0_7, %c0_8], %8 {strides = array<i32>} : memref<16x64xf32, #tpu.memory_space<vmem>>, vector<16x64xf32>,
    return
  }
  func.func @transform_0(%arg0: i32) -> (i32, i32) {
    %c0_i32 = arith.constant 0 : i32
    %c0_i32_0 = arith.constant 0 : i32
    return %arg0, %c0_i32 : i32, i32
  }
  func.func @transform_1(%arg0: i32) -> (i32, i32) {
    %c0_i32 = arith.constant 0 : i32
    %c0_i32_0 = arith.constant 0 : i32
    %c0_i32_1 = arith.constant 0 : i32
    return %c0_i32, %c0_i32_0 : i32, i32
  }
  func.func @transform_2(%arg0: i32) -> (i32, i32) {
    %c0_i32 = arith.constant 0 : i32
    %c0_i32_0 = arith.constant 0 : i32
    %c0_i32_1 = arith.constant 0 : i32
    return %c0_i32, %c0_i32_0 : i32, i32
  }
  func.func @transform_3(%arg0: i32) -> (i32, i32) {
    %c0_i32 = arith.constant 0 : i32
    %c0_i32_0 = arith.constant 0 : i32
    return %arg0, %c0_i32 : i32, i32
  }
  func.func @transform_4(%arg0: i32) -> (i32, i32) {
    %c0_i32 = arith.constant 0 : i32
    %c0_i32_0 = arith.constant 0 : i32
    return %arg0, %c0_i32 : i32, i32
  }
}

module attributes {stable_mosaic.version = 11 : i64} {
  func.func @_lin_kernel(%arg0: i32, %arg1: memref<16x16xf32, #tpu.memory_space<vmem>>, %arg2: memref<16x32xf32, #tpu.memory_space<vmem>>, %arg3: memref<1x32xf32, #tpu.memory_space<vmem>>, %arg4: memref<16x32xf32, #tpu.memory_space<vmem>>) attributes {dimension_semantics = [#tpu.dimension_semantics<parallel>], iteration_bounds = array<i64: 1>, scalar_prefetch = 0 : i64, scratch_operands = 0 : i64, tpu.core_type = #tpu.core_type<tc>, window_params = [{transform_indices = @transform_0, window_bounds = array<i64: 16, 16>}, {pipeline_mode = #tpu.pipeline_mode<synchronous>, transform_indices = @transform_1, window_bounds = array<i64: 16, 32>}, {pipeline_mode = #tpu.pipeline_mode<synchronous>, transform_indices = @transform_2, window_bounds = array<i64: 1, 32>}, {transform_indices = @transform_3, window_bounds = array<i64: 16, 32>}]} {
    %c0 = arith.constant 0 : index
    %c0_0 = arith.constant 0 : index
    %0 = vector.load %arg1[%c0, %c0_0] : memref<16x16xf32, #tpu.memory_space<vmem>>, vector<16x16xf32>
    %c0_1 = arith.constant 0 : index
    %c0_2 = arith.constant 0 : index
    %1 = vector.load %arg2[%c0_1, %c0_2] : memref<16x32xf32, #tpu.memory_space<vmem>>, vector<16x32xf32>
    %cst = arith.constant dense<0.000000e+00> : vector<16x32xf32>
    %2 = tpu.matmul %0, %1, %cst {dimension_numbers = #tpu.dot_dimension_numbers<[1], [0], [0], [1], [0, 0, 1, 1], [], []>} : vector<16x16xf32>, vector<16x32xf32>, vector<16x32xf32> -> vector<16x32xf32>
    %c0_3 = arith.constant 0 : index
    %c0_4 = arith.constant 0 : index
    %3 = vector.load %arg3[%c0_3, %c0_4] : memref<1x32xf32, #tpu.memory_space<vmem>>, vector<1x32xf32>
    %4 = vector.broadcast %3 : vector<1x32xf32> to vector<16x32xf32>
    %5 = arith.addf %2, %4 : vector<16x32xf32>
    %c0_5 = arith.constant 0 : index
    %c0_6 = arith.constant 0 : index
    %6 = vector.load %arg4[%c0_5, %c0_6] : memref<16x32xf32, #tpu.memory_space<vmem>>, vector<16x32xf32>
    tpu.vector_store %arg4[%c0_5, %c0_6], %5 {strides = array<i32>} : memref<16x32xf32, #tpu.memory_space<vmem>>, vector<16x32xf32>,
    return
  }
  func.func @transform_0(%arg0: i32) -> (i32, i32) {
    %c0_i32 = arith.constant 0 : i32
    %c0_i32_0 = arith.constant 0 : i32
    return %arg0, %c0_i32 : i32, i32
  }
  func.func @transform_1(%arg0: i32) -> (i32, i32) {
    %c0_i32 = arith.constant 0 : i32
    %c0_i32_0 = arith.constant 0 : i32
    %c0_i32_1 = arith.constant 0 : i32
    return %c0_i32, %c0_i32_0 : i32, i32
  }
  func.func @transform_2(%arg0: i32) -> (i32, i32) {
    %c0_i32 = arith.constant 0 : i32
    %c0_i32_0 = arith.constant 0 : i32
    %c0_i32_1 = arith.constant 0 : i32
    return %c0_i32, %c0_i32_0 : i32, i32
  }
  func.func @transform_3(%arg0: i32) -> (i32, i32) {
    %c0_i32 = arith.constant 0 : i32
    %c0_i32_0 = arith.constant 0 : i32
    return %arg0, %c0_i32 : i32, i32
  }
}

module attributes {stable_mosaic.version = 11 : i64} {
  func.func @_lin_mask_kernel(%arg0: i32, %arg1: memref<16x32xf32, #tpu.memory_space<vmem>>, %arg2: memref<32x32xf32, #tpu.memory_space<vmem>>, %arg3: memref<1x32xf32, #tpu.memory_space<vmem>>, %arg4: memref<16x1xf32, #tpu.memory_space<vmem>>, %arg5: memref<16x32xf32, #tpu.memory_space<vmem>>) attributes {dimension_semantics = [#tpu.dimension_semantics<parallel>], iteration_bounds = array<i64: 1>, scalar_prefetch = 0 : i64, scratch_operands = 0 : i64, tpu.core_type = #tpu.core_type<tc>, window_params = [{transform_indices = @transform_0, window_bounds = array<i64: 16, 32>}, {pipeline_mode = #tpu.pipeline_mode<synchronous>, transform_indices = @transform_1, window_bounds = array<i64: 32, 32>}, {pipeline_mode = #tpu.pipeline_mode<synchronous>, transform_indices = @transform_2, window_bounds = array<i64: 1, 32>}, {transform_indices = @transform_3, window_bounds = array<i64: 16, 1>}, {transform_indices = @transform_4, window_bounds = array<i64: 16, 32>}]} {
    %c0 = arith.constant 0 : index
    %c0_0 = arith.constant 0 : index
    %0 = vector.load %arg1[%c0, %c0_0] : memref<16x32xf32, #tpu.memory_space<vmem>>, vector<16x32xf32>
    %c0_1 = arith.constant 0 : index
    %c0_2 = arith.constant 0 : index
    %1 = vector.load %arg2[%c0_1, %c0_2] : memref<32x32xf32, #tpu.memory_space<vmem>>, vector<32x32xf32>
    %cst = arith.constant dense<0.000000e+00> : vector<16x32xf32>
    %2 = tpu.matmul %0, %1, %cst {dimension_numbers = #tpu.dot_dimension_numbers<[1], [0], [0], [1], [0, 0, 1, 1], [], []>} : vector<16x32xf32>, vector<32x32xf32>, vector<16x32xf32> -> vector<16x32xf32>
    %c0_3 = arith.constant 0 : index
    %c0_4 = arith.constant 0 : index
    %3 = vector.load %arg3[%c0_3, %c0_4] : memref<1x32xf32, #tpu.memory_space<vmem>>, vector<1x32xf32>
    %4 = vector.broadcast %3 : vector<1x32xf32> to vector<16x32xf32>
    %5 = arith.addf %2, %4 : vector<16x32xf32>
    %c0_5 = arith.constant 0 : index
    %c0_6 = arith.constant 0 : index
    %6 = vector.load %arg4[%c0_5, %c0_6] : memref<16x1xf32, #tpu.memory_space<vmem>>, vector<16x1xf32>
    %7 = vector.broadcast %6 : vector<16x1xf32> to vector<16x32xf32>
    %8 = arith.mulf %5, %7 : vector<16x32xf32>
    %c0_7 = arith.constant 0 : index
    %c0_8 = arith.constant 0 : index
    %9 = vector.load %arg5[%c0_7, %c0_8] : memref<16x32xf32, #tpu.memory_space<vmem>>, vector<16x32xf32>
    tpu.vector_store %arg5[%c0_7, %c0_8], %8 {strides = array<i32>} : memref<16x32xf32, #tpu.memory_space<vmem>>, vector<16x32xf32>,
    return
  }
  func.func @transform_0(%arg0: i32) -> (i32, i32) {
    %c0_i32 = arith.constant 0 : i32
    %c0_i32_0 = arith.constant 0 : i32
    return %arg0, %c0_i32 : i32, i32
  }
  func.func @transform_1(%arg0: i32) -> (i32, i32) {
    %c0_i32 = arith.constant 0 : i32
    %c0_i32_0 = arith.constant 0 : i32
    %c0_i32_1 = arith.constant 0 : i32
    return %c0_i32, %c0_i32_0 : i32, i32
  }
  func.func @transform_2(%arg0: i32) -> (i32, i32) {
    %c0_i32 = arith.constant 0 : i32
    %c0_i32_0 = arith.constant 0 : i32
    %c0_i32_1 = arith.constant 0 : i32
    return %c0_i32, %c0_i32_0 : i32, i32
  }
  func.func @transform_3(%arg0: i32) -> (i32, i32) {
    %c0_i32 = arith.constant 0 : i32
    %c0_i32_0 = arith.constant 0 : i32
    return %arg0, %c0_i32 : i32, i32
  }
  func.func @transform_4(%arg0: i32) -> (i32, i32) {
    %c0_i32 = arith.constant 0 : i32
    %c0_i32_0 = arith.constant 0 : i32
    return %arg0, %c0_i32 : i32, i32
  }
}

module attributes {stable_mosaic.version = 11 : i64} {
  func.func @_lin_cat_kernel(%arg0: i32, %arg1: memref<16x32xf32, #tpu.memory_space<vmem>>, %arg2: memref<32x32xf32, #tpu.memory_space<vmem>>, %arg3: memref<16x32xf32, #tpu.memory_space<vmem>>, %arg4: memref<32x32xf32, #tpu.memory_space<vmem>>, %arg5: memref<1x32xf32, #tpu.memory_space<vmem>>, %arg6: memref<16x32xf32, #tpu.memory_space<vmem>>) attributes {dimension_semantics = [#tpu.dimension_semantics<parallel>], iteration_bounds = array<i64: 1>, scalar_prefetch = 0 : i64, scratch_operands = 0 : i64, tpu.core_type = #tpu.core_type<tc>, window_params = [{transform_indices = @transform_0, window_bounds = array<i64: 16, 32>}, {pipeline_mode = #tpu.pipeline_mode<synchronous>, transform_indices = @transform_1, window_bounds = array<i64: 32, 32>}, {transform_indices = @transform_2, window_bounds = array<i64: 16, 32>}, {pipeline_mode = #tpu.pipeline_mode<synchronous>, transform_indices = @transform_3, window_bounds = array<i64: 32, 32>}, {pipeline_mode = #tpu.pipeline_mode<synchronous>, transform_indices = @transform_4, window_bounds = array<i64: 1, 32>}, {transform_indices = @transform_5, window_bounds = array<i64: 16, 32>}]} {
    %c0 = arith.constant 0 : index
    %c0_0 = arith.constant 0 : index
    %0 = vector.load %arg1[%c0, %c0_0] : memref<16x32xf32, #tpu.memory_space<vmem>>, vector<16x32xf32>
    %c0_1 = arith.constant 0 : index
    %c0_2 = arith.constant 0 : index
    %1 = vector.load %arg2[%c0_1, %c0_2] : memref<32x32xf32, #tpu.memory_space<vmem>>, vector<32x32xf32>
    %cst = arith.constant dense<0.000000e+00> : vector<16x32xf32>
    %2 = tpu.matmul %0, %1, %cst {dimension_numbers = #tpu.dot_dimension_numbers<[1], [0], [0], [1], [0, 0, 1, 1], [], []>} : vector<16x32xf32>, vector<32x32xf32>, vector<16x32xf32> -> vector<16x32xf32>
    %c0_3 = arith.constant 0 : index
    %c0_4 = arith.constant 0 : index
    %3 = vector.load %arg3[%c0_3, %c0_4] : memref<16x32xf32, #tpu.memory_space<vmem>>, vector<16x32xf32>
    %c0_5 = arith.constant 0 : index
    %c0_6 = arith.constant 0 : index
    %4 = vector.load %arg4[%c0_5, %c0_6] : memref<32x32xf32, #tpu.memory_space<vmem>>, vector<32x32xf32>
    %cst_7 = arith.constant dense<0.000000e+00> : vector<16x32xf32>
    %5 = tpu.matmul %3, %4, %cst_7 {dimension_numbers = #tpu.dot_dimension_numbers<[1], [0], [0], [1], [0, 0, 1, 1], [], []>} : vector<16x32xf32>, vector<32x32xf32>, vector<16x32xf32> -> vector<16x32xf32>
    %6 = arith.addf %2, %5 : vector<16x32xf32>
    %c0_8 = arith.constant 0 : index
    %c0_9 = arith.constant 0 : index
    %7 = vector.load %arg5[%c0_8, %c0_9] : memref<1x32xf32, #tpu.memory_space<vmem>>, vector<1x32xf32>
    %8 = vector.broadcast %7 : vector<1x32xf32> to vector<16x32xf32>
    %9 = arith.addf %6, %8 : vector<16x32xf32>
    %c0_10 = arith.constant 0 : index
    %c0_11 = arith.constant 0 : index
    %10 = vector.load %arg6[%c0_10, %c0_11] : memref<16x32xf32, #tpu.memory_space<vmem>>, vector<16x32xf32>
    tpu.vector_store %arg6[%c0_10, %c0_11], %9 {strides = array<i32>} : memref<16x32xf32, #tpu.memory_space<vmem>>, vector<16x32xf32>,
    return
  }
  func.func @transform_0(%arg0: i32) -> (i32, i32) {
    %c0_i32 = arith.constant 0 : i32
    %c0_i32_0 = arith.constant 0 : i32
    return %arg0, %c0_i32 : i32, i32
  }
  func.func @transform_1(%arg0: i32) -> (i32, i32) {
    %c0_i32 = arith.constant 0 : i32
    %c0_i32_0 = arith.constant 0 : i32
    %c0_i32_1 = arith.constant 0 : i32
    return %c0_i32, %c0_i32_0 : i32, i32
  }
  func.func @transform_2(%arg0: i32) -> (i32, i32) {
    %c0_i32 = arith.constant 0 : i32
    %c0_i32_0 = arith.constant 0 : i32
    return %arg0, %c0_i32 : i32, i32
  }
  func.func @transform_3(%arg0: i32) -> (i32, i32) {
    %c0_i32 = arith.constant 0 : i32
    %c0_i32_0 = arith.constant 0 : i32
    %c0_i32_1 = arith.constant 0 : i32
    return %c0_i32, %c0_i32_0 : i32, i32
  }
  func.func @transform_4(%arg0: i32) -> (i32, i32) {
    %c0_i32 = arith.constant 0 : i32
    %c0_i32_0 = arith.constant 0 : i32
    %c0_i32_1 = arith.constant 0 : i32
    return %c0_i32, %c0_i32_0 : i32, i32
  }
  func.func @transform_5(%arg0: i32) -> (i32, i32) {
    %c0_i32 = arith.constant 0 : i32
    %c0_i32_0 = arith.constant 0 : i32
    return %arg0, %c0_i32 : i32, i32
  }
}

module attributes {stable_mosaic.version = 11 : i64} {
  func.func @_mha_kernel(%arg0: i32, %arg1: memref<1x4x8x8xf32, #tpu.memory_space<vmem>>, %arg2: memref<1x4x8x8xf32, #tpu.memory_space<vmem>>, %arg3: memref<1x4x8x8xf32, #tpu.memory_space<vmem>>, %arg4: memref<1x1x8xf32, #tpu.memory_space<vmem>>, %arg5: memref<1x4x8x8xf32, #tpu.memory_space<vmem>>) attributes {dimension_semantics = [#tpu.dimension_semantics<parallel>], iteration_bounds = array<i64: 2>, scalar_prefetch = 0 : i64, scratch_operands = 0 : i64, tpu.core_type = #tpu.core_type<tc>, window_params = [{transform_indices = @transform_0, window_bounds = array<i64: 1, 4, 8, 8>}, {transform_indices = @transform_1, window_bounds = array<i64: 1, 4, 8, 8>}, {transform_indices = @transform_2, window_bounds = array<i64: 1, 4, 8, 8>}, {transform_indices = @transform_3, window_bounds = array<i64: 1, 1, 8>}, {transform_indices = @transform_4, window_bounds = array<i64: 1, 4, 8, 8>}]} {
    %c0 = arith.constant 0 : index
    %c0_0 = arith.constant 0 : index
    %c0_1 = arith.constant 0 : index
    %c0_2 = arith.constant 0 : index
    %0 = vector.load %arg1[%c0, %c0_0, %c0_1, %c0_2] : memref<1x4x8x8xf32, #tpu.memory_space<vmem>>, vector<1x4x8x8xf32>
    %1 = vector.shape_cast %0 : vector<1x4x8x8xf32> to vector<4x8x8xf32>
    %cst = arith.constant 0.353553385 : f32
    %2 = vector.broadcast %cst : f32 to vector<4x8x8xf32>
    %3 = arith.mulf %1, %2 : vector<4x8x8xf32>
    %c0_3 = arith.constant 0 : index
    %c0_4 = arith.constant 0 : index
    %c0_5 = arith.constant 0 : index
    %c0_6 = arith.constant 0 : index
    %4 = vector.load %arg2[%c0_3, %c0_4, %c0_5, %c0_6] : memref<1x4x8x8xf32, #tpu.memory_space<vmem>>, vector<1x4x8x8xf32>
    %5 = vector.shape_cast %4 : vector<1x4x8x8xf32> to vector<4x8x8xf32>
    %c0_7 = arith.constant 0 : index
    %c0_8 = arith.constant 0 : index
    %c0_9 = arith.constant 0 : index
    %c0_10 = arith.constant 0 : index
    %6 = vector.load %arg3[%c0_7, %c0_8, %c0_9, %c0_10] : memref<1x4x8x8xf32, #tpu.memory_space<vmem>>, vector<1x4x8x8xf32>
    %7 = vector.shape_cast %6 : vector<1x4x8x8xf32> to vector<4x8x8xf32>
    %c0_11 = arith.constant 0 : index
    %c0_12 = arith.constant 0 : index
    %c0_13 = arith.constant 0 : index
    %8 = vector.load %arg4[%c0_11, %c0_12, %c0_13] : memref<1x1x8xf32, #tpu.memory_space<vmem>>, vector<1x1x8xf32>
    %9 = vector.shape_cast %8 : vector<1x1x8xf32> to vector<1x8xf32>
    "tpu.trace_start"() <{level = 10 : i32, message = "htd,hsd->hts"}> : () -> ()
    %cst_14 = arith.constant dense<0.000000e+00> : vector<4x8x8xf32>
    %10 = tpu.matmul %3, %5, %cst_14 {dimension_numbers = #tpu.dot_dimension_numbers<[2], [2], [1], [1], [0, 0, 0, 1, 1, 1], [0], [0]>} : vector<4x8x8xf32>, vector<4x8x8xf32>, vector<4x8x8xf32> -> vector<4x8x8xf32>
    "tpu.trace_stop"() : () -> ()
    %11 = vector.shape_cast %9 : vector<1x8xf32> to vector<1x1x8xf32>
    %12 = vector.broadcast %11 : vector<1x1x8xf32> to vector<4x8x8xf32>
    %13 = arith.addf %10, %12 : vector<4x8x8xf32>
    %cst_15 = arith.constant dense<0xFF800000> : vector<4x8xf32>
    %14 = vector.multi_reduction <maximumf>, %13, %cst_15 [2] : vector<4x8x8xf32> to vector<4x8xf32>
    %15 = vector.shape_cast %14 : vector<4x8xf32> to vector<4x8x1xf32>
    %16 = vector.broadcast %15 : vector<4x8x1xf32> to vector<4x8x8xf32>
    %17 = arith.subf %13, %16 : vector<4x8x8xf32>
    %18 = math.exp %17 : vector<4x8x8xf32>
    %cst_16 = arith.constant dense<0.000000e+00> : vector<4x8xf32>
    %19 = vector.multi_reduction <add>, %18, %cst_16 [2] : vector<4x8x8xf32> to vector<4x8xf32>
    %20 = vector.shape_cast %19 : vector<4x8xf32> to vector<4x8x1xf32>
    %21 = tpu.reciprocal %20 {approx = true} : vector<4x8x1xf32> -> vector<4x8x1xf32>
    %22 = vector.broadcast %21 : vector<4x8x1xf32> to vector<4x8x8xf32>
    %23 = arith.mulf %18, %22 : vector<4x8x8xf32>
    "tpu.trace_start"() <{level = 10 : i32, message = "hts,hsd->htd"}> : () -> ()
    %cst_17 = arith.constant dense<0.000000e+00> : vector<4x8x8xf32>
    %24 = tpu.matmul %23, %7, %cst_17 {dimension_numbers = #tpu.dot_dimension_numbers<[2], [1], [1], [2], [0, 0, 0, 1, 1, 2], [0], [0]>} : vector<4x8x8xf32>, vector<4x8x8xf32>, vector<4x8x8xf32> -> vector<4x8x8xf32>
    "tpu.trace_stop"() : () -> ()
    %c0_18 = arith.constant 0 : index
    %c0_19 = arith.constant 0 : index
    %c0_20 = arith.constant 0 : index
    %c0_21 = arith.constant 0 : index
    %25 = vector.load %arg5[%c0_18, %c0_19, %c0_20, %c0_21] : memref<1x4x8x8xf32, #tpu.memory_space<vmem>>, vector<1x4x8x8xf32>
    %26 = vector.shape_cast %25 : vector<1x4x8x8xf32> to vector<4x8x8xf32>
    %27 = vector.shape_cast %24 : vector<4x8x8xf32> to vector<1x4x8x8xf32>
    tpu.vector_store %arg5[%c0_18, %c0_19, %c0_20, %c0_21], %27 {strides = array<i32>} : memref<1x4x8x8xf32, #tpu.memory_space<vmem>>, vector<1x4x8x8xf32>,
    return
  }
  func.func @transform_0(%arg0: i32) -> (i32, i32, i32, i32) {
    %c0_i32 = arith.constant 0 : i32
    %c0_i32_0 = arith.constant 0 : i32
    %c0_i32_1 = arith.constant 0 : i32
    %c0_i32_2 = arith.constant 0 : i32
    return %arg0, %c0_i32, %c0_i32_0, %c0_i32_1 : i32, i32, i32, i32
  }
  func.func @transform_1(%arg0: i32) -> (i32, i32, i32, i32) {
    %c0_i32 = arith.constant 0 : i32
    %c0_i32_0 = arith.constant 0 : i32
    %c0_i32_1 = arith.constant 0 : i32
    %c0_i32_2 = arith.constant 0 : i32
    return %arg0, %c0_i32, %c0_i32_0, %c0_i32_1 : i32, i32, i32, i32
  }
  func.func @transform_2(%arg0: i32) -> (i32, i32, i32, i32) {
    %c0_i32 = arith.constant 0 : i32
    %c0_i32_0 = arith.constant 0 : i32
    %c0_i32_1 = arith.constant 0 : i32
    %c0_i32_2 = arith.constant 0 : i32
    return %arg0, %c0_i32, %c0_i32_0, %c0_i32_1 : i32, i32, i32, i32
  }
  func.func @transform_3(%arg0: i32) -> (i32, i32, i32) {
    %c0_i32 = arith.constant 0 : i32
    %c0_i32_0 = arith.constant 0 : i32
    %c0_i32_1 = arith.constant 0 : i32
    return %arg0, %c0_i32, %c0_i32_0 : i32, i32, i32
  }
  func.func @transform_4(%arg0: i32) -> (i32, i32, i32, i32) {
    %c0_i32 = arith.constant 0 : i32
    %c0_i32_0 = arith.constant 0 : i32
    %c0_i32_1 = arith.constant 0 : i32
    %c0_i32_2 = arith.constant 0 : i32
    return %arg0, %c0_i32, %c0_i32_0, %c0_i32_1 : i32, i32, i32, i32
  }
}

module attributes {stable_mosaic.version = 11 : i64} {
  func.func @_lin_kernel(%arg0: i32, %arg1: memref<2x32xf32, #tpu.memory_space<vmem>>, %arg2: memref<32x32xf32, #tpu.memory_space<vmem>>, %arg3: memref<1x32xf32, #tpu.memory_space<vmem>>, %arg4: memref<2x32xf32, #tpu.memory_space<vmem>>) attributes {dimension_semantics = [#tpu.dimension_semantics<parallel>], iteration_bounds = array<i64: 1>, scalar_prefetch = 0 : i64, scratch_operands = 0 : i64, tpu.core_type = #tpu.core_type<tc>, window_params = [{transform_indices = @transform_0, window_bounds = array<i64: 2, 32>}, {pipeline_mode = #tpu.pipeline_mode<synchronous>, transform_indices = @transform_1, window_bounds = array<i64: 32, 32>}, {pipeline_mode = #tpu.pipeline_mode<synchronous>, transform_indices = @transform_2, window_bounds = array<i64: 1, 32>}, {transform_indices = @transform_3, window_bounds = array<i64: 2, 32>}]} {
    %c0 = arith.constant 0 : index
    %c0_0 = arith.constant 0 : index
    %0 = vector.load %arg1[%c0, %c0_0] : memref<2x32xf32, #tpu.memory_space<vmem>>, vector<2x32xf32>
    %c0_1 = arith.constant 0 : index
    %c0_2 = arith.constant 0 : index
    %1 = vector.load %arg2[%c0_1, %c0_2] : memref<32x32xf32, #tpu.memory_space<vmem>>, vector<32x32xf32>
    %cst = arith.constant dense<0.000000e+00> : vector<2x32xf32>
    %2 = tpu.matmul %0, %1, %cst {dimension_numbers = #tpu.dot_dimension_numbers<[1], [0], [0], [1], [0, 0, 1, 1], [], []>} : vector<2x32xf32>, vector<32x32xf32>, vector<2x32xf32> -> vector<2x32xf32>
    %c0_3 = arith.constant 0 : index
    %c0_4 = arith.constant 0 : index
    %3 = vector.load %arg3[%c0_3, %c0_4] : memref<1x32xf32, #tpu.memory_space<vmem>>, vector<1x32xf32>
    %4 = vector.broadcast %3 : vector<1x32xf32> to vector<2x32xf32>
    %5 = arith.addf %2, %4 : vector<2x32xf32>
    %c0_5 = arith.constant 0 : index
    %c0_6 = arith.constant 0 : index
    %6 = vector.load %arg4[%c0_5, %c0_6] : memref<2x32xf32, #tpu.memory_space<vmem>>, vector<2x32xf32>
    tpu.vector_store %arg4[%c0_5, %c0_6], %5 {strides = array<i32>} : memref<2x32xf32, #tpu.memory_space<vmem>>, vector<2x32xf32>,
    return
  }
  func.func @transform_0(%arg0: i32) -> (i32, i32) {
    %c0_i32 = arith.constant 0 : i32
    %c0_i32_0 = arith.constant 0 : i32
    return %arg0, %c0_i32 : i32, i32
  }
  func.func @transform_1(%arg0: i32) -> (i32, i32) {
    %c0_i32 = arith.constant 0 : i32
    %c0_i32_0 = arith.constant 0 : i32
    %c0_i32_1 = arith.constant 0 : i32
    return %c0_i32, %c0_i32_0 : i32, i32
  }
  func.func @transform_2(%arg0: i32) -> (i32, i32) {
    %c0_i32 = arith.constant 0 : i32
    %c0_i32_0 = arith.constant 0 : i32
    %c0_i32_1 = arith.constant 0 : i32
    return %c0_i32, %c0_i32_0 : i32, i32
  }
  func.func @transform_3(%arg0: i32) -> (i32, i32) {
    %c0_i32 = arith.constant 0 : i32
    %c0_i32_0 = arith.constant 0 : i32
    return %arg0, %c0_i32 : i32, i32
  }
}

module attributes {stable_mosaic.version = 11 : i64} {
  func.func @_lin_mask_kernel(%arg0: i32, %arg1: memref<16x32xf32, #tpu.memory_space<vmem>>, %arg2: memref<32x96xf32, #tpu.memory_space<vmem>>, %arg3: memref<1x96xf32, #tpu.memory_space<vmem>>, %arg4: memref<16x1xf32, #tpu.memory_space<vmem>>, %arg5: memref<16x96xf32, #tpu.memory_space<vmem>>) attributes {dimension_semantics = [#tpu.dimension_semantics<parallel>], iteration_bounds = array<i64: 1>, scalar_prefetch = 0 : i64, scratch_operands = 0 : i64, tpu.core_type = #tpu.core_type<tc>, window_params = [{transform_indices = @transform_0, window_bounds = array<i64: 16, 32>}, {pipeline_mode = #tpu.pipeline_mode<synchronous>, transform_indices = @transform_1, window_bounds = array<i64: 32, 96>}, {pipeline_mode = #tpu.pipeline_mode<synchronous>, transform_indices = @transform_2, window_bounds = array<i64: 1, 96>}, {transform_indices = @transform_3, window_bounds = array<i64: 16, 1>}, {transform_indices = @transform_4, window_bounds = array<i64: 16, 96>}]} {
    %c0 = arith.constant 0 : index
    %c0_0 = arith.constant 0 : index
    %0 = vector.load %arg1[%c0, %c0_0] : memref<16x32xf32, #tpu.memory_space<vmem>>, vector<16x32xf32>
    %c0_1 = arith.constant 0 : index
    %c0_2 = arith.constant 0 : index
    %1 = vector.load %arg2[%c0_1, %c0_2] : memref<32x96xf32, #tpu.memory_space<vmem>>, vector<32x96xf32>
    %cst = arith.constant dense<0.000000e+00> : vector<16x96xf32>
    %2 = tpu.matmul %0, %1, %cst {dimension_numbers = #tpu.dot_dimension_numbers<[1], [0], [0], [1], [0, 0, 1, 1], [], []>} : vector<16x32xf32>, vector<32x96xf32>, vector<16x96xf32> -> vector<16x96xf32>
    %c0_3 = arith.constant 0 : index
    %c0_4 = arith.constant 0 : index
    %3 = vector.load %arg3[%c0_3, %c0_4] : memref<1x96xf32, #tpu.memory_space<vmem>>, vector<1x96xf32>
    %4 = vector.broadcast %3 : vector<1x96xf32> to vector<16x96xf32>
    %5 = arith.addf %2, %4 : vector<16x96xf32>
    %c0_5 = arith.constant 0 : index
    %c0_6 = arith.constant 0 : index
    %6 = vector.load %arg4[%c0_5, %c0_6] : memref<16x1xf32, #tpu.memory_space<vmem>>, vector<16x1xf32>
    %7 = vector.broadcast %6 : vector<16x1xf32> to vector<16x96xf32>
    %8 = arith.mulf %5, %7 : vector<16x96xf32>
    %c0_7 = arith.constant 0 : index
    %c0_8 = arith.constant 0 : index
    %9 = vector.load %arg5[%c0_7, %c0_8] : memref<16x96xf32, #tpu.memory_space<vmem>>, vector<16x96xf32>
    tpu.vector_store %arg5[%c0_7, %c0_8], %8 {strides = array<i32>} : memref<16x96xf32, #tpu.memory_space<vmem>>, vector<16x96xf32>,
    return
  }
  func.func @transform_0(%arg0: i32) -> (i32, i32) {
    %c0_i32 = arith.constant 0 : i32
    %c0_i32_0 = arith.constant 0 : i32
    return %arg0, %c0_i32 : i32, i32
  }
  func.func @transform_1(%arg0: i32) -> (i32, i32) {
    %c0_i32 = arith.constant 0 : i32
    %c0_i32_0 = arith.constant 0 : i32
    %c0_i32_1 = arith.constant 0 : i32
    return %c0_i32, %c0_i32_0 : i32, i32
  }
  func.func @transform_2(%arg0: i32) -> (i32, i32) {
    %c0_i32 = arith.constant 0 : i32
    %c0_i32_0 = arith.constant 0 : i32
    %c0_i32_1 = arith.constant 0 : i32
    return %c0_i32, %c0_i32_0 : i32, i32
  }
  func.func @transform_3(%arg0: i32) -> (i32, i32) {
    %c0_i32 = arith.constant 0 : i32
    %c0_i32_0 = arith.constant 0 : i32
    return %arg0, %c0_i32 : i32, i32
  }
  func.func @transform_4(%arg0: i32) -> (i32, i32) {
    %c0_i32 = arith.constant 0 : i32
    %c0_i32_0 = arith.constant 0 : i32
    return %arg0, %c0_i32 : i32, i32
  }
}

module attributes {stable_mosaic.version = 11 : i64} {
  func.func @_lin_res_kernel(%arg0: i32, %arg1: memref<16x32xf32, #tpu.memory_space<vmem>>, %arg2: memref<16x32xf32, #tpu.memory_space<vmem>>, %arg3: memref<32x32xf32, #tpu.memory_space<vmem>>, %arg4: memref<1x32xf32, #tpu.memory_space<vmem>>, %arg5: memref<16x32xf32, #tpu.memory_space<vmem>>) attributes {dimension_semantics = [#tpu.dimension_semantics<parallel>], iteration_bounds = array<i64: 1>, scalar_prefetch = 0 : i64, scratch_operands = 0 : i64, tpu.core_type = #tpu.core_type<tc>, window_params = [{transform_indices = @transform_0, window_bounds = array<i64: 16, 32>}, {transform_indices = @transform_1, window_bounds = array<i64: 16, 32>}, {pipeline_mode = #tpu.pipeline_mode<synchronous>, transform_indices = @transform_2, window_bounds = array<i64: 32, 32>}, {pipeline_mode = #tpu.pipeline_mode<synchronous>, transform_indices = @transform_3, window_bounds = array<i64: 1, 32>}, {transform_indices = @transform_4, window_bounds = array<i64: 16, 32>}]} {
    %c0 = arith.constant 0 : index
    %c0_0 = arith.constant 0 : index
    %0 = vector.load %arg1[%c0, %c0_0] : memref<16x32xf32, #tpu.memory_space<vmem>>, vector<16x32xf32>
    %c0_1 = arith.constant 0 : index
    %c0_2 = arith.constant 0 : index
    %1 = vector.load %arg2[%c0_1, %c0_2] : memref<16x32xf32, #tpu.memory_space<vmem>>, vector<16x32xf32>
    %2 = arith.addf %0, %1 : vector<16x32xf32>
    %c0_3 = arith.constant 0 : index
    %c0_4 = arith.constant 0 : index
    %3 = vector.load %arg3[%c0_3, %c0_4] : memref<32x32xf32, #tpu.memory_space<vmem>>, vector<32x32xf32>
    %cst = arith.constant dense<0.000000e+00> : vector<16x32xf32>
    %4 = tpu.matmul %2, %3, %cst {dimension_numbers = #tpu.dot_dimension_numbers<[1], [0], [0], [1], [0, 0, 1, 1], [], []>} : vector<16x32xf32>, vector<32x32xf32>, vector<16x32xf32> -> vector<16x32xf32>
    %c0_5 = arith.constant 0 : index
    %c0_6 = arith.constant 0 : index
    %5 = vector.load %arg4[%c0_5, %c0_6] : memref<1x32xf32, #tpu.memory_space<vmem>>, vector<1x32xf32>
    %6 = vector.broadcast %5 : vector<1x32xf32> to vector<16x32xf32>
    %7 = arith.addf %4, %6 : vector<16x32xf32>
    %c0_7 = arith.constant 0 : index
    %c0_8 = arith.constant 0 : index
    %8 = vector.load %arg5[%c0_7, %c0_8] : memref<16x32xf32, #tpu.memory_space<vmem>>, vector<16x32xf32>
    tpu.vector_store %arg5[%c0_7, %c0_8], %7 {strides = array<i32>} : memref<16x32xf32, #tpu.memory_space<vmem>>, vector<16x32xf32>,
    return
  }
  func.func @transform_0(%arg0: i32) -> (i32, i32) {
    %c0_i32 = arith.constant 0 : i32
    %c0_i32_0 = arith.constant 0 : i32
    return %arg0, %c0_i32 : i32, i32
  }
  func.func @transform_1(%arg0: i32) -> (i32, i32) {
    %c0_i32 = arith.constant 0 : i32
    %c0_i32_0 = arith.constant 0 : i32
    return %arg0, %c0_i32 : i32, i32
  }
  func.func @transform_2(%arg0: i32) -> (i32, i32) {
    %c0_i32 = arith.constant 0 : i32
    %c0_i32_0 = arith.constant 0 : i32
    %c0_i32_1 = arith.constant 0 : i32
    return %c0_i32, %c0_i32_0 : i32, i32
  }
  func.func @transform_3(%arg0: i32) -> (i32, i32) {
    %c0_i32 = arith.constant 0 : i32
    %c0_i32_0 = arith.constant 0 : i32
    %c0_i32_1 = arith.constant 0 : i32
    return %c0_i32, %c0_i32_0 : i32, i32
  }
  func.func @transform_4(%arg0: i32) -> (i32, i32) {
    %c0_i32 = arith.constant 0 : i32
    %c0_i32_0 = arith.constant 0 : i32
    return %arg0, %c0_i32 : i32, i32
  }
}

module attributes {stable_mosaic.version = 11 : i64} {
  func.func @_mha_gated_kernel(%arg0: i32, %arg1: memref<1x4x8x8xf32, #tpu.memory_space<vmem>>, %arg2: memref<1x4x8x8xf32, #tpu.memory_space<vmem>>, %arg3: memref<1x4x8x8xf32, #tpu.memory_space<vmem>>, %arg4: memref<1x1x8xf32, #tpu.memory_space<vmem>>, %arg5: memref<1x4x1x8xf32, #tpu.memory_space<vmem>>, %arg6: memref<1x4x8x8xf32, #tpu.memory_space<vmem>>) attributes {dimension_semantics = [#tpu.dimension_semantics<parallel>], iteration_bounds = array<i64: 2>, scalar_prefetch = 0 : i64, scratch_operands = 0 : i64, tpu.core_type = #tpu.core_type<tc>, window_params = [{transform_indices = @transform_0, window_bounds = array<i64: 1, 4, 8, 8>}, {transform_indices = @transform_1, window_bounds = array<i64: 1, 4, 8, 8>}, {transform_indices = @transform_2, window_bounds = array<i64: 1, 4, 8, 8>}, {transform_indices = @transform_3, window_bounds = array<i64: 1, 1, 8>}, {transform_indices = @transform_4, window_bounds = array<i64: 1, 4, 1, 8>}, {transform_indices = @transform_5, window_bounds = array<i64: 1, 4, 8, 8>}]} {
    %c0 = arith.constant 0 : index
    %c0_0 = arith.constant 0 : index
    %c0_1 = arith.constant 0 : index
    %c0_2 = arith.constant 0 : index
    %0 = vector.load %arg5[%c0, %c0_0, %c0_1, %c0_2] : memref<1x4x1x8xf32, #tpu.memory_space<vmem>>, vector<1x4x1x8xf32>
    %1 = vector.shape_cast %0 : vector<1x4x1x8xf32> to vector<4x1x8xf32>
    %c0_3 = arith.constant 0 : index
    %c0_4 = arith.constant 0 : index
    %c0_5 = arith.constant 0 : index
    %c0_6 = arith.constant 0 : index
    %2 = vector.load %arg1[%c0_3, %c0_4, %c0_5, %c0_6] : memref<1x4x8x8xf32, #tpu.memory_space<vmem>>, vector<1x4x8x8xf32>
    %3 = vector.shape_cast %2 : vector<1x4x8x8xf32> to vector<4x8x8xf32>
    %cst = arith.constant 0.353553385 : f32
    %4 = vector.broadcast %cst : f32 to vector<4x1x8xf32>
    %5 = arith.mulf %1, %4 : vector<4x1x8xf32>
    %6 = vector.broadcast %5 : vector<4x1x8xf32> to vector<4x8x8xf32>
    %7 = arith.mulf %3, %6 : vector<4x8x8xf32>
    %c0_7 = arith.constant 0 : index
    %c0_8 = arith.constant 0 : index
    %c0_9 = arith.constant 0 : index
    %c0_10 = arith.constant 0 : index
    %8 = vector.load %arg2[%c0_7, %c0_8, %c0_9, %c0_10] : memref<1x4x8x8xf32, #tpu.memory_space<vmem>>, vector<1x4x8x8xf32>
    %9 = vector.shape_cast %8 : vector<1x4x8x8xf32> to vector<4x8x8xf32>
    %10 = vector.broadcast %1 : vector<4x1x8xf32> to vector<4x8x8xf32>
    %11 = arith.mulf %9, %10 : vector<4x8x8xf32>
    %c0_11 = arith.constant 0 : index
    %c0_12 = arith.constant 0 : index
    %c0_13 = arith.constant 0 : index
    %c0_14 = arith.constant 0 : index
    %12 = vector.load %arg3[%c0_11, %c0_12, %c0_13, %c0_14] : memref<1x4x8x8xf32, #tpu.memory_space<vmem>>, vector<1x4x8x8xf32>
    %13 = vector.shape_cast %12 : vector<1x4x8x8xf32> to vector<4x8x8xf32>
    %14 = vector.broadcast %1 : vector<4x1x8xf32> to vector<4x8x8xf32>
    %15 = arith.mulf %13, %14 : vector<4x8x8xf32>
    %c0_15 = arith.constant 0 : index
    %c0_16 = arith.constant 0 : index
    %c0_17 = arith.constant 0 : index
    %16 = vector.load %arg4[%c0_15, %c0_16, %c0_17] : memref<1x1x8xf32, #tpu.memory_space<vmem>>, vector<1x1x8xf32>
    %17 = vector.shape_cast %16 : vector<1x1x8xf32> to vector<1x8xf32>
    "tpu.trace_start"() <{level = 10 : i32, message = "htd,hsd->hts"}> : () -> ()
    %cst_18 = arith.constant dense<0.000000e+00> : vector<4x8x8xf32>
    %18 = tpu.matmul %7, %11, %cst_18 {dimension_numbers = #tpu.dot_dimension_numbers<[2], [2], [1], [1], [0, 0, 0, 1, 1, 1], [0], [0]>} : vector<4x8x8xf32>, vector<4x8x8xf32>, vector<4x8x8xf32> -> vector<4x8x8xf32>
    "tpu.trace_stop"() : () -> ()
    %19 = vector.shape_cast %17 : vector<1x8xf32> to vector<1x1x8xf32>
    %20 = vector.broadcast %19 : vector<1x1x8xf32> to vector<4x8x8xf32>
    %21 = arith.addf %18, %20 : vector<4x8x8xf32>
    %cst_19 = arith.constant dense<0xFF800000> : vector<4x8xf32>
    %22 = vector.multi_reduction <maximumf>, %21, %cst_19 [2] : vector<4x8x8xf32> to vector<4x8xf32>
    %23 = vector.shape_cast %22 : vector<4x8xf32> to vector<4x8x1xf32>
    %24 = vector.broadcast %23 : vector<4x8x1xf32> to vector<4x8x8xf32>
    %25 = arith.subf %21, %24 : vector<4x8x8xf32>
    %26 = math.exp %25 : vector<4x8x8xf32>
    %cst_20 = arith.constant dense<0.000000e+00> : vector<4x8xf32>
    %27 = vector.multi_reduction <add>, %26, %cst_20 [2] : vector<4x8x8xf32> to vector<4x8xf32>
    %28 = vector.shape_cast %27 : vector<4x8xf32> to vector<4x8x1xf32>
    %29 = tpu.reciprocal %28 {approx = true} : vector<4x8x1xf32> -> vector<4x8x1xf32>
    %30 = vector.broadcast %29 : vector<4x8x1xf32> to vector<4x8x8xf32>
    %31 = arith.mulf %26, %30 : vector<4x8x8xf32>
    "tpu.trace_start"() <{level = 10 : i32, message = "hts,hsd->htd"}> : () -> ()
    %cst_21 = arith.constant dense<0.000000e+00> : vector<4x8x8xf32>
    %32 = tpu.matmul %31, %15, %cst_21 {dimension_numbers = #tpu.dot_dimension_numbers<[2], [1], [1], [2], [0, 0, 0, 1, 1, 2], [0], [0]>} : vector<4x8x8xf32>, vector<4x8x8xf32>, vector<4x8x8xf32> -> vector<4x8x8xf32>
    "tpu.trace_stop"() : () -> ()
    %c0_22 = arith.constant 0 : index
    %c0_23 = arith.constant 0 : index
    %c0_24 = arith.constant 0 : index
    %c0_25 = arith.constant 0 : index
    %33 = vector.load %arg6[%c0_22, %c0_23, %c0_24, %c0_25] : memref<1x4x8x8xf32, #tpu.memory_space<vmem>>, vector<1x4x8x8xf32>
    %34 = vector.shape_cast %33 : vector<1x4x8x8xf32> to vector<4x8x8xf32>
    %35 = vector.shape_cast %32 : vector<4x8x8xf32> to vector<1x4x8x8xf32>
    tpu.vector_store %arg6[%c0_22, %c0_23, %c0_24, %c0_25], %35 {strides = array<i32>} : memref<1x4x8x8xf32, #tpu.memory_space<vmem>>, vector<1x4x8x8xf32>,
    return
  }
  func.func @transform_0(%arg0: i32) -> (i32, i32, i32, i32) {
    %c0_i32 = arith.constant 0 : i32
    %c0_i32_0 = arith.constant 0 : i32
    %c0_i32_1 = arith.constant 0 : i32
    %c0_i32_2 = arith.constant 0 : i32
    return %arg0, %c0_i32, %c0_i32_0, %c0_i32_1 : i32, i32, i32, i32
  }
  func.func @transform_1(%arg0: i32) -> (i32, i32, i32, i32) {
    %c0_i32 = arith.constant 0 : i32
    %c0_i32_0 = arith.constant 0 : i32
    %c0_i32_1 = arith.constant 0 : i32
    %c0_i32_2 = arith.constant 0 : i32
    return %arg0, %c0_i32, %c0_i32_0, %c0_i32_1 : i32, i32, i32, i32
  }
  func.func @transform_2(%arg0: i32) -> (i32, i32, i32, i32) {
    %c0_i32 = arith.constant 0 : i32
    %c0_i32_0 = arith.constant 0 : i32
    %c0_i32_1 = arith.constant 0 : i32
    %c0_i32_2 = arith.constant 0 : i32
    return %arg0, %c0_i32, %c0_i32_0, %c0_i32_1 : i32, i32, i32, i32
  }
  func.func @transform_3(%arg0: i32) -> (i32, i32, i32) {
    %c0_i32 = arith.constant 0 : i32
    %c0_i32_0 = arith.constant 0 : i32
    %c0_i32_1 = arith.constant 0 : i32
    return %arg0, %c0_i32, %c0_i32_0 : i32, i32, i32
  }
  func.func @transform_4(%arg0: i32) -> (i32, i32, i32, i32) {
    %c0_i32 = arith.constant 0 : i32
    %c0_i32_0 = arith.constant 0 : i32
    %c0_i32_1 = arith.constant 0 : i32
    %c0_i32_2 = arith.constant 0 : i32
    return %arg0, %c0_i32, %c0_i32_0, %c0_i32_1 : i32, i32, i32, i32
  }
  func.func @transform_5(%arg0: i32) -> (i32, i32, i32, i32) {
    %c0_i32 = arith.constant 0 : i32
    %c0_i32_0 = arith.constant 0 : i32
    %c0_i32_1 = arith.constant 0 : i32
    %c0_i32_2 = arith.constant 0 : i32
    return %arg0, %c0_i32, %c0_i32_0, %c0_i32_1 : i32, i32, i32, i32
  }
}

</mosaic_0001>

<llo_original>
// kernel: singleblock_apply.36
$region0: #{singleblock_apply.36}
  #allocation0 [shape = 'u32[]', space=smem, size = 0x4, offset = 0x4, fixed_abs, tag = 'smem constant byte address 0x4 - core index']
  #allocation1 [shape = 'u32[144,128]{1,0:T(1,128)}', space=vmem, size = 0x12000, scoped, tag = 'internal scratch']
  %s0 = inlined_call_operand.vmem [shape: f32[16,32], index: 0, kind: input, shape index: {}]
  %s1 = inlined_call_operand.vmem [shape: f32[32,64], index: 1, kind: input, shape index: {}]
  %s2 = inlined_call_operand.vmem [shape: f32[1,64], index: 2, kind: input, shape index: {}]
  %s3 = inlined_call_operand.vmem [shape: f32[16,1], index: 3, kind: input, shape index: {}]
  %s4 = inlined_call_operand.vmem [shape: f32[16,64], index: 4, kind: output, shape index: {}]
  %s5 = sld [smem:[#allocation0]]
  $region26: #{singleblock_apply.36} parent=0
    _
  %s7 = ssub.s32 1, %s5
  %s8 = scalar_select 0, %s7, %s5
  // Predicated region
  $region2: #{singleblock_apply.36} parent=0 // pred_check
    _
  $region3: #{singleblock_apply.36} parent=0 // pred_check_branch
    %10 = sbr.rel (0) target = $region5
  $region4: #{singleblock_apply.36} parent=0 // pred_region
    _
  $region5: #{singleblock_apply.36} parent=0 // pred_fallthru
    _
  // Predicated region
  $region6: #{singleblock_apply.36} parent=0 // pred_check
    _
  $region7: #{singleblock_apply.36} parent=0 // pred_check_branch
    %12 = sbr.rel (0) target = $region9
  $region8: #{singleblock_apply.36} parent=0 // pred_region
    _
  $region9: #{singleblock_apply.36} parent=0 // pred_fallthru
    _
  // Predicated region
  $region10: #{singleblock_apply.36} parent=0 // pred_check
    _
  $region11: #{singleblock_apply.36} parent=0 // pred_check_branch
    %14 = sbr.rel (0) target = $region13
  $region12: #{singleblock_apply.36} parent=0 // pred_region
    _
  $region13: #{singleblock_apply.36} parent=0 // pred_fallthru
    _
  // Predicated region
  $region14: #{singleblock_apply.36} parent=0 // pred_check
    _
  $region15: #{singleblock_apply.36} parent=0 // pred_check_branch
    %16 = sbr.rel (0) target = $region17
  $region16: #{singleblock_apply.36} parent=0 // pred_region
    _
  $region17: #{singleblock_apply.36} parent=0 // pred_fallthru
    _
  %v17 = vld [vmem:[%s0] sm:$0xff]
  %v18 = vld [vmem:[%s0 + $0x8] sm:$0xff]
  %v19 = vld [vmem:[%s1] sm:$0xff]
  %v20 = vld [vmem:[%s1 + $0x8] sm:$0xff]
  %v21 = vld [vmem:[%s1 + $0x10] sm:$0xff]
  %v22 = vld [vmem:[%s1 + $0x18] sm:$0xff]
  %v23 = vld [vmem:[%s2] sm:$0x1]
  %v25 = vlaneseq
  %v26 = vshrl.u32 %v25, 7
  %v27 = vsub.s32 0, %v26
  %v28 = vrot.slane %v23, %v27
  %vm30 = vcmask 261120
  %v32 = vsel %vm30, %v17, 0
  %v35 = vsel %vm30, %v18, 0
  %37 = vmatprep.subr.mxu0 0.0
  %38 = vmatpush1.msra.mxu0 %v19
  %39 = vmatprep.subr.mxu0 0.0
  %40 = vmatpush1.msra.mxu0 %v20
  %41 = vmatprep.subr.mxu0 0.0
  %42 = vmatpush1.msra.mxu0 %v21
  %43 = vmatprep.subr.mxu0 0.0
  %44 = vmatpush1.msra.mxu0 %v22
  %45 = vmatprep.subr.mxu0 0.0
  %46 = vmatpush1.msra.mxu0 0.0
  %47 = vmatprep.subr.mxu0 0.0
  %48 = vmatpush1.msra.mxu0 0.0
  %49 = vmatprep.subr.mxu0 0.0
  %50 = vmatpush1.msra.mxu0 0.0
  %51 = vmatprep.subr.mxu0 0.0
  %52 = vmatpush1.msra.mxu0 0.0
  %53 = vmatprep.subr.mxu0 0.0
  %54 = vmatpush1.msra.mxu0 0.0
  %55 = vmatprep.subr.mxu0 0.0
  %56 = vmatpush1.msra.mxu0 0.0
  %57 = vmatprep.subr.mxu0 0.0
  %58 = vmatpush1.msra.mxu0 0.0
  %59 = vmatprep.subr.mxu0 0.0
  %60 = vmatpush1.msra.mxu0 0.0
  %61 = vmatprep.subr.mxu0 0.0
  %62 = vmatpush1.msra.mxu0 0.0
  %63 = vmatprep.subr.mxu0 0.0
  %64 = vmatpush1.msra.mxu0 0.0
  %65 = vmatprep.subr.mxu0 0.0
  %66 = vmatpush1.msra.mxu0 0.0
  %67 = vmatprep.subr.mxu0 0.0
  %68 = vmatpush1.msra.mxu0 0.0
  %69 = vmatprep.subr.mxu0 0.0
  %70 = vmatpush1.msra.mxu0 0.0
  %71 = vmatprep.subr.mxu0 0.0
  %72 = vmatpush1.msra.mxu0 0.0
  %73 = vmatprep.subr.mxu0 0.0
  %74 = vmatpush1.msra.mxu0 0.0
  %75 = vmatprep.subr.mxu0 0.0
  %76 = vmatpush1.msra.mxu0 0.0
  %77 = vmatprep.subr.mxu0 0.0
  %78 = vmatpush1.msra.mxu0 0.0
  %79 = vmatprep.subr.mxu0 0.0
  %80 = vmatpush1.msra.mxu0 0.0
  %81 = vmatprep.subr.mxu0 0.0
  %82 = vmatpush1.msra.mxu0 0.0
  %83 = vmatprep.subr.mxu0 0.0
  %84 = vmatpush1.msra.mxu0 0.0
  %85 = vmatprep.subr.mxu0 0.0
  %86 = vmatpush1.msra.mxu0 0.0
  %87 = vmatprep.subr.mxu0 0.0
  %88 = vmatpush1.msra.mxu0 0.0
  %89 = vmatprep.subr.mxu0 0.0
  %90 = vmatpush1.msra.mxu0 0.0
  %91 = vmatprep.subr.mxu0 0.0
  %92 = vmatpush1.msra.mxu0 0.0
  %93 = vmatprep.subr.mxu0 0.0
  %94 = vmatpush1.msra.mxu0 0.0
  %95 = vmatprep.subr.mxu0 0.0
  %96 = vmatpush1.msra.mxu0 0.0
  %97 = vmatprep.subr.mxu0 0.0
  %98 = vmatpush1.msra.mxu0 0.0
  %99 = vmatprep.subr.mxu0 0.0
  %100 = vmatpush1.msra.mxu0 0.0
  %101 = vmatprep.mubr.f32.mxu0 0.0
  %102 = vmatmul.mubr.f32.gmra.mrb[0].mxu0 %v32
  %v103 = vpop.f32.mrb[0].mxu0
  %v104 = vadd.f32 %v28, %v103
  %v105 = vpop.f32.mrb[0].mxu0
  %106 = vmatprep.mubr.f32.mxu0 0.0
  %107 = vmatmul.mubr.f32.gmra.mrb[0].mxu0 %v35
  %v108 = vpop.f32.mrb[0].mxu0
  %v109 = vadd.f32 %v28, %v108
  %v110 = vpop.f32.mrb[0].mxu0
  %111 = vdwg.mxu0
  %v112 = vld [vmem:[%s3] sm:$0xff]
  %v113 = vld [vmem:[%s3 + $0x8] sm:$0xff]
  %115 = vset.pattern.permute.xlu0 0
  %116 = vperm.xlu0 %115, %v112
  %v117 = vpop.permute.xlu0 %116
  %120 = vset.pattern.permute.xlu0 0
  %121 = vperm.xlu0 %120, %v113
  %v122 = vpop.permute.xlu0 %121
  %v124 = vmul.f32 %v104, %v117
  %v125 = vmul.f32 %v109, %v122
  %vm126 = vcmask 523264
  %127 = vst.msk [vmem:[%s4] sm:$0xff] %vm126, %v124
  %128 = vst.msk [vmem:[%s4 + $0x8] sm:$0xff] %vm126, %v125
  // Predicated region
  $region18: #{singleblock_apply.36} parent=0 // pred_check
    _
  $region19: #{singleblock_apply.36} parent=0 // pred_check_branch
    %130 = sbr.rel (0) target = $region21
  $region20: #{singleblock_apply.36} parent=0 // pred_region
    _
  $region21: #{singleblock_apply.36} parent=0 // pred_fallthru
    _
  // Predicated region
  $region22: #{singleblock_apply.36} parent=0 // pred_check
    _
  $region23: #{singleblock_apply.36} parent=0 // pred_check_branch
    %132 = sbr.rel (0) target = $region25
  $region24: #{singleblock_apply.36} parent=0 // pred_region
    _
  $region25: #{singleblock_apply.36} parent=0 // pred_fallthru
    _

// kernel: singleblock_apply.34
$region0: #{singleblock_apply.34}
  #allocation0 [shape = 'u32[]', space=smem, size = 0x4, offset = 0x4, fixed_abs, tag = 'smem constant byte address 0x4 - core index']
  #allocation1 [shape = 'u32[144,128]{1,0:T(1,128)}', space=vmem, size = 0x12000, scoped, tag = 'internal scratch']
  %s0 = inlined_call_operand.vmem [shape: f32[16,16], index: 0, kind: input, shape index: {}]
  %s1 = inlined_call_operand.vmem [shape: f32[16,32], index: 1, kind: input, shape index: {}]
  %s2 = inlined_call_operand.vmem [shape: f32[1,32], index: 2, kind: input, shape index: {}]
  %s3 = inlined_call_operand.vmem [shape: f32[16,32], index: 3, kind: output, shape index: {}]
  %s4 = sld [smem:[#allocation0]]
  $region22: #{singleblock_apply.34} parent=0
    _
  %s6 = ssub.s32 1, %s4
  %s7 = scalar_select 0, %s6, %s4
  // Predicated region
  $region2: #{singleblock_apply.34} parent=0 // pred_check
    _
  $region3: #{singleblock_apply.34} parent=0 // pred_check_branch
    %9 = sbr.rel (0) target = $region5
  $region4: #{singleblock_apply.34} parent=0 // pred_region
    _
  $region5: #{singleblock_apply.34} parent=0 // pred_fallthru
    _
  // Predicated region
  $region6: #{singleblock_apply.34} parent=0 // pred_check
    _
  $region7: #{singleblock_apply.34} parent=0 // pred_check_branch
    %11 = sbr.rel (0) target = $region9
  $region8: #{singleblock_apply.34} parent=0 // pred_region
    _
  $region9: #{singleblock_apply.34} parent=0 // pred_fallthru
    _
  // Predicated region
  $region10: #{singleblock_apply.34} parent=0 // pred_check
    _
  $region11: #{singleblock_apply.34} parent=0 // pred_check_branch
    %13 = sbr.rel (0) target = $region13
  $region12: #{singleblock_apply.34} parent=0 // pred_region
    _
  $region13: #{singleblock_apply.34} parent=0 // pred_fallthru
    _
  %v14 = vld [vmem:[%s0] sm:$0xff]
  %v15 = vld [vmem:[%s0 + $0x8] sm:$0xff]
  %v16 = vld [vmem:[%s1] sm:$0xff]
  %v17 = vld [vmem:[%s1 + $0x8] sm:$0xff]
  %v18 = vld [vmem:[%s2] sm:$0x1]
  %v20 = vlaneseq
  %v21 = vshrl.u32 %v20, 7
  %v22 = vsub.s32 0, %v21
  %v23 = vrot.slane %v18, %v22
  %vm25 = vcmask 130048
  %v27 = vsel %vm25, %v14, 0
  %v30 = vsel %vm25, %v15, 0
  %32 = vmatprep.subr.mxu0 0.0
  %33 = vmatpush1.msra.mxu0 %v16
  %34 = vmatprep.subr.mxu0 0.0
  %35 = vmatpush1.msra.mxu0 %v17
  %36 = vmatprep.subr.mxu0 0.0
  %37 = vmatpush1.msra.mxu0 0.0
  %38 = vmatprep.subr.mxu0 0.0
  %39 = vmatpush1.msra.mxu0 0.0
  %40 = vmatprep.subr.mxu0 0.0
  %41 = vmatpush1.msra.mxu0 0.0
  %42 = vmatprep.subr.mxu0 0.0
  %43 = vmatpush1.msra.mxu0 0.0
  %44 = vmatprep.subr.mxu0 0.0
  %45 = vmatpush1.msra.mxu0 0.0
  %46 = vmatprep.subr.mxu0 0.0
  %47 = vmatpush1.msra.mxu0 0.0
  %48 = vmatprep.subr.mxu0 0.0
  %49 = vmatpush1.msra.mxu0 0.0
  %50 = vmatprep.subr.mxu0 0.0
  %51 = vmatpush1.msra.mxu0 0.0
  %52 = vmatprep.subr.mxu0 0.0
  %53 = vmatpush1.msra.mxu0 0.0
  %54 = vmatprep.subr.mxu0 0.0
  %55 = vmatpush1.msra.mxu0 0.0
  %56 = vmatprep.subr.mxu0 0.0
  %57 = vmatpush1.msra.mxu0 0.0
  %58 = vmatprep.subr.mxu0 0.0
  %59 = vmatpush1.msra.mxu0 0.0
  %60 = vmatprep.subr.mxu0 0.0
  %61 = vmatpush1.msra.mxu0 0.0
  %62 = vmatprep.subr.mxu0 0.0
  %63 = vmatpush1.msra.mxu0 0.0
  %64 = vmatprep.subr.mxu0 0.0
  %65 = vmatpush1.msra.mxu0 0.0
  %66 = vmatprep.subr.mxu0 0.0
  %67 = vmatpush1.msra.mxu0 0.0
  %68 = vmatprep.subr.mxu0 0.0
  %69 = vmatpush1.msra.mxu0 0.0
  %70 = vmatprep.subr.mxu0 0.0
  %71 = vmatpush1.msra.mxu0 0.0
  %72 = vmatprep.subr.mxu0 0.0
  %73 = vmatpush1.msra.mxu0 0.0
  %74 = vmatprep.subr.mxu0 0.0
  %75 = vmatpush1.msra.mxu0 0.0
  %76 = vmatprep.subr.mxu0 0.0
  %77 = vmatpush1.msra.mxu0 0.0
  %78 = vmatprep.subr.mxu0 0.0
  %79 = vmatpush1.msra.mxu0 0.0
  %80 = vmatprep.subr.mxu0 0.0
  %81 = vmatpush1.msra.mxu0 0.0
  %82 = vmatprep.subr.mxu0 0.0
  %83 = vmatpush1.msra.mxu0 0.0
  %84 = vmatprep.subr.mxu0 0.0
  %85 = vmatpush1.msra.mxu0 0.0
  %86 = vmatprep.subr.mxu0 0.0
  %87 = vmatpush1.msra.mxu0 0.0
  %88 = vmatprep.subr.mxu0 0.0
  %89 = vmatpush1.msra.mxu0 0.0
  %90 = vmatprep.subr.mxu0 0.0
  %91 = vmatpush1.msra.mxu0 0.0
  %92 = vmatprep.subr.mxu0 0.0
  %93 = vmatpush1.msra.mxu0 0.0
  %94 = vmatprep.subr.mxu0 0.0
  %95 = vmatpush1.msra.mxu0 0.0
  %96 = vmatprep.mubr.f32.mxu0 0.0
  %97 = vmatmul.mubr.f32.gmra.mrb[0].mxu0 %v27
  %v98 = vpop.f32.mrb[0].mxu0
  %v99 = vadd.f32 %v23, %v98
  %v100 = vpop.f32.mrb[0].mxu0
  %101 = vmatprep.mubr.f32.mxu0 0.0
  %102 = vmatmul.mubr.f32.gmra.mrb[0].mxu0 %v30
  %v103 = vpop.f32.mrb[0].mxu0
  %v104 = vadd.f32 %v23, %v103
  %v105 = vpop.f32.mrb[0].mxu0
  %106 = vdwg.mxu0
  %vm107 = vcmask 261120
  %108 = vst.msk [vmem:[%s3] sm:$0xff] %vm107, %v99
  %109 = vst.msk [vmem:[%s3 + $0x8] sm:$0xff] %vm107, %v104
  // Predicated region
  $region14: #{singleblock_apply.34} parent=0 // pred_check
    _
  $region15: #{singleblock_apply.34} parent=0 // pred_check_branch
    %111 = sbr.rel (0) target = $region17
  $region16: #{singleblock_apply.34} parent=0 // pred_region
    _
  $region17: #{singleblock_apply.34} parent=0 // pred_fallthru
    _
  // Predicated region
  $region18: #{singleblock_apply.34} parent=0 // pred_check
    _
  $region19: #{singleblock_apply.34} parent=0 // pred_check_branch
    %113 = sbr.rel (0) target = $region21
  $region20: #{singleblock_apply.34} parent=0 // pred_region
    _
  $region21: #{singleblock_apply.34} parent=0 // pred_fallthru
    _

// kernel: singleblock_apply.37
$region0: #{singleblock_apply.37}
  #allocation0 [shape = 'u32[]', space=smem, size = 0x4, offset = 0x4, fixed_abs, tag = 'smem constant byte address 0x4 - core index']
  #allocation1 [shape = 'u32[144,128]{1,0:T(1,128)}', space=vmem, size = 0x12000, scoped, tag = 'internal scratch']
  %s0 = inlined_call_operand.vmem [shape: f32[16,32], index: 0, kind: input, shape index: {}]
  %s1 = inlined_call_operand.vmem [shape: f32[32,32], index: 1, kind: input, shape index: {}]
  %s2 = inlined_call_operand.vmem [shape: f32[1,32], index: 2, kind: input, shape index: {}]
  %s3 = inlined_call_operand.vmem [shape: f32[16,1], index: 3, kind: input, shape index: {}]
  %s4 = inlined_call_operand.vmem [shape: f32[16,32], index: 4, kind: output, shape index: {}]
  %s5 = sld [smem:[#allocation0]]
  $region26: #{singleblock_apply.37} parent=0
    _
  %s7 = ssub.s32 1, %s5
  %s8 = scalar_select 0, %s7, %s5
  // Predicated region
  $region2: #{singleblock_apply.37} parent=0 // pred_check
    _
  $region3: #{singleblock_apply.37} parent=0 // pred_check_branch
    %10 = sbr.rel (0) target = $region5
  $region4: #{singleblock_apply.37} parent=0 // pred_region
    _
  $region5: #{singleblock_apply.37} parent=0 // pred_fallthru
    _
  // Predicated region
  $region6: #{singleblock_apply.37} parent=0 // pred_check
    _
  $region7: #{singleblock_apply.37} parent=0 // pred_check_branch
    %12 = sbr.rel (0) target = $region9
  $region8: #{singleblock_apply.37} parent=0 // pred_region
    _
  $region9: #{singleblock_apply.37} parent=0 // pred_fallthru
    _
  // Predicated region
  $region10: #{singleblock_apply.37} parent=0 // pred_check
    _
  $region11: #{singleblock_apply.37} parent=0 // pred_check_branch
    %14 = sbr.rel (0) target = $region13
  $region12: #{singleblock_apply.37} parent=0 // pred_region
    _
  $region13: #{singleblock_apply.37} parent=0 // pred_fallthru
    _
  // Predicated region
  $region14: #{singleblock_apply.37} parent=0 // pred_check
    _
  $region15: #{singleblock_apply.37} parent=0 // pred_check_branch
    %16 = sbr.rel (0) target = $region17
  $region16: #{singleblock_apply.37} parent=0 // pred_region
    _
  $region17: #{singleblock_apply.37} parent=0 // pred_fallthru
    _
  %v17 = vld [vmem:[%s0] sm:$0xff]
  %v18 = vld [vmem:[%s0 + $0x8] sm:$0xff]
  %v19 = vld [vmem:[%s1] sm:$0xff]
  %v20 = vld [vmem:[%s1 + $0x8] sm:$0xff]
  %v21 = vld [vmem:[%s1 + $0x10] sm:$0xff]
  %v22 = vld [vmem:[%s1 + $0x18] sm:$0xff]
  %v23 = vld [vmem:[%s2] sm:$0x1]
  %v25 = vlaneseq
  %v26 = vshrl.u32 %v25, 7
  %v27 = vsub.s32 0, %v26
  %v28 = vrot.slane %v23, %v27
  %vm30 = vcmask 261120
  %v32 = vsel %vm30, %v17, 0
  %v35 = vsel %vm30, %v18, 0
  %37 = vmatprep.subr.mxu0 0.0
  %38 = vmatpush1.msra.mxu0 %v19
  %39 = vmatprep.subr.mxu0 0.0
  %40 = vmatpush1.msra.mxu0 %v20
  %41 = vmatprep.subr.mxu0 0.0
  %42 = vmatpush1.msra.mxu0 %v21
  %43 = vmatprep.subr.mxu0 0.0
  %44 = vmatpush1.msra.mxu0 %v22
  %45 = vmatprep.subr.mxu0 0.0
  %46 = vmatpush1.msra.mxu0 0.0
  %47 = vmatprep.subr.mxu0 0.0
  %48 = vmatpush1.msra.mxu0 0.0
  %49 = vmatprep.subr.mxu0 0.0
  %50 = vmatpush1.msra.mxu0 0.0
  %51 = vmatprep.subr.mxu0 0.0
  %52 = vmatpush1.msra.mxu0 0.0
  %53 = vmatprep.subr.mxu0 0.0
  %54 = vmatpush1.msra.mxu0 0.0
  %55 = vmatprep.subr.mxu0 0.0
  %56 = vmatpush1.msra.mxu0 0.0
  %57 = vmatprep.subr.mxu0 0.0
  %58 = vmatpush1.msra.mxu0 0.0
  %59 = vmatprep.subr.mxu0 0.0
  %60 = vmatpush1.msra.mxu0 0.0
  %61 = vmatprep.subr.mxu0 0.0
  %62 = vmatpush1.msra.mxu0 0.0
  %63 = vmatprep.subr.mxu0 0.0
  %64 = vmatpush1.msra.mxu0 0.0
  %65 = vmatprep.subr.mxu0 0.0
  %66 = vmatpush1.msra.mxu0 0.0
  %67 = vmatprep.subr.mxu0 0.0
  %68 = vmatpush1.msra.mxu0 0.0
  %69 = vmatprep.subr.mxu0 0.0
  %70 = vmatpush1.msra.mxu0 0.0
  %71 = vmatprep.subr.mxu0 0.0
  %72 = vmatpush1.msra.mxu0 0.0
  %73 = vmatprep.subr.mxu0 0.0
  %74 = vmatpush1.msra.mxu0 0.0
  %75 = vmatprep.subr.mxu0 0.0
  %76 = vmatpush1.msra.mxu0 0.0
  %77 = vmatprep.subr.mxu0 0.0
  %78 = vmatpush1.msra.mxu0 0.0
  %79 = vmatprep.subr.mxu0 0.0
  %80 = vmatpush1.msra.mxu0 0.0
  %81 = vmatprep.subr.mxu0 0.0
  %82 = vmatpush1.msra.mxu0 0.0
  %83 = vmatprep.subr.mxu0 0.0
  %84 = vmatpush1.msra.mxu0 0.0
  %85 = vmatprep.subr.mxu0 0.0
  %86 = vmatpush1.msra.mxu0 0.0
  %87 = vmatprep.subr.mxu0 0.0
  %88 = vmatpush1.msra.mxu0 0.0
  %89 = vmatprep.subr.mxu0 0.0
  %90 = vmatpush1.msra.mxu0 0.0
  %91 = vmatprep.subr.mxu0 0.0
  %92 = vmatpush1.msra.mxu0 0.0
  %93 = vmatprep.subr.mxu0 0.0
  %94 = vmatpush1.msra.mxu0 0.0
  %95 = vmatprep.subr.mxu0 0.0
  %96 = vmatpush1.msra.mxu0 0.0
  %97 = vmatprep.subr.mxu0 0.0
  %98 = vmatpush1.msra.mxu0 0.0
  %99 = vmatprep.subr.mxu0 0.0
  %100 = vmatpush1.msra.mxu0 0.0
  %101 = vmatprep.mubr.f32.mxu0 0.0
  %102 = vmatmul.mubr.f32.gmra.mrb[0].mxu0 %v32
  %v103 = vpop.f32.mrb[0].mxu0
  %v104 = vadd.f32 %v28, %v103
  %v105 = vpop.f32.mrb[0].mxu0
  %106 = vmatprep.mubr.f32.mxu0 0.0
  %107 = vmatmul.mubr.f32.gmra.mrb[0].mxu0 %v35
  %v108 = vpop.f32.mrb[0].mxu0
  %v109 = vadd.f32 %v28, %v108
  %v110 = vpop.f32.mrb[0].mxu0
  %111 = vdwg.mxu0
  %v112 = vld [vmem:[%s3] sm:$0xff]
  %v113 = vld [vmem:[%s3 + $0x8] sm:$0xff]
  %115 = vset.pattern.permute.xlu0 0
  %116 = vperm.xlu0 %115, %v112
  %v117 = vpop.permute.xlu0 %116
  %120 = vset.pattern.permute.xlu0 0
  %121 = vperm.xlu0 %120, %v113
  %v122 = vpop.permute.xlu0 %121
  %v124 = vmul.f32 %v104, %v117
  %v125 = vmul.f32 %v109, %v122
  %126 = vst.msk [vmem:[%s4] sm:$0xff] %vm30, %v124
  %127 = vst.msk [vmem:[%s4 + $0x8] sm:$0xff] %vm30, %v125
  // Predicated region
  $region18: #{singleblock_apply.37} parent=0 // pred_check
    _
  $region19: #{singleblock_apply.37} parent=0 // pred_check_branch
    %129 = sbr.rel (0) target = $region21
  $region20: #{singleblock_apply.37} parent=0 // pred_region
    _
  $region21: #{singleblock_apply.37} parent=0 // pred_fallthru
    _
  // Predicated region
  $region22: #{singleblock_apply.37} parent=0 // pred_check
    _
  $region23: #{singleblock_apply.37} parent=0 // pred_check_branch
    %131 = sbr.rel (0) target = $region25
  $region24: #{singleblock_apply.37} parent=0 // pred_region
    _
  $region25: #{singleblock_apply.37} parent=0 // pred_fallthru
    _

// kernel: singleblock_apply.39
$region0: #{singleblock_apply.39}
  #allocation0 [shape = 'u32[]', space=smem, size = 0x4, offset = 0x4, fixed_abs, tag = 'smem constant byte address 0x4 - core index']
  #allocation1 [shape = 'u32[144,128]{1,0:T(1,128)}', space=vmem, size = 0x12000, scoped, tag = 'internal scratch']
  %s0 = inlined_call_operand.vmem [shape: f32[16,32], index: 0, kind: input, shape index: {}]
  %s1 = inlined_call_operand.vmem [shape: f32[32,32], index: 1, kind: input, shape index: {}]
  %s2 = inlined_call_operand.vmem [shape: f32[16,32], index: 2, kind: input, shape index: {}]
  %s3 = inlined_call_operand.vmem [shape: f32[32,32], index: 3, kind: input, shape index: {}]
  %s4 = inlined_call_operand.vmem [shape: f32[1,32], index: 4, kind: input, shape index: {}]
  %s5 = inlined_call_operand.vmem [shape: f32[16,32], index: 5, kind: output, shape index: {}]
  %s6 = sld [smem:[#allocation0]]
  $region30: #{singleblock_apply.39} parent=0
    _
  %s8 = ssub.s32 1, %s6
  %s9 = scalar_select 0, %s8, %s6
  // Predicated region
  $region2: #{singleblock_apply.39} parent=0 // pred_check
    _
  $region3: #{singleblock_apply.39} parent=0 // pred_check_branch
    %11 = sbr.rel (0) target = $region5
  $region4: #{singleblock_apply.39} parent=0 // pred_region
    _
  $region5: #{singleblock_apply.39} parent=0 // pred_fallthru
    _
  // Predicated region
  $region6: #{singleblock_apply.39} parent=0 // pred_check
    _
  $region7: #{singleblock_apply.39} parent=0 // pred_check_branch
    %13 = sbr.rel (0) target = $region9
  $region8: #{singleblock_apply.39} parent=0 // pred_region
    _
  $region9: #{singleblock_apply.39} parent=0 // pred_fallthru
    _
  // Predicated region
  $region10: #{singleblock_apply.39} parent=0 // pred_check
    _
  $region11: #{singleblock_apply.39} parent=0 // pred_check_branch
    %15 = sbr.rel (0) target = $region13
  $region12: #{singleblock_apply.39} parent=0 // pred_region
    _
  $region13: #{singleblock_apply.39} parent=0 // pred_fallthru
    _
  // Predicated region
  $region14: #{singleblock_apply.39} parent=0 // pred_check
    _
  $region15: #{singleblock_apply.39} parent=0 // pred_check_branch
    %17 = sbr.rel (0) target = $region17
  $region16: #{singleblock_apply.39} parent=0 // pred_region
    _
  $region17: #{singleblock_apply.39} parent=0 // pred_fallthru
    _
  // Predicated region
  $region18: #{singleblock_apply.39} parent=0 // pred_check
    _
  $region19: #{singleblock_apply.39} parent=0 // pred_check_branch
    %19 = sbr.rel (0) target = $region21
  $region20: #{singleblock_apply.39} parent=0 // pred_region
    _
  $region21: #{singleblock_apply.39} parent=0 // pred_fallthru
    _
  %v20 = vld [vmem:[%s0] sm:$0xff]
  %v21 = vld [vmem:[%s0 + $0x8] sm:$0xff]
  %v22 = vld [vmem:[%s1] sm:$0xff]
  %v23 = vld [vmem:[%s1 + $0x8] sm:$0xff]
  %v24 = vld [vmem:[%s1 + $0x10] sm:$0xff]
  %v25 = vld [vmem:[%s1 + $0x18] sm:$0xff]
  %v26 = vld [vmem:[%s2] sm:$0xff]
  %v27 = vld [vmem:[%s2 + $0x8] sm:$0xff]
  %v28 = vld [vmem:[%s3] sm:$0xff]
  %v29 = vld [vmem:[%s3 + $0x8] sm:$0xff]
  %v30 = vld [vmem:[%s3 + $0x10] sm:$0xff]
  %v31 = vld [vmem:[%s3 + $0x18] sm:$0xff]
  %vm32 = vcmask 261120
  %v34 = vsel %vm32, %v26, 0
  %v37 = vsel %vm32, %v27, 0
  %39 = vmatprep.subr.mxu0 0.0
  %40 = vmatpush1.msra.mxu0 %v28
  %41 = vmatprep.subr.mxu0 0.0
  %42 = vmatpush1.msra.mxu0 %v29
  %43 = vmatprep.subr.mxu0 0.0
  %44 = vmatpush1.msra.mxu0 %v30
  %45 = vmatprep.subr.mxu0 0.0
  %46 = vmatpush1.msra.mxu0 %v31
  %47 = vmatprep.subr.mxu0 0.0
  %48 = vmatpush1.msra.mxu0 0.0
  %49 = vmatprep.subr.mxu0 0.0
  %50 = vmatpush1.msra.mxu0 0.0
  %51 = vmatprep.subr.mxu0 0.0
  %52 = vmatpush1.msra.mxu0 0.0
  %53 = vmatprep.subr.mxu0 0.0
  %54 = vmatpush1.msra.mxu0 0.0
  %55 = vmatprep.subr.mxu0 0.0
  %56 = vmatpush1.msra.mxu0 0.0
  %57 = vmatprep.subr.mxu0 0.0
  %58 = vmatpush1.msra.mxu0 0.0
  %59 = vmatprep.subr.mxu0 0.0
  %60 = vmatpush1.msra.mxu0 0.0
  %61 = vmatprep.subr.mxu0 0.0
  %62 = vmatpush1.msra.mxu0 0.0
  %63 = vmatprep.subr.mxu0 0.0
  %64 = vmatpush1.msra.mxu0 0.0
  %65 = vmatprep.subr.mxu0 0.0
  %66 = vmatpush1.msra.mxu0 0.0
  %67 = vmatprep.subr.mxu0 0.0
  %68 = vmatpush1.msra.mxu0 0.0
  %69 = vmatprep.subr.mxu0 0.0
  %70 = vmatpush1.msra.mxu0 0.0
  %71 = vmatprep.subr.mxu0 0.0
  %72 = vmatpush1.msra.mxu0 0.0
  %73 = vmatprep.subr.mxu0 0.0
  %74 = vmatpush1.msra.mxu0 0.0
  %75 = vmatprep.subr.mxu0 0.0
  %76 = vmatpush1.msra.mxu0 0.0
  %77 = vmatprep.subr.mxu0 0.0
  %78 = vmatpush1.msra.mxu0 0.0
  %79 = vmatprep.subr.mxu0 0.0
  %80 = vmatpush1.msra.mxu0 0.0
  %81 = vmatprep.subr.mxu0 0.0
  %82 = vmatpush1.msra.mxu0 0.0
  %83 = vmatprep.subr.mxu0 0.0
  %84 = vmatpush1.msra.mxu0 0.0
  %85 = vmatprep.subr.mxu0 0.0
  %86 = vmatpush1.msra.mxu0 0.0
  %87 = vmatprep.subr.mxu0 0.0
  %88 = vmatpush1.msra.mxu0 0.0
  %89 = vmatprep.subr.mxu0 0.0
  %90 = vmatpush1.msra.mxu0 0.0
  %91 = vmatprep.subr.mxu0 0.0
  %92 = vmatpush1.msra.mxu0 0.0
  %93 = vmatprep.subr.mxu0 0.0
  %94 = vmatpush1.msra.mxu0 0.0
  %95 = vmatprep.subr.mxu0 0.0
  %96 = vmatpush1.msra.mxu0 0.0
  %97 = vmatprep.subr.mxu0 0.0
  %98 = vmatpush1.msra.mxu0 0.0
  %99 = vmatprep.subr.mxu0 0.0
  %100 = vmatpush1.msra.mxu0 0.0
  %101 = vmatprep.subr.mxu0 0.0
  %102 = vmatpush1.msra.mxu0 0.0
  %103 = vmatprep.mubr.f32.mxu0 0.0
  %104 = vmatmul.mubr.f32.gmra.mrb[0].mxu0 %v34
  %v105 = vpop.f32.mrb[0].mxu0
  %v106 = vadd.f32 0.0, %v105
  %v107 = vpop.f32.mrb[0].mxu0
  %108 = vmatprep.mubr.f32.mxu0 0.0
  %109 = vmatmul.mubr.f32.gmra.mrb[0].mxu0 %v37
  %v110 = vpop.f32.mrb[0].mxu0
  %v111 = vadd.f32 0.0, %v110
  %v112 = vpop.f32.mrb[0].mxu0
  %113 = vdwg.mxu0
  %v115 = vsel %vm32, %v20, 0
  %v118 = vsel %vm32, %v21, 0
  %120 = vmatprep.subr.mxu0 0.0
  %121 = vmatpush1.msra.mxu0 %v22
  %122 = vmatprep.subr.mxu0 0.0
  %123 = vmatpush1.msra.mxu0 %v23
  %124 = vmatprep.subr.mxu0 0.0
  %125 = vmatpush1.msra.mxu0 %v24
  %126 = vmatprep.subr.mxu0 0.0
  %127 = vmatpush1.msra.mxu0 %v25
  %128 = vmatprep.subr.mxu0 0.0
  %129 = vmatpush1.msra.mxu0 0.0
  %130 = vmatprep.subr.mxu0 0.0
  %131 = vmatpush1.msra.mxu0 0.0
  %132 = vmatprep.subr.mxu0 0.0
  %133 = vmatpush1.msra.mxu0 0.0
  %134 = vmatprep.subr.mxu0 0.0
  %135 = vmatpush1.msra.mxu0 0.0
  %136 = vmatprep.subr.mxu0 0.0
  %137 = vmatpush1.msra.mxu0 0.0
  %138 = vmatprep.subr.mxu0 0.0
  %139 = vmatpush1.msra.mxu0 0.0
  %140 = vmatprep.subr.mxu0 0.0
  %141 = vmatpush1.msra.mxu0 0.0
  %142 = vmatprep.subr.mxu0 0.0
  %143 = vmatpush1.msra.mxu0 0.0
  %144 = vmatprep.subr.mxu0 0.0
  %145 = vmatpush1.msra.mxu0 0.0
  %146 = vmatprep.subr.mxu0 0.0
  %147 = vmatpush1.msra.mxu0 0.0
  %148 = vmatprep.subr.mxu0 0.0
  %149 = vmatpush1.msra.mxu0 0.0
  %150 = vmatprep.subr.mxu0 0.0
  %151 = vmatpush1.msra.mxu0 0.0
  %152 = vmatprep.subr.mxu0 0.0
  %153 = vmatpush1.msra.mxu0 0.0
  %154 = vmatprep.subr.mxu0 0.0
  %155 = vmatpush1.msra.mxu0 0.0
  %156 = vmatprep.subr.mxu0 0.0
  %157 = vmatpush1.msra.mxu0 0.0
  %158 = vmatprep.subr.mxu0 0.0
  %159 = vmatpush1.msra.mxu0 0.0
  %160 = vmatprep.subr.mxu0 0.0
  %161 = vmatpush1.msra.mxu0 0.0
  %162 = vmatprep.subr.mxu0 0.0
  %163 = vmatpush1.msra.mxu0 0.0
  %164 = vmatprep.subr.mxu0 0.0
  %165 = vmatpush1.msra.mxu0 0.0
  %166 = vmatprep.subr.mxu0 0.0
  %167 = vmatpush1.msra.mxu0 0.0
  %168 = vmatprep.subr.mxu0 0.0
  %169 = vmatpush1.msra.mxu0 0.0
  %170 = vmatprep.subr.mxu0 0.0
  %171 = vmatpush1.msra.mxu0 0.0
  %172 = vmatprep.subr.mxu0 0.0
  %173 = vmatpush1.msra.mxu0 0.0
  %174 = vmatprep.subr.mxu0 0.0
  %175 = vmatpush1.msra.mxu0 0.0
  %176 = vmatprep.subr.mxu0 0.0
  %177 = vmatpush1.msra.mxu0 0.0
  %178 = vmatprep.subr.mxu0 0.0
  %179 = vmatpush1.msra.mxu0 0.0
  %180 = vmatprep.subr.mxu0 0.0
  %181 = vmatpush1.msra.mxu0 0.0
  %182 = vmatprep.subr.mxu0 0.0
  %183 = vmatpush1.msra.mxu0 0.0
  %184 = vmatprep.mubr.f32.mxu0 0.0
  %185 = vmatmul.mubr.f32.gmra.mrb[0].mxu0 %v115
  %v186 = vpop.f32.mrb[0].mxu0
  %v187 = vadd.f32 %v106, %v186
  %v188 = vpop.f32.mrb[0].mxu0
  %189 = vmatprep.mubr.f32.mxu0 0.0
  %190 = vmatmul.mubr.f32.gmra.mrb[0].mxu0 %v118
  %v191 = vpop.f32.mrb[0].mxu0
  %v192 = vadd.f32 %v111, %v191
  %v193 = vpop.f32.mrb[0].mxu0
  %194 = vdwg.mxu0
  %v195 = vld [vmem:[%s4] sm:$0x1]
  %v197 = vlaneseq
  %v198 = vshrl.u32 %v197, 7
  %v199 = vsub.s32 0, %v198
  %v200 = vrot.slane %v195, %v199
  %v202 = vadd.f32 %v187, %v200
  %v203 = vadd.f32 %v192, %v200
  %204 = vst.msk [vmem:[%s5] sm:$0xff] %vm32, %v202
  %205 = vst.msk [vmem:[%s5 + $0x8] sm:$0xff] %vm32, %v203
  // Predicated region
  $region22: #{singleblock_apply.39} parent=0 // pred_check
    _
  $region23: #{singleblock_apply.39} parent=0 // pred_check_branch
    %207 = sbr.rel (0) target = $region25
  $region24: #{singleblock_apply.39} parent=0 // pred_region
    _
  $region25: #{singleblock_apply.39} parent=0 // pred_fallthru
    _
  // Predicated region
  $region26: #{singleblock_apply.39} parent=0 // pred_check
    _
  $region27: #{singleblock_apply.39} parent=0 // pred_check_branch
    %209 = sbr.rel (0) target = $region29
  $region28: #{singleblock_apply.39} parent=0 // pred_region
    _
  $region29: #{singleblock_apply.39} parent=0 // pred_fallthru
    _

// kernel: singleblock_apply.38
$region0: #{singleblock_apply.38}
  #allocation0 [shape = 'u32[]', space=smem, size = 0x4, offset = 0x4, fixed_abs, tag = 'smem constant byte address 0x4 - core index']
  #allocation1 [shape = 'u32[144,128]{1,0:T(1,128)}', space=vmem, size = 0x12000, scoped, tag = 'internal scratch']
  %s0 = inlined_call_operand.vmem [shape: f32[2,4,8,8], index: 0, kind: input, shape index: {}]
  %s1 = inlined_call_operand.vmem [shape: f32[2,4,8,8], index: 1, kind: input, shape index: {}]
  %s2 = inlined_call_operand.vmem [shape: f32[2,4,8,8], index: 2, kind: input, shape index: {}]
  %s3 = inlined_call_operand.vmem [shape: f32[2,1,8], index: 3, kind: input, shape index: {}]
  %s4 = inlined_call_operand.vmem [shape: f32[2,4,8,8], index: 4, kind: output, shape index: {}]
  %s5 = sld [smem:[#allocation0]]
  $region49: #{singleblock_apply.38} parent=0
    _
  %s7 = ssub.s32 1, %s5
  %s8 = scalar_select 0, %s7, %s5
  loop: start=0, step=1, limit=4
  $region2: #{singleblock_apply.38} parent=0 // loop_pre_header
    _
  $region3: #{singleblock_apply.38} parent=0 // loop_header
    %s10 = sphi 0, %s14
    %p11 = scmp.ge.s32.totalorder %s10, 4
    %s20 = sphi 0, %s22
    %s23 = sphi 0, %s20
    %s24 = sphi 0, %s23
    %s40 = sphi 0, %s24
    %s46 = sphi 0, %s48
    %s49 = sphi 0, %s46
    %s50 = sphi 0, %s49
    %s66 = sphi 0, %s50
    %s72 = sphi 0, %s74
    %s75 = sphi 0, %s72
    %s76 = sphi 0, %s75
    %s92 = sphi 0, %s76
    %s98 = sphi 0, %s100
    %s101 = sphi 0, %s98
    %s102 = sphi 0, %s101
    %s118 = sphi 0, %s102
    %s124 = sphi 0, %s126
    %s127 = sphi 0, %s124
    %s128 = sphi 0, %s127
    %s144 = sphi 0, %s128
  $region4: #{singleblock_apply.38} parent=0 // loop_header_branch
    %13 = sbr.rel (%p11) target = $region8
  $region5: #{singleblock_apply.38} parent=0 // loop_body
    %s15 = ssub.s32 %s10, 1
    %s16 = ssub.s32 %s10, 2
    %s17 = sadd.s32 %s10, 1
    %s18 = ssub.s32 %s10, %s17
    %p19 = scmp.eq.s32.totalorder %s18, 0
    %s21 = sadd.s32 %s20, 1
    %s22 = scalar_select %p19, %s20, %s21
    %p25 = pneg %p19
    %p26 = scmp.eq.s32.totalorder %s10, 1
    %p27 = por %p25, %p26
    %p28 = scmp.ne.s32.totalorder %s20, %s23
    %p29 = scmp.eq.s32.totalorder %s10, 0
    %p30 = por %p28, %p29
    %p31 = scmp.ne.s32.totalorder %s20, %s23
    %p32 = scmp.eq.s32.totalorder %s15, 1
    %p33 = por %p31, %p32
    %p34 = scmp.ne.s32.totalorder %s23, %s24
    %p35 = scmp.eq.s32.totalorder %s15, 0
    %p36 = por %p34, %p35
    %p37 = scmp.ne.s32.totalorder %s23, %s24
    %p38 = scmp.eq.s32.totalorder %s16, 1
    %p39 = por %p37, %p38
    %p41 = scmp.ne.s32.totalorder %s24, %s40
    %p42 = scmp.eq.s32.totalorder %s16, 0
    %p43 = por %p41, %p42
    %s44 = ssub.s32 %s10, %s17
    %p45 = scmp.eq.s32.totalorder %s44, 0
    %s47 = sadd.s32 %s46, 1
    %s48 = scalar_select %p45, %s46, %s47
    %p51 = pneg %p45
    %p52 = scmp.eq.s32.totalorder %s10, 1
    %p53 = por %p51, %p52
    %p54 = scmp.ne.s32.totalorder %s46, %s49
    %p55 = scmp.eq.s32.totalorder %s10, 0
    %p56 = por %p54, %p55
    %p57 = scmp.ne.s32.totalorder %s46, %s49
    %p58 = scmp.eq.s32.totalorder %s15, 1
    %p59 = por %p57, %p58
    %p60 = scmp.ne.s32.totalorder %s49, %s50
    %p61 = scmp.eq.s32.totalorder %s15, 0
    %p62 = por %p60, %p61
    %p63 = scmp.ne.s32.totalorder %s49, %s50
    %p64 = scmp.eq.s32.totalorder %s16, 1
    %p65 = por %p63, %p64
    %p67 = scmp.ne.s32.totalorder %s50, %s66
    %p68 = scmp.eq.s32.totalorder %s16, 0
    %p69 = por %p67, %p68
    %s70 = ssub.s32 %s10, %s17
    %p71 = scmp.eq.s32.totalorder %s70, 0
    %s73 = sadd.s32 %s72, 1
    %s74 = scalar_select %p71, %s72, %s73
    %p77 = pneg %p71
    %p78 = scmp.eq.s32.totalorder %s10, 1
    %p79 = por %p77, %p78
    %p80 = scmp.ne.s32.totalorder %s72, %s75
    %p81 = scmp.eq.s32.totalorder %s10, 0
    %p82 = por %p80, %p81
    %p83 = scmp.ne.s32.totalorder %s72, %s75
    %p84 = scmp.eq.s32.totalorder %s15, 1
    %p85 = por %p83, %p84
    %p86 = scmp.ne.s32.totalorder %s75, %s76
    %p87 = scmp.eq.s32.totalorder %s15, 0
    %p88 = por %p86, %p87
    %p89 = scmp.ne.s32.totalorder %s75, %s76
    %p90 = scmp.eq.s32.totalorder %s16, 1
    %p91 = por %p89, %p90
    %p93 = scmp.ne.s32.totalorder %s76, %s92
    %p94 = scmp.eq.s32.totalorder %s16, 0
    %p95 = por %p93, %p94
    %s96 = ssub.s32 %s10, %s17
    %p97 = scmp.eq.s32.totalorder %s96, 0
    %s99 = sadd.s32 %s98, 1
    %s100 = scalar_select %p97, %s98, %s99
    %p103 = pneg %p97
    %p104 = scmp.eq.s32.totalorder %s10, 1
    %p105 = por %p103, %p104
    %p106 = scmp.ne.s32.totalorder %s98, %s101
    %p107 = scmp.eq.s32.totalorder %s10, 0
    %p108 = por %p106, %p107
    %p109 = scmp.ne.s32.totalorder %s98, %s101
    %p110 = scmp.eq.s32.totalorder %s15, 1
    %p111 = por %p109, %p110
    %p112 = scmp.ne.s32.totalorder %s101, %s102
    %p113 = scmp.eq.s32.totalorder %s15, 0
    %p114 = por %p112, %p113
    %p115 = scmp.ne.s32.totalorder %s101, %s102
    %p116 = scmp.eq.s32.totalorder %s16, 1
    %p117 = por %p115, %p116
    %p119 = scmp.ne.s32.totalorder %s102, %s118
    %p120 = scmp.eq.s32.totalorder %s16, 0
    %p121 = por %p119, %p120
    %s122 = ssub.s32 %s10, %s17
    %p123 = scmp.eq.s32.totalorder %s122, 0
    %s125 = sadd.s32 %s124, 1
    %s126 = scalar_select %p123, %s124, %s125
    %p129 = pneg %p123
    %p130 = scmp.eq.s32.totalorder %s10, 1
    %p131 = por %p129, %p130
    %p132 = scmp.ne.s32.totalorder %s124, %s127
    %p133 = scmp.eq.s32.totalorder %s10, 0
    %p134 = por %p132, %p133
    %p135 = scmp.ne.s32.totalorder %s124, %s127
    %p136 = scmp.eq.s32.totalorder %s15, 1
    %p137 = por %p135, %p136
    %p138 = scmp.ne.s32.totalorder %s127, %s128
    %p139 = scmp.eq.s32.totalorder %s15, 0
    %p140 = por %p138, %p139
    %p141 = scmp.ne.s32.totalorder %s127, %s128
    %p142 = scmp.eq.s32.totalorder %s16, 1
    %p143 = por %p141, %p142
    %p145 = scmp.ne.s32.totalorder %s128, %s144
    %p146 = scmp.eq.s32.totalorder %s16, 0
    %p147 = por %p145, %p146
    %p148 = scmp.le.s32.totalorder 1, %s10
    %p149 = scmp.lt.s32.totalorder %s10, 3
    %p150 = pnand %p148, %p149
    %p151 = pneg %p150
    // Predicated region
    $region9: #{singleblock_apply.38} parent=5 // pred_check
      _
    $region10: #{singleblock_apply.38} parent=5 // pred_check_branch
      %153 = sbr.rel (%p150) target = $region12
    $region11: #{singleblock_apply.38} parent=5 // pred_region
      %s154 = ssub.s32 %s10, 1
    $region12: #{singleblock_apply.38} parent=5 // pred_fallthru
      _
    %p155 = scmp.lt.s32.totalorder %s10, 2
    // Predicated region
    $region13: #{singleblock_apply.38} parent=5 // pred_check
      %p156 = pneg %p155
    $region14: #{singleblock_apply.38} parent=5 // pred_check_branch
      %158 = sbr.rel (%p156) target = $region16
    $region15: #{singleblock_apply.38} parent=5 // pred_region
      // Predicated region
      $region17: #{singleblock_apply.38} parent=15 // pred_check
        %p159 = pneg %p30
      $region18: #{singleblock_apply.38} parent=15 // pred_check_branch
        %161 = sbr.rel (%p159) target = $region20
      $region19: #{singleblock_apply.38} parent=15 // pred_region
        %p162 = scmp.lt.s32.totalorder %s10, 1
        %s163 = scalar_select %p162, %s10, 1
        %s164 = smul.addr %s163, 4
        %s165 = smul.addr %s164, 8
        %s166 = scalar_lea.vmem %s0, %s165
      $region20: #{singleblock_apply.38} parent=15 // pred_fallthru
        _
      // Predicated region
      $region21: #{singleblock_apply.38} parent=15 // pred_check
        %p167 = pneg %p56
      $region22: #{singleblock_apply.38} parent=15 // pred_check_branch
        %169 = sbr.rel (%p167) target = $region24
      $region23: #{singleblock_apply.38} parent=15 // pred_region
        %p170 = scmp.lt.s32.totalorder %s10, 1
        %s171 = scalar_select %p170, %s10, 1
        %s172 = smul.addr %s171, 4
        %s173 = smul.addr %s172, 8
        %s174 = scalar_lea.vmem %s1, %s173
      $region24: #{singleblock_apply.38} parent=15 // pred_fallthru
        _
      // Predicated region
      $region25: #{singleblock_apply.38} parent=15 // pred_check
        %p175 = pneg %p82
      $region26: #{singleblock_apply.38} parent=15 // pred_check_branch
        %177 = sbr.rel (%p175) target = $region28
      $region27: #{singleblock_apply.38} parent=15 // pred_region
        %p178 = scmp.lt.s32.totalorder %s10, 1
        %s179 = scalar_select %p178, %s10, 1
        %s180 = smul.addr %s179, 4
        %s181 = smul.addr %s180, 8
        %s182 = scalar_lea.vmem %s2, %s181
      $region28: #{singleblock_apply.38} parent=15 // pred_fallthru
        _
      // Predicated region
      $region29: #{singleblock_apply.38} parent=15 // pred_check
        %p183 = pneg %p108
      $region30: #{singleblock_apply.38} parent=15 // pred_check_branch
        %185 = sbr.rel (%p183) target = $region32
      $region31: #{singleblock_apply.38} parent=15 // pred_region
        %p186 = scmp.lt.s32.totalorder %s10, 1
        %s187 = scalar_select %p186, %s10, 1
        %s188 = scalar_lea.vmem %s3, %s187
      $region32: #{singleblock_apply.38} parent=15 // pred_fallthru
        _
    $region16: #{singleblock_apply.38} parent=5 // pred_fallthru
      _
    %p189 = scmp.le.s32.totalorder 1, %s10
    %p190 = scmp.lt.s32.totalorder %s10, 3
    %p191 = pnand %p189, %p190
    %p192 = pneg %p191
    // Predicated region
    $region33: #{singleblock_apply.38} parent=5 // pred_check
      _
    $region34: #{singleblock_apply.38} parent=5 // pred_check_branch
      %194 = sbr.rel (%p191) target = $region36
    $region35: #{singleblock_apply.38} parent=5 // pred_region
      %s195 = ssub.s32 %s10, 1
      %p196 = scmp.lt.s32.totalorder %s15, 1
      %s197 = scalar_select %p196, %s15, 1
      %s198 = smul.addr %s197, 4
      %s199 = smul.addr %s198, 8
      %s200 = scalar_lea.vmem %s0, %s199
      %p201 = pneg %p36
      %p202 = pneg %p33
      %p203 = scmp.lt.s32.totalorder %s15, 1
      %s204 = scalar_select %p203, %s15, 1
      %s205 = smul.addr %s204, 4
      %s206 = smul.addr %s205, 8
      %s207 = scalar_lea.vmem %s1, %s206
      %p208 = pneg %p62
      %p209 = pneg %p59
      %p210 = scmp.lt.s32.totalorder %s15, 1
      %s211 = scalar_select %p210, %s15, 1
      %s212 = smul.addr %s211, 4
      %s213 = smul.addr %s212, 8
      %s214 = scalar_lea.vmem %s2, %s213
      %p215 = pneg %p88
      %p216 = pneg %p85
      %p217 = scmp.lt.s32.totalorder %s15, 1
      %s218 = scalar_select %p217, %s15, 1
      %s219 = scalar_lea.vmem %s3, %s218
      %p220 = pneg %p114
      %p221 = pneg %p111
      %p222 = pneg %p140
      %p223 = pneg %p137
      %p224 = scmp.lt.s32.totalorder %s15, 1
      %s225 = scalar_select %p224, %s15, 1
      %s226 = smul.addr %s225, 4
      %s227 = smul.addr %s226, 8
      %s228 = scalar_lea.vmem %s4, %s227
      %p229 = scmp.lt.s32.totalorder %s15, 1
      %s230 = scalar_select %p229, %s15, 1
      %s231 = smul.addr %s230, 4
      %s232 = smul.addr %s231, 8
      %s233 = scalar_lea.vmem %s0, %s232
      %p234 = scmp.lt.s32.totalorder %s15, 1
      %s235 = scalar_select %p234, %s15, 1
      %s236 = smul.addr %s235, 4
      %s237 = smul.addr %s236, 8
      %s238 = scalar_lea.vmem %s1, %s237
      %p239 = scmp.lt.s32.totalorder %s15, 1
      %s240 = scalar_select %p239, %s15, 1
      %s241 = smul.addr %s240, 4
      %s242 = smul.addr %s241, 8
      %s243 = scalar_lea.vmem %s2, %s242
      %p244 = scmp.lt.s32.totalorder %s15, 1
      %s245 = scalar_select %p244, %s15, 1
      %s246 = scalar_lea.vmem %s3, %s245
      %p247 = scmp.lt.s32.totalorder %s15, 1
      %s248 = scalar_select %p247, %s15, 1
      %s249 = smul.addr %s248, 4
      %s250 = smul.addr %s249, 8
      %s251 = scalar_lea.vmem %s4, %s250
      %v252 = vld [vmem:[%s233] sm:$0xff]
      %v253 = vld [vmem:[%s233 + $0x8] sm:$0xff]
      %v254 = vld [vmem:[%s233 + $0x10] sm:$0xff]
      %v255 = vld [vmem:[%s233 + $0x18] sm:$0xff]
      %v256 = vmul.f32 %v252, 0.35355338
      %v257 = vmul.f32 %v253, 0.35355338
      %v258 = vmul.f32 %v254, 0.35355338
      %v259 = vmul.f32 %v255, 0.35355338
      %v260 = vld [vmem:[%s238] sm:$0xff]
      %v261 = vld [vmem:[%s238 + $0x8] sm:$0xff]
      %v262 = vld [vmem:[%s238 + $0x10] sm:$0xff]
      %v263 = vld [vmem:[%s238 + $0x18] sm:$0xff]
      %v264 = vld [vmem:[%s243] sm:$0xff]
      %v265 = vld [vmem:[%s243 + $0x8] sm:$0xff]
      %v266 = vld [vmem:[%s243 + $0x10] sm:$0xff]
      %v267 = vld [vmem:[%s243 + $0x18] sm:$0xff]
      %v268 = vld [vmem:[%s246] sm:$0x1]
      %v270 = vlaneseq
      %v271 = vshrl.u32 %v270, 7
      %v272 = vsub.s32 0, %v271
      %v273 = vrot.slane %v268, %v272
      %vm275 = vcmask 64512
      %v277 = vsel %vm275, %v256, 0
      %v280 = vsel %vm275, %v260, 0
      %282 = vmatprep.subr.mxu0 0.0
      %283 = vmatpush1.xpose.msra.mxu0 %v280
      %284 = vmatprep.subr.mxu0 0.0
      %285 = vmatpush1.xpose.msra.mxu0 0.0
      %286 = vmatprep.subr.mxu0 0.0
      %287 = vmatpush1.xpose.msra.mxu0 0.0
      %288 = vmatprep.subr.mxu0 0.0
      %289 = vmatpush1.xpose.msra.mxu0 0.0
      %290 = vmatprep.subr.mxu0 0.0
      %291 = vmatpush1.xpose.msra.mxu0 0.0
      %292 = vmatprep.subr.mxu0 0.0
      %293 = vmatpush1.xpose.msra.mxu0 0.0
      %294 = vmatprep.subr.mxu0 0.0
      %295 = vmatpush1.xpose.msra.mxu0 0.0
      %296 = vmatprep.subr.mxu0 0.0
      %297 = vmatpush1.xpose.msra.mxu0 0.0
      %298 = vmatprep.subr.mxu0 0.0
      %299 = vmatpush1.xpose.msra.mxu0 0.0
      %300 = vmatprep.subr.mxu0 0.0
      %301 = vmatpush1.xpose.msra.mxu0 0.0
      %302 = vmatprep.subr.mxu0 0.0
      %303 = vmatpush1.xpose.msra.mxu0 0.0
      %304 = vmatprep.subr.mxu0 0.0
      %305 = vmatpush1.xpose.msra.mxu0 0.0
      %306 = vmatprep.subr.mxu0 0.0
      %307 = vmatpush1.xpose.msra.mxu0 0.0
      %308 = vmatprep.subr.mxu0 0.0
      %309 = vmatpush1.xpose.msra.mxu0 0.0
      %310 = vmatprep.subr.mxu0 0.0
      %311 = vmatpush1.xpose.msra.mxu0 0.0
      %312 = vmatprep.subr.mxu0 0.0
      %313 = vmatpush1.xpose.msra.mxu0 0.0
      %314 = vmatprep.subr.mxu0 0.0
      %315 = vmatpush1.xpose.msra.mxu0 0.0
      %316 = vmatprep.subr.mxu0 0.0
      %317 = vmatpush1.xpose.msra.mxu0 0.0
      %318 = vmatprep.subr.mxu0 0.0
      %319 = vmatpush1.xpose.msra.mxu0 0.0
      %320 = vmatprep.subr.mxu0 0.0
      %321 = vmatpush1.xpose.msra.mxu0 0.0
      %322 = vmatprep.subr.mxu0 0.0
      %323 = vmatpush1.xpose.msra.mxu0 0.0
      %324 = vmatprep.subr.mxu0 0.0
      %325 = vmatpush1.xpose.msra.mxu0 0.0
      %326 = vmatprep.subr.mxu0 0.0
      %327 = vmatpush1.xpose.msra.mxu0 0.0
      %328 = vmatprep.subr.mxu0 0.0
      %329 = vmatpush1.xpose.msra.mxu0 0.0
      %330 = vmatprep.subr.mxu0 0.0
      %331 = vmatpush1.xpose.msra.mxu0 0.0
      %332 = vmatprep.subr.mxu0 0.0
      %333 = vmatpush1.xpose.msra.mxu0 0.0
      %334 = vmatprep.subr.mxu0 0.0
      %335 = vmatpush1.xpose.msra.mxu0 0.0
      %336 = vmatprep.subr.mxu0 0.0
      %337 = vmatpush1.xpose.msra.mxu0 0.0
      %338 = vmatprep.subr.mxu0 0.0
      %339 = vmatpush1.xpose.msra.mxu0 0.0
      %340 = vmatprep.subr.mxu0 0.0
      %341 = vmatpush1.xpose.msra.mxu0 0.0
      %342 = vmatprep.subr.mxu0 0.0
      %343 = vmatpush1.xpose.msra.mxu0 0.0
      %344 = vmatprep.subr.mxu0 0.0
      %345 = vmatpush1.xpose.msra.mxu0 0.0
      %346 = vmatprep.mubr.f32.mxu0 0.0
      %347 = vmatmul.mubr.f32.gmra.mrb[0].mxu0 %v277
      %v348 = vpop.f32.mrb[0].mxu0
      %v349 = vadd.f32 %v273, %v348
      %v350 = vpop.f32.mrb[0].mxu0
      %351 = vdwg.mxu0
      %v353 = vsel %vm275, %v257, 0
      %v356 = vsel %vm275, %v261, 0
      %358 = vmatprep.subr.mxu0 0.0
      %359 = vmatpush1.xpose.msra.mxu0 %v356
      %360 = vmatprep.subr.mxu0 0.0
      %361 = vmatpush1.xpose.msra.mxu0 0.0
      %362 = vmatprep.subr.mxu0 0.0
      %363 = vmatpush1.xpose.msra.mxu0 0.0
      %364 = vmatprep.subr.mxu0 0.0
      %365 = vmatpush1.xpose.msra.mxu0 0.0
      %366 = vmatprep.subr.mxu0 0.0
      %367 = vmatpush1.xpose.msra.mxu0 0.0
      %368 = vmatprep.subr.mxu0 0.0
      %369 = vmatpush1.xpose.msra.mxu0 0.0
      %370 = vmatprep.subr.mxu0 0.0
      %371 = vmatpush1.xpose.msra.mxu0 0.0
      %372 = vmatprep.subr.mxu0 0.0
      %373 = vmatpush1.xpose.msra.mxu0 0.0
      %374 = vmatprep.subr.mxu0 0.0
      %375 = vmatpush1.xpose.msra.mxu0 0.0
      %376 = vmatprep.subr.mxu0 0.0
      %377 = vmatpush1.xpose.msra.mxu0 0.0
      %378 = vmatprep.subr.mxu0 0.0
      %379 = vmatpush1.xpose.msra.mxu0 0.0
      %380 = vmatprep.subr.mxu0 0.0
      %381 = vmatpush1.xpose.msra.mxu0 0.0
      %382 = vmatprep.subr.mxu0 0.0
      %383 = vmatpush1.xpose.msra.mxu0 0.0
      %384 = vmatprep.subr.mxu0 0.0
      %385 = vmatpush1.xpose.msra.mxu0 0.0
      %386 = vmatprep.subr.mxu0 0.0
      %387 = vmatpush1.xpose.msra.mxu0 0.0
      %388 = vmatprep.subr.mxu0 0.0
      %389 = vmatpush1.xpose.msra.mxu0 0.0
      %390 = vmatprep.subr.mxu0 0.0
      %391 = vmatpush1.xpose.msra.mxu0 0.0
      %392 = vmatprep.subr.mxu0 0.0
      %393 = vmatpush1.xpose.msra.mxu0 0.0
      %394 = vmatprep.subr.mxu0 0.0
      %395 = vmatpush1.xpose.msra.mxu0 0.0
      %396 = vmatprep.subr.mxu0 0.0
      %397 = vmatpush1.xpose.msra.mxu0 0.0
      %398 = vmatprep.subr.mxu0 0.0
      %399 = vmatpush1.xpose.msra.mxu0 0.0
      %400 = vmatprep.subr.mxu0 0.0
      %401 = vmatpush1.xpose.msra.mxu0 0.0
      %402 = vmatprep.subr.mxu0 0.0
      %403 = vmatpush1.xpose.msra.mxu0 0.0
      %404 = vmatprep.subr.mxu0 0.0
      %405 = vmatpush1.xpose.msra.mxu0 0.0
      %406 = vmatprep.subr.mxu0 0.0
      %407 = vmatpush1.xpose.msra.mxu0 0.0
      %408 = vmatprep.subr.mxu0 0.0
      %409 = vmatpush1.xpose.msra.mxu0 0.0
      %410 = vmatprep.subr.mxu0 0.0
      %411 = vmatpush1.xpose.msra.mxu0 0.0
      %412 = vmatprep.subr.mxu0 0.0
      %413 = vmatpush1.xpose.msra.mxu0 0.0
      %414 = vmatprep.subr.mxu0 0.0
      %415 = vmatpush1.xpose.msra.mxu0 0.0
      %416 = vmatprep.subr.mxu0 0.0
      %417 = vmatpush1.xpose.msra.mxu0 0.0
      %418 = vmatprep.subr.mxu0 0.0
      %419 = vmatpush1.xpose.msra.mxu0 0.0
      %420 = vmatprep.subr.mxu0 0.0
      %421 = vmatpush1.xpose.msra.mxu0 0.0
      %422 = vmatprep.mubr.f32.mxu0 0.0
      %423 = vmatmul.mubr.f32.gmra.mrb[0].mxu0 %v353
      %v424 = vpop.f32.mrb[0].mxu0
      %v425 = vadd.f32 %v273, %v424
      %v426 = vpop.f32.mrb[0].mxu0
      %427 = vdwg.mxu0
      %v429 = vsel %vm275, %v258, 0
      %v432 = vsel %vm275, %v262, 0
      %434 = vmatprep.subr.mxu0 0.0
      %435 = vmatpush1.xpose.msra.mxu0 %v432
      %436 = vmatprep.subr.mxu0 0.0
      %437 = vmatpush1.xpose.msra.mxu0 0.0
      %438 = vmatprep.subr.mxu0 0.0
      %439 = vmatpush1.xpose.msra.mxu0 0.0
      %440 = vmatprep.subr.mxu0 0.0
      %441 = vmatpush1.xpose.msra.mxu0 0.0
      %442 = vmatprep.subr.mxu0 0.0
      %443 = vmatpush1.xpose.msra.mxu0 0.0
      %444 = vmatprep.subr.mxu0 0.0
      %445 = vmatpush1.xpose.msra.mxu0 0.0
      %446 = vmatprep.subr.mxu0 0.0
      %447 = vmatpush1.xpose.msra.mxu0 0.0
      %448 = vmatprep.subr.mxu0 0.0
      %449 = vmatpush1.xpose.msra.mxu0 0.0
      %450 = vmatprep.subr.mxu0 0.0
      %451 = vmatpush1.xpose.msra.mxu0 0.0
      %452 = vmatprep.subr.mxu0 0.0
      %453 = vmatpush1.xpose.msra.mxu0 0.0
      %454 = vmatprep.subr.mxu0 0.0
      %455 = vmatpush1.xpose.msra.mxu0 0.0
      %456 = vmatprep.subr.mxu0 0.0
      %457 = vmatpush1.xpose.msra.mxu0 0.0
      %458 = vmatprep.subr.mxu0 0.0
      %459 = vmatpush1.xpose.msra.mxu0 0.0
      %460 = vmatprep.subr.mxu0 0.0
      %461 = vmatpush1.xpose.msra.mxu0 0.0
      %462 = vmatprep.subr.mxu0 0.0
      %463 = vmatpush1.xpose.msra.mxu0 0.0
      %464 = vmatprep.subr.mxu0 0.0
      %465 = vmatpush1.xpose.msra.mxu0 0.0
      %466 = vmatprep.subr.mxu0 0.0
      %467 = vmatpush1.xpose.msra.mxu0 0.0
      %468 = vmatprep.subr.mxu0 0.0
      %469 = vmatpush1.xpose.msra.mxu0 0.0
      %470 = vmatprep.subr.mxu0 0.0
      %471 = vmatpush1.xpose.msra.mxu0 0.0
      %472 = vmatprep.subr.mxu0 0.0
      %473 = vmatpush1.xpose.msra.mxu0 0.0
      %474 = vmatprep.subr.mxu0 0.0
      %475 = vmatpush1.xpose.msra.mxu0 0.0
      %476 = vmatprep.subr.mxu0 0.0
      %477 = vmatpush1.xpose.msra.mxu0 0.0
      %478 = vmatprep.subr.mxu0 0.0
      %479 = vmatpush1.xpose.msra.mxu0 0.0
      %480 = vmatprep.subr.mxu0 0.0
      %481 = vmatpush1.xpose.msra.mxu0 0.0
      %482 = vmatprep.subr.mxu0 0.0
      %483 = vmatpush1.xpose.msra.mxu0 0.0
      %484 = vmatprep.subr.mxu0 0.0
      %485 = vmatpush1.xpose.msra.mxu0 0.0
      %486 = vmatprep.subr.mxu0 0.0
      %487 = vmatpush1.xpose.msra.mxu0 0.0
      %488 = vmatprep.subr.mxu0 0.0
      %489 = vmatpush1.xpose.msra.mxu0 0.0
      %490 = vmatprep.subr.mxu0 0.0
      %491 = vmatpush1.xpose.msra.mxu0 0.0
      %492 = vmatprep.subr.mxu0 0.0
      %493 = vmatpush1.xpose.msra.mxu0 0.0
      %494 = vmatprep.subr.mxu0 0.0
      %495 = vmatpush1.xpose.msra.mxu0 0.0
      %496 = vmatprep.subr.mxu0 0.0
      %497 = vmatpush1.xpose.msra.mxu0 0.0
      %498 = vmatprep.mubr.f32.mxu0 0.0
      %499 = vmatmul.mubr.f32.gmra.mrb[0].mxu0 %v429
      %v500 = vpop.f32.mrb[0].mxu0
      %v501 = vadd.f32 %v273, %v500
      %v502 = vpop.f32.mrb[0].mxu0
      %503 = vdwg.mxu0
      %v505 = vsel %vm275, %v259, 0
      %v508 = vsel %vm275, %v263, 0
      %510 = vmatprep.subr.mxu0 0.0
      %511 = vmatpush1.xpose.msra.mxu0 %v508
      %512 = vmatprep.subr.mxu0 0.0
      %513 = vmatpush1.xpose.msra.mxu0 0.0
      %514 = vmatprep.subr.mxu0 0.0
      %515 = vmatpush1.xpose.msra.mxu0 0.0
      %516 = vmatprep.subr.mxu0 0.0
      %517 = vmatpush1.xpose.msra.mxu0 0.0
      %518 = vmatprep.subr.mxu0 0.0
      %519 = vmatpush1.xpose.msra.mxu0 0.0
      %520 = vmatprep.subr.mxu0 0.0
      %521 = vmatpush1.xpose.msra.mxu0 0.0
      %522 = vmatprep.subr.mxu0 0.0
      %523 = vmatpush1.xpose.msra.mxu0 0.0
      %524 = vmatprep.subr.mxu0 0.0
      %525 = vmatpush1.xpose.msra.mxu0 0.0
      %526 = vmatprep.subr.mxu0 0.0
      %527 = vmatpush1.xpose.msra.mxu0 0.0
      %528 = vmatprep.subr.mxu0 0.0
      %529 = vmatpush1.xpose.msra.mxu0 0.0
      %530 = vmatprep.subr.mxu0 0.0
      %531 = vmatpush1.xpose.msra.mxu0 0.0
      %532 = vmatprep.subr.mxu0 0.0
      %533 = vmatpush1.xpose.msra.mxu0 0.0
      %534 = vmatprep.subr.mxu0 0.0
      %535 = vmatpush1.xpose.msra.mxu0 0.0
      %536 = vmatprep.subr.mxu0 0.0
      %537 = vmatpush1.xpose.msra.mxu0 0.0
      %538 = vmatprep.subr.mxu0 0.0
      %539 = vmatpush1.xpose.msra.mxu0 0.0
      %540 = vmatprep.subr.mxu0 0.0
      %541 = vmatpush1.xpose.msra.mxu0 0.0
      %542 = vmatprep.subr.mxu0 0.0
      %543 = vmatpush1.xpose.msra.mxu0 0.0
      %544 = vmatprep.subr.mxu0 0.0
      %545 = vmatpush1.xpose.msra.mxu0 0.0
      %546 = vmatprep.subr.mxu0 0.0
      %547 = vmatpush1.xpose.msra.mxu0 0.0
      %548 = vmatprep.subr.mxu0 0.0
      %549 = vmatpush1.xpose.msra.mxu0 0.0
      %550 = vmatprep.subr.mxu0 0.0
      %551 = vmatpush1.xpose.msra.mxu0 0.0
      %552 = vmatprep.subr.mxu0 0.0
      %553 = vmatpush1.xpose.msra.mxu0 0.0
      %554 = vmatprep.subr.mxu0 0.0
      %555 = vmatpush1.xpose.msra.mxu0 0.0
      %556 = vmatprep.subr.mxu0 0.0
      %557 = vmatpush1.xpose.msra.mxu0 0.0
      %558 = vmatprep.subr.mxu0 0.0
      %559 = vmatpush1.xpose.msra.mxu0 0.0
      %560 = vmatprep.subr.mxu0 0.0
      %561 = vmatpush1.xpose.msra.mxu0 0.0
      %562 = vmatprep.subr.mxu0 0.0
      %563 = vmatpush1.xpose.msra.mxu0 0.0
      %564 = vmatprep.subr.mxu0 0.0
      %565 = vmatpush1.xpose.msra.mxu0 0.0
      %566 = vmatprep.subr.mxu0 0.0
      %567 = vmatpush1.xpose.msra.mxu0 0.0
      %568 = vmatprep.subr.mxu0 0.0
      %569 = vmatpush1.xpose.msra.mxu0 0.0
      %570 = vmatprep.subr.mxu0 0.0
      %571 = vmatpush1.xpose.msra.mxu0 0.0
      %572 = vmatprep.subr.mxu0 0.0
      %573 = vmatpush1.xpose.msra.mxu0 0.0
      %574 = vmatprep.mubr.f32.mxu0 0.0
      %575 = vmatmul.mubr.f32.gmra.mrb[0].mxu0 %v505
      %v576 = vpop.f32.mrb[0].mxu0
      %v577 = vadd.f32 %v273, %v576
      %v578 = vpop.f32.mrb[0].mxu0
      %579 = vdwg.mxu0
      %v580 = vsel %vm275, %v349, -inf
      %581 = vmax.xlane.f32.xlu0 %v580
      %v582 = vpop.xlane.xlu0 %581
      %v583 = vsel %vm275, %v425, -inf
      %584 = vmax.xlane.f32.xlu0 %v583
      %v585 = vpop.xlane.xlu0 %584
      %v586 = vsel %vm275, %v501, -inf
      %587 = vmax.xlane.f32.xlu0 %v586
      %v588 = vpop.xlane.xlu0 %587
      %v589 = vsel %vm275, %v577, -inf
      %590 = vmax.xlane.f32.xlu0 %v589
      %v591 = vpop.xlane.xlu0 %590
      %v592 = vsub.f32 %v349, %v582
      %v593 = vsub.f32 %v425, %v585
      %v594 = vsub.f32 %v501, %v588
      %v595 = vsub.f32 %v577, %v591
      %v596 = vmul.f32 %v592, 1.442695
      %v597 = vpow.pop %v596
      %v598 = vmul.f32 %v593, 1.442695
      %v599 = vpow.pop %v598
      %v600 = vmul.f32 %v594, 1.442695
      %v601 = vpow.pop %v600
      %v602 = vmul.f32 %v595, 1.442695
      %v603 = vpow.pop %v602
      %v604 = vsel %vm275, %v597, 0.0
      %605 = vadd.xlane.f32.xlu0 %v604
      %v606 = vpop.xlane.xlu0 %605
      %v607 = vsel %vm275, %v599, 0.0
      %608 = vadd.xlane.f32.xlu0 %v607
      %v609 = vpop.xlane.xlu0 %608
      %v610 = vsel %vm275, %v601, 0.0
      %611 = vadd.xlane.f32.xlu0 %v610
      %v612 = vpop.xlane.xlu0 %611
      %v613 = vsel %vm275, %v603, 0.0
      %614 = vadd.xlane.f32.xlu0 %v613
      %v615 = vpop.xlane.xlu0 %614
      %v616 = vrcp.pop %v606
      %v617 = vrcp.pop %v609
      %v618 = vrcp.pop %v612
      %v619 = vrcp.pop %v615
      %v620 = vmul.f32 %v597, %v616
      %v621 = vmul.f32 %v599, %v617
      %v622 = vmul.f32 %v601, %v618
      %v623 = vmul.f32 %v603, %v619
      %v625 = vsel %vm275, %v620, 0
      %627 = vmatprep.subr.mxu0 0.0
      %628 = vmatpush1.msra.mxu0 %v264
      %629 = vmatprep.subr.mxu0 0.0
      %630 = vmatpush1.msra.mxu0 0.0
      %631 = vmatprep.subr.mxu0 0.0
      %632 = vmatpush1.msra.mxu0 0.0
      %633 = vmatprep.subr.mxu0 0.0
      %634 = vmatpush1.msra.mxu0 0.0
      %635 = vmatprep.subr.mxu0 0.0
      %636 = vmatpush1.msra.mxu0 0.0
      %637 = vmatprep.subr.mxu0 0.0
      %638 = vmatpush1.msra.mxu0 0.0
      %639 = vmatprep.subr.mxu0 0.0
      %640 = vmatpush1.msra.mxu0 0.0
      %641 = vmatprep.subr.mxu0 0.0
      %642 = vmatpush1.msra.mxu0 0.0
      %643 = vmatprep.subr.mxu0 0.0
      %644 = vmatpush1.msra.mxu0 0.0
      %645 = vmatprep.subr.mxu0 0.0
      %646 = vmatpush1.msra.mxu0 0.0
      %647 = vmatprep.subr.mxu0 0.0
      %648 = vmatpush1.msra.mxu0 0.0
      %649 = vmatprep.subr.mxu0 0.0
      %650 = vmatpush1.msra.mxu0 0.0
      %651 = vmatprep.subr.mxu0 0.0
      %652 = vmatpush1.msra.mxu0 0.0
      %653 = vmatprep.subr.mxu0 0.0
      %654 = vmatpush1.msra.mxu0 0.0
      %655 = vmatprep.subr.mxu0 0.0
      %656 = vmatpush1.msra.mxu0 0.0
      %657 = vmatprep.subr.mxu0 0.0
      %658 = vmatpush1.msra.mxu0 0.0
      %659 = vmatprep.subr.mxu0 0.0
      %660 = vmatpush1.msra.mxu0 0.0
      %661 = vmatprep.subr.mxu0 0.0
      %662 = vmatpush1.msra.mxu0 0.0
      %663 = vmatprep.subr.mxu0 0.0
      %664 = vmatpush1.msra.mxu0 0.0
      %665 = vmatprep.subr.mxu0 0.0
      %666 = vmatpush1.msra.mxu0 0.0
      %667 = vmatprep.subr.mxu0 0.0
      %668 = vmatpush1.msra.mxu0 0.0
      %669 = vmatprep.subr.mxu0 0.0
      %670 = vmatpush1.msra.mxu0 0.0
      %671 = vmatprep.subr.mxu0 0.0
      %672 = vmatpush1.msra.mxu0 0.0
      %673 = vmatprep.subr.mxu0 0.0
      %674 = vmatpush1.msra.mxu0 0.0
      %675 = vmatprep.subr.mxu0 0.0
      %676 = vmatpush1.msra.mxu0 0.0
      %677 = vmatprep.subr.mxu0 0.0
      %678 = vmatpush1.msra.mxu0 0.0
      %679 = vmatprep.subr.mxu0 0.0
      %680 = vmatpush1.msra.mxu0 0.0
      %681 = vmatprep.subr.mxu0 0.0
      %682 = vmatpush1.msra.mxu0 0.0
      %683 = vmatprep.subr.mxu0 0.0
      %684 = vmatpush1.msra.mxu0 0.0
      %685 = vmatprep.subr.mxu0 0.0
      %686 = vmatpush1.msra.mxu0 0.0
      %687 = vmatprep.subr.mxu0 0.0
      %688 = vmatpush1.msra.mxu0 0.0
      %689 = vmatprep.subr.mxu0 0.0
      %690 = vmatpush1.msra.mxu0 0.0
      %691 = vmatprep.mubr.f32.mxu0 0.0
      %692 = vmatmul.mubr.f32.gmra.mrb[0].mxu0 %v625
      %v693 = vpop.f32.mrb[0].mxu0
      %v694 = vadd.f32 0.0, %v693
      %v695 = vpop.f32.mrb[0].mxu0
      %696 = vdwg.mxu0
      %v698 = vsel %vm275, %v621, 0
      %700 = vmatprep.subr.mxu0 0.0
      %701 = vmatpush1.msra.mxu0 %v265
      %702 = vmatprep.subr.mxu0 0.0
      %703 = vmatpush1.msra.mxu0 0.0
      %704 = vmatprep.subr.mxu0 0.0
      %705 = vmatpush1.msra.mxu0 0.0
      %706 = vmatprep.subr.mxu0 0.0
      %707 = vmatpush1.msra.mxu0 0.0
      %708 = vmatprep.subr.mxu0 0.0
      %709 = vmatpush1.msra.mxu0 0.0
      %710 = vmatprep.subr.mxu0 0.0
      %711 = vmatpush1.msra.mxu0 0.0
      %712 = vmatprep.subr.mxu0 0.0
      %713 = vmatpush1.msra.mxu0 0.0
      %714 = vmatprep.subr.mxu0 0.0
      %715 = vmatpush1.msra.mxu0 0.0
      %716 = vmatprep.subr.mxu0 0.0
      %717 = vmatpush1.msra.mxu0 0.0
      %718 = vmatprep.subr.mxu0 0.0
      %719 = vmatpush1.msra.mxu0 0.0
      %720 = vmatprep.subr.mxu0 0.0
      %721 = vmatpush1.msra.mxu0 0.0
      %722 = vmatprep.subr.mxu0 0.0
      %723 = vmatpush1.msra.mxu0 0.0
      %724 = vmatprep.subr.mxu0 0.0
      %725 = vmatpush1.msra.mxu0 0.0
      %726 = vmatprep.subr.mxu0 0.0
      %727 = vmatpush1.msra.mxu0 0.0
      %728 = vmatprep.subr.mxu0 0.0
      %729 = vmatpush1.msra.mxu0 0.0
      %730 = vmatprep.subr.mxu0 0.0
      %731 = vmatpush1.msra.mxu0 0.0
      %732 = vmatprep.subr.mxu0 0.0
      %733 = vmatpush1.msra.mxu0 0.0
      %734 = vmatprep.subr.mxu0 0.0
      %735 = vmatpush1.msra.mxu0 0.0
      %736 = vmatprep.subr.mxu0 0.0
      %737 = vmatpush1.msra.mxu0 0.0
      %738 = vmatprep.subr.mxu0 0.0
      %739 = vmatpush1.msra.mxu0 0.0
      %740 = vmatprep.subr.mxu0 0.0
      %741 = vmatpush1.msra.mxu0 0.0
      %742 = vmatprep.subr.mxu0 0.0
      %743 = vmatpush1.msra.mxu0 0.0
      %744 = vmatprep.subr.mxu0 0.0
      %745 = vmatpush1.msra.mxu0 0.0
      %746 = vmatprep.subr.mxu0 0.0
      %747 = vmatpush1.msra.mxu0 0.0
      %748 = vmatprep.subr.mxu0 0.0
      %749 = vmatpush1.msra.mxu0 0.0
      %750 = vmatprep.subr.mxu0 0.0
      %751 = vmatpush1.msra.mxu0 0.0
      %752 = vmatprep.subr.mxu0 0.0
      %753 = vmatpush1.msra.mxu0 0.0
      %754 = vmatprep.subr.mxu0 0.0
      %755 = vmatpush1.msra.mxu0 0.0
      %756 = vmatprep.subr.mxu0 0.0
      %757 = vmatpush1.msra.mxu0 0.0
      %758 = vmatprep.subr.mxu0 0.0
      %759 = vmatpush1.msra.mxu0 0.0
      %760 = vmatprep.subr.mxu0 0.0
      %761 = vmatpush1.msra.mxu0 0.0
      %762 = vmatprep.subr.mxu0 0.0
      %763 = vmatpush1.msra.mxu0 0.0
      %764 = vmatprep.mubr.f32.mxu0 0.0
      %765 = vmatmul.mubr.f32.gmra.mrb[0].mxu0 %v698
      %v766 = vpop.f32.mrb[0].mxu0
      %v767 = vadd.f32 0.0, %v766
      %v768 = vpop.f32.mrb[0].mxu0
      %769 = vdwg.mxu0
      %v771 = vsel %vm275, %v622, 0
      %773 = vmatprep.subr.mxu0 0.0
      %774 = vmatpush1.msra.mxu0 %v266
      %775 = vmatprep.subr.mxu0 0.0
      %776 = vmatpush1.msra.mxu0 0.0
      %777 = vmatprep.subr.mxu0 0.0
      %778 = vmatpush1.msra.mxu0 0.0
      %779 = vmatprep.subr.mxu0 0.0
      %780 = vmatpush1.msra.mxu0 0.0
      %781 = vmatprep.subr.mxu0 0.0
      %782 = vmatpush1.msra.mxu0 0.0
      %783 = vmatprep.subr.mxu0 0.0
      %784 = vmatpush1.msra.mxu0 0.0
      %785 = vmatprep.subr.mxu0 0.0
      %786 = vmatpush1.msra.mxu0 0.0
      %787 = vmatprep.subr.mxu0 0.0
      %788 = vmatpush1.msra.mxu0 0.0
      %789 = vmatprep.subr.mxu0 0.0
      %790 = vmatpush1.msra.mxu0 0.0
      %791 = vmatprep.subr.mxu0 0.0
      %792 = vmatpush1.msra.mxu0 0.0
      %793 = vmatprep.subr.mxu0 0.0
      %794 = vmatpush1.msra.mxu0 0.0
      %795 = vmatprep.subr.mxu0 0.0
      %796 = vmatpush1.msra.mxu0 0.0
      %797 = vmatprep.subr.mxu0 0.0
      %798 = vmatpush1.msra.mxu0 0.0
      %799 = vmatprep.subr.mxu0 0.0
      %800 = vmatpush1.msra.mxu0 0.0
      %801 = vmatprep.subr.mxu0 0.0
      %802 = vmatpush1.msra.mxu0 0.0
      %803 = vmatprep.subr.mxu0 0.0
      %804 = vmatpush1.msra.mxu0 0.0
      %805 = vmatprep.subr.mxu0 0.0
      %806 = vmatpush1.msra.mxu0 0.0
      %807 = vmatprep.subr.mxu0 0.0
      %808 = vmatpush1.msra.mxu0 0.0
      %809 = vmatprep.subr.mxu0 0.0
      %810 = vmatpush1.msra.mxu0 0.0
      %811 = vmatprep.subr.mxu0 0.0
      %812 = vmatpush1.msra.mxu0 0.0
      %813 = vmatprep.subr.mxu0 0.0
      %814 = vmatpush1.msra.mxu0 0.0
      %815 = vmatprep.subr.mxu0 0.0
      %816 = vmatpush1.msra.mxu0 0.0
      %817 = vmatprep.subr.mxu0 0.0
      %818 = vmatpush1.msra.mxu0 0.0
      %819 = vmatprep.subr.mxu0 0.0
      %820 = vmatpush1.msra.mxu0 0.0
      %821 = vmatprep.subr.mxu0 0.0
      %822 = vmatpush1.msra.mxu0 0.0
      %823 = vmatprep.subr.mxu0 0.0
      %824 = vmatpush1.msra.mxu0 0.0
      %825 = vmatprep.subr.mxu0 0.0
      %826 = vmatpush1.msra.mxu0 0.0
      %827 = vmatprep.subr.mxu0 0.0
      %828 = vmatpush1.msra.mxu0 0.0
      %829 = vmatprep.subr.mxu0 0.0
      %830 = vmatpush1.msra.mxu0 0.0
      %831 = vmatprep.subr.mxu0 0.0
      %832 = vmatpush1.msra.mxu0 0.0
      %833 = vmatprep.subr.mxu0 0.0
      %834 = vmatpush1.msra.mxu0 0.0
      %835 = vmatprep.subr.mxu0 0.0
      %836 = vmatpush1.msra.mxu0 0.0
      %837 = vmatprep.mubr.f32.mxu0 0.0
      %838 = vmatmul.mubr.f32.gmra.mrb[0].mxu0 %v771
      %v839 = vpop.f32.mrb[0].mxu0
      %v840 = vadd.f32 0.0, %v839
      %v841 = vpop.f32.mrb[0].mxu0
      %842 = vdwg.mxu0
      %v844 = vsel %vm275, %v623, 0
      %846 = vmatprep.subr.mxu0 0.0
      %847 = vmatpush1.msra.mxu0 %v267
      %848 = vmatprep.subr.mxu0 0.0
      %849 = vmatpush1.msra.mxu0 0.0
      %850 = vmatprep.subr.mxu0 0.0
      %851 = vmatpush1.msra.mxu0 0.0
      %852 = vmatprep.subr.mxu0 0.0
      %853 = vmatpush1.msra.mxu0 0.0
      %854 = vmatprep.subr.mxu0 0.0
      %855 = vmatpush1.msra.mxu0 0.0
      %856 = vmatprep.subr.mxu0 0.0
      %857 = vmatpush1.msra.mxu0 0.0
      %858 = vmatprep.subr.mxu0 0.0
      %859 = vmatpush1.msra.mxu0 0.0
      %860 = vmatprep.subr.mxu0 0.0
      %861 = vmatpush1.msra.mxu0 0.0
      %862 = vmatprep.subr.mxu0 0.0
      %863 = vmatpush1.msra.mxu0 0.0
      %864 = vmatprep.subr.mxu0 0.0
      %865 = vmatpush1.msra.mxu0 0.0
      %866 = vmatprep.subr.mxu0 0.0
      %867 = vmatpush1.msra.mxu0 0.0
      %868 = vmatprep.subr.mxu0 0.0
      %869 = vmatpush1.msra.mxu0 0.0
      %870 = vmatprep.subr.mxu0 0.0
      %871 = vmatpush1.msra.mxu0 0.0
      %872 = vmatprep.subr.mxu0 0.0
      %873 = vmatpush1.msra.mxu0 0.0
      %874 = vmatprep.subr.mxu0 0.0
      %875 = vmatpush1.msra.mxu0 0.0
      %876 = vmatprep.subr.mxu0 0.0
      %877 = vmatpush1.msra.mxu0 0.0
      %878 = vmatprep.subr.mxu0 0.0
      %879 = vmatpush1.msra.mxu0 0.0
      %880 = vmatprep.subr.mxu0 0.0
      %881 = vmatpush1.msra.mxu0 0.0
      %882 = vmatprep.subr.mxu0 0.0
      %883 = vmatpush1.msra.mxu0 0.0
      %884 = vmatprep.subr.mxu0 0.0
      %885 = vmatpush1.msra.mxu0 0.0
      %886 = vmatprep.subr.mxu0 0.0
      %887 = vmatpush1.msra.mxu0 0.0
      %888 = vmatprep.subr.mxu0 0.0
      %889 = vmatpush1.msra.mxu0 0.0
      %890 = vmatprep.subr.mxu0 0.0
      %891 = vmatpush1.msra.mxu0 0.0
      %892 = vmatprep.subr.mxu0 0.0
      %893 = vmatpush1.msra.mxu0 0.0
      %894 = vmatprep.subr.mxu0 0.0
      %895 = vmatpush1.msra.mxu0 0.0
      %896 = vmatprep.subr.mxu0 0.0
      %897 = vmatpush1.msra.mxu0 0.0
      %898 = vmatprep.subr.mxu0 0.0
      %899 = vmatpush1.msra.mxu0 0.0
      %900 = vmatprep.subr.mxu0 0.0
      %901 = vmatpush1.msra.mxu0 0.0
      %902 = vmatprep.subr.mxu0 0.0
      %903 = vmatpush1.msra.mxu0 0.0
      %904 = vmatprep.subr.mxu0 0.0
      %905 = vmatpush1.msra.mxu0 0.0
      %906 = vmatprep.subr.mxu0 0.0
      %907 = vmatpush1.msra.mxu0 0.0
      %908 = vmatprep.subr.mxu0 0.0
      %909 = vmatpush1.msra.mxu0 0.0
      %910 = vmatprep.mubr.f32.mxu0 0.0
      %911 = vmatmul.mubr.f32.gmra.mrb[0].mxu0 %v844
      %v912 = vpop.f32.mrb[0].mxu0
      %v913 = vadd.f32 0.0, %v912
      %v914 = vpop.f32.mrb[0].mxu0
      %915 = vdwg.mxu0
      %916 = vst.msk [vmem:[%s251] sm:$0xff] %vm275, %v694
      %917 = vst.msk [vmem:[%s251 + $0x8] sm:$0xff] %vm275, %v767
      %918 = vst.msk [vmem:[%s251 + $0x10] sm:$0xff] %vm275, %v840
      %919 = vst.msk [vmem:[%s251 + $0x18] sm:$0xff] %vm275, %v913
      %p920 = scmp.lt.s32.totalorder %s15, 1
      %s921 = scalar_select %p920, %s15, 1
      %s922 = smul.addr %s921, 4
      %s923 = smul.addr %s922, 8
      %s924 = scalar_lea.vmem %s4, %s923
      // Predicated region
      $region37: #{singleblock_apply.38} parent=35 // pred_check
        %p925 = pneg %p137
      $region38: #{singleblock_apply.38} parent=35 // pred_check_branch
        %927 = sbr.rel (%p925) target = $region40
      $region39: #{singleblock_apply.38} parent=35 // pred_region
        _
      $region40: #{singleblock_apply.38} parent=35 // pred_fallthru
        _
    $region36: #{singleblock_apply.38} parent=5 // pred_fallthru
      _
    %p928 = scmp.le.s32.totalorder 2, %s10
    // Predicated region
    $region41: #{singleblock_apply.38} parent=5 // pred_check
      %p929 = pneg %p928
    $region42: #{singleblock_apply.38} parent=5 // pred_check_branch
      %931 = sbr.rel (%p929) target = $region44
    $region43: #{singleblock_apply.38} parent=5 // pred_region
      %s932 = ssub.s32 %s10, 2
      // Predicated region
      $region45: #{singleblock_apply.38} parent=43 // pred_check
        %p933 = pneg %p143
      $region46: #{singleblock_apply.38} parent=43 // pred_check_branch
        %935 = sbr.rel (%p933) target = $region48
      $region47: #{singleblock_apply.38} parent=43 // pred_region
        %p936 = scmp.lt.s32.totalorder %s16, 1
        %s937 = scalar_select %p936, %s16, 1
        %s938 = smul.addr %s937, 4
        %s939 = smul.addr %s938, 8
        %s940 = scalar_lea.vmem %s4, %s939
      $region48: #{singleblock_apply.38} parent=43 // pred_fallthru
        _
    $region44: #{singleblock_apply.38} parent=5 // pred_fallthru
      _
  $region6: #{singleblock_apply.38} parent=0 // loop_footer
    %s14 = sadd.s32 1, %s10
  $region7: #{singleblock_apply.38} parent=0 // loop_footer_branch
    %9 = sbr.rel target = $region3
  $region8: #{singleblock_apply.38} parent=0 // loop_exit
    _

// kernel: singleblock_apply.44
$region0: #{singleblock_apply.44}
  #allocation0 [shape = 'u32[]', space=smem, size = 0x4, offset = 0x4, fixed_abs, tag = 'smem constant byte address 0x4 - core index']
  #allocation1 [shape = 'u32[144,128]{1,0:T(1,128)}', space=vmem, size = 0x12000, scoped, tag = 'internal scratch']
  %s0 = inlined_call_operand.vmem [shape: f32[2,32], index: 0, kind: input, shape index: {}]
  %s1 = inlined_call_operand.vmem [shape: f32[32,32], index: 1, kind: input, shape index: {}]
  %s2 = inlined_call_operand.vmem [shape: f32[1,32], index: 2, kind: input, shape index: {}]
  %s3 = inlined_call_operand.vmem [shape: f32[2,32], index: 3, kind: output, shape index: {}]
  %s4 = sld [smem:[#allocation0]]
  $region22: #{singleblock_apply.44} parent=0
    _
  %s6 = ssub.s32 1, %s4
  %s7 = scalar_select 0, %s6, %s4
  // Predicated region
  $region2: #{singleblock_apply.44} parent=0 // pred_check
    _
  $region3: #{singleblock_apply.44} parent=0 // pred_check_branch
    %9 = sbr.rel (0) target = $region5
  $region4: #{singleblock_apply.44} parent=0 // pred_region
    _
  $region5: #{singleblock_apply.44} parent=0 // pred_fallthru
    _
  // Predicated region
  $region6: #{singleblock_apply.44} parent=0 // pred_check
    _
  $region7: #{singleblock_apply.44} parent=0 // pred_check_branch
    %11 = sbr.rel (0) target = $region9
  $region8: #{singleblock_apply.44} parent=0 // pred_region
    _
  $region9: #{singleblock_apply.44} parent=0 // pred_fallthru
    _
  // Predicated region
  $region10: #{singleblock_apply.44} parent=0 // pred_check
    _
  $region11: #{singleblock_apply.44} parent=0 // pred_check_branch
    %13 = sbr.rel (0) target = $region13
  $region12: #{singleblock_apply.44} parent=0 // pred_region
    _
  $region13: #{singleblock_apply.44} parent=0 // pred_fallthru
    _
  %v14 = vld [vmem:[%s0] sm:$0x3]
  %v15 = vld [vmem:[%s1] sm:$0xff]
  %v16 = vld [vmem:[%s1 + $0x8] sm:$0xff]
  %v17 = vld [vmem:[%s1 + $0x10] sm:$0xff]
  %v18 = vld [vmem:[%s1 + $0x18] sm:$0xff]
  %v19 = vld [vmem:[%s2] sm:$0x1]
  %v21 = vlaneseq
  %v22 = vshrl.u32 %v21, 7
  %v23 = vsub.s32 0, %v22
  %v24 = vrot.slane %v19, %v23
  %vm26 = vcmask 261120
  %v28 = vsel %vm26, %v14, 0
  %30 = vmatprep.subr.mxu0 0.0
  %31 = vmatpush1.msra.mxu0 %v15
  %32 = vmatprep.subr.mxu0 0.0
  %33 = vmatpush1.msra.mxu0 %v16
  %34 = vmatprep.subr.mxu0 0.0
  %35 = vmatpush1.msra.mxu0 %v17
  %36 = vmatprep.subr.mxu0 0.0
  %37 = vmatpush1.msra.mxu0 %v18
  %38 = vmatprep.subr.mxu0 0.0
  %39 = vmatpush1.msra.mxu0 0.0
  %40 = vmatprep.subr.mxu0 0.0
  %41 = vmatpush1.msra.mxu0 0.0
  %42 = vmatprep.subr.mxu0 0.0
  %43 = vmatpush1.msra.mxu0 0.0
  %44 = vmatprep.subr.mxu0 0.0
  %45 = vmatpush1.msra.mxu0 0.0
  %46 = vmatprep.subr.mxu0 0.0
  %47 = vmatpush1.msra.mxu0 0.0
  %48 = vmatprep.subr.mxu0 0.0
  %49 = vmatpush1.msra.mxu0 0.0
  %50 = vmatprep.subr.mxu0 0.0
  %51 = vmatpush1.msra.mxu0 0.0
  %52 = vmatprep.subr.mxu0 0.0
  %53 = vmatpush1.msra.mxu0 0.0
  %54 = vmatprep.subr.mxu0 0.0
  %55 = vmatpush1.msra.mxu0 0.0
  %56 = vmatprep.subr.mxu0 0.0
  %57 = vmatpush1.msra.mxu0 0.0
  %58 = vmatprep.subr.mxu0 0.0
  %59 = vmatpush1.msra.mxu0 0.0
  %60 = vmatprep.subr.mxu0 0.0
  %61 = vmatpush1.msra.mxu0 0.0
  %62 = vmatprep.subr.mxu0 0.0
  %63 = vmatpush1.msra.mxu0 0.0
  %64 = vmatprep.subr.mxu0 0.0
  %65 = vmatpush1.msra.mxu0 0.0
  %66 = vmatprep.subr.mxu0 0.0
  %67 = vmatpush1.msra.mxu0 0.0
  %68 = vmatprep.subr.mxu0 0.0
  %69 = vmatpush1.msra.mxu0 0.0
  %70 = vmatprep.subr.mxu0 0.0
  %71 = vmatpush1.msra.mxu0 0.0
  %72 = vmatprep.subr.mxu0 0.0
  %73 = vmatpush1.msra.mxu0 0.0
  %74 = vmatprep.subr.mxu0 0.0
  %75 = vmatpush1.msra.mxu0 0.0
  %76 = vmatprep.subr.mxu0 0.0
  %77 = vmatpush1.msra.mxu0 0.0
  %78 = vmatprep.subr.mxu0 0.0
  %79 = vmatpush1.msra.mxu0 0.0
  %80 = vmatprep.subr.mxu0 0.0
  %81 = vmatpush1.msra.mxu0 0.0
  %82 = vmatprep.subr.mxu0 0.0
  %83 = vmatpush1.msra.mxu0 0.0
  %84 = vmatprep.subr.mxu0 0.0
  %85 = vmatpush1.msra.mxu0 0.0
  %86 = vmatprep.subr.mxu0 0.0
  %87 = vmatpush1.msra.mxu0 0.0
  %88 = vmatprep.subr.mxu0 0.0
  %89 = vmatpush1.msra.mxu0 0.0
  %90 = vmatprep.subr.mxu0 0.0
  %91 = vmatpush1.msra.mxu0 0.0
  %92 = vmatprep.subr.mxu0 0.0
  %93 = vmatpush1.msra.mxu0 0.0
  %94 = vmatprep.mubr.f32.mxu0 0.0
  %95 = vmatmul.mubr.f32.gmra.mrb[0].mxu0 %v28
  %v96 = vpop.f32.mrb[0].mxu0
  %v97 = vadd.f32 %v24, %v96
  %v98 = vpop.f32.mrb[0].mxu0
  %99 = vdwg.mxu0
  %vm100 = vcmask 254976
  %101 = vst.msk [vmem:[%s3] sm:$0x3] %vm100, %v97
  // Predicated region
  $region14: #{singleblock_apply.44} parent=0 // pred_check
    _
  $region15: #{singleblock_apply.44} parent=0 // pred_check_branch
    %103 = sbr.rel (0) target = $region17
  $region16: #{singleblock_apply.44} parent=0 // pred_region
    _
  $region17: #{singleblock_apply.44} parent=0 // pred_fallthru
    _
  // Predicated region
  $region18: #{singleblock_apply.44} parent=0 // pred_check
    _
  $region19: #{singleblock_apply.44} parent=0 // pred_check_branch
    %105 = sbr.rel (0) target = $region21
  $region20: #{singleblock_apply.44} parent=0 // pred_region
    _
  $region21: #{singleblock_apply.44} parent=0 // pred_fallthru
    _

// kernel: singleblock_apply.47
$region0: #{singleblock_apply.47}
  #allocation0 [shape = 'u32[]', space=smem, size = 0x4, offset = 0x4, fixed_abs, tag = 'smem constant byte address 0x4 - core index']
  #allocation1 [shape = 'u32[144,128]{1,0:T(1,128)}', space=vmem, size = 0x12000, scoped, tag = 'internal scratch']
  %s0 = inlined_call_operand.vmem [shape: f32[16,32], index: 0, kind: input, shape index: {}]
  %s1 = inlined_call_operand.vmem [shape: f32[32,96], index: 1, kind: input, shape index: {}]
  %s2 = inlined_call_operand.vmem [shape: f32[1,96], index: 2, kind: input, shape index: {}]
  %s3 = inlined_call_operand.vmem [shape: f32[16,1], index: 3, kind: input, shape index: {}]
  %s4 = inlined_call_operand.vmem [shape: f32[16,96], index: 4, kind: output, shape index: {}]
  %s5 = sld [smem:[#allocation0]]
  $region26: #{singleblock_apply.47} parent=0
    _
  %s7 = ssub.s32 1, %s5
  %s8 = scalar_select 0, %s7, %s5
  // Predicated region
  $region2: #{singleblock_apply.47} parent=0 // pred_check
    _
  $region3: #{singleblock_apply.47} parent=0 // pred_check_branch
    %10 = sbr.rel (0) target = $region5
  $region4: #{singleblock_apply.47} parent=0 // pred_region
    _
  $region5: #{singleblock_apply.47} parent=0 // pred_fallthru
    _
  // Predicated region
  $region6: #{singleblock_apply.47} parent=0 // pred_check
    _
  $region7: #{singleblock_apply.47} parent=0 // pred_check_branch
    %12 = sbr.rel (0) target = $region9
  $region8: #{singleblock_apply.47} parent=0 // pred_region
    _
  $region9: #{singleblock_apply.47} parent=0 // pred_fallthru
    _
  // Predicated region
  $region10: #{singleblock_apply.47} parent=0 // pred_check
    _
  $region11: #{singleblock_apply.47} parent=0 // pred_check_branch
    %14 = sbr.rel (0) target = $region13
  $region12: #{singleblock_apply.47} parent=0 // pred_region
    _
  $region13: #{singleblock_apply.47} parent=0 // pred_fallthru
    _
  // Predicated region
  $region14: #{singleblock_apply.47} parent=0 // pred_check
    _
  $region15: #{singleblock_apply.47} parent=0 // pred_check_branch
    %16 = sbr.rel (0) target = $region17
  $region16: #{singleblock_apply.47} parent=0 // pred_region
    _
  $region17: #{singleblock_apply.47} parent=0 // pred_fallthru
    _
  %v17 = vld [vmem:[%s0] sm:$0xff]
  %v18 = vld [vmem:[%s0 + $0x8] sm:$0xff]
  %v19 = vld [vmem:[%s1] sm:$0xff]
  %v20 = vld [vmem:[%s1 + $0x8] sm:$0xff]
  %v21 = vld [vmem:[%s1 + $0x10] sm:$0xff]
  %v22 = vld [vmem:[%s1 + $0x18] sm:$0xff]
  %v23 = vld [vmem:[%s2] sm:$0x1]
  %v25 = vlaneseq
  %v26 = vshrl.u32 %v25, 7
  %v27 = vsub.s32 0, %v26
  %v28 = vrot.slane %v23, %v27
  %vm30 = vcmask 261120
  %v32 = vsel %vm30, %v17, 0
  %v35 = vsel %vm30, %v18, 0
  %37 = vmatprep.subr.mxu0 0.0
  %38 = vmatpush1.msra.mxu0 %v19
  %39 = vmatprep.subr.mxu0 0.0
  %40 = vmatpush1.msra.mxu0 %v20
  %41 = vmatprep.subr.mxu0 0.0
  %42 = vmatpush1.msra.mxu0 %v21
  %43 = vmatprep.subr.mxu0 0.0
  %44 = vmatpush1.msra.mxu0 %v22
  %45 = vmatprep.subr.mxu0 0.0
  %46 = vmatpush1.msra.mxu0 0.0
  %47 = vmatprep.subr.mxu0 0.0
  %48 = vmatpush1.msra.mxu0 0.0
  %49 = vmatprep.subr.mxu0 0.0
  %50 = vmatpush1.msra.mxu0 0.0
  %51 = vmatprep.subr.mxu0 0.0
  %52 = vmatpush1.msra.mxu0 0.0
  %53 = vmatprep.subr.mxu0 0.0
  %54 = vmatpush1.msra.mxu0 0.0
  %55 = vmatprep.subr.mxu0 0.0
  %56 = vmatpush1.msra.mxu0 0.0
  %57 = vmatprep.subr.mxu0 0.0
  %58 = vmatpush1.msra.mxu0 0.0
  %59 = vmatprep.subr.mxu0 0.0
  %60 = vmatpush1.msra.mxu0 0.0
  %61 = vmatprep.subr.mxu0 0.0
  %62 = vmatpush1.msra.mxu0 0.0
  %63 = vmatprep.subr.mxu0 0.0
  %64 = vmatpush1.msra.mxu0 0.0
  %65 = vmatprep.subr.mxu0 0.0
  %66 = vmatpush1.msra.mxu0 0.0
  %67 = vmatprep.subr.mxu0 0.0
  %68 = vmatpush1.msra.mxu0 0.0
  %69 = vmatprep.subr.mxu0 0.0
  %70 = vmatpush1.msra.mxu0 0.0
  %71 = vmatprep.subr.mxu0 0.0
  %72 = vmatpush1.msra.mxu0 0.0
  %73 = vmatprep.subr.mxu0 0.0
  %74 = vmatpush1.msra.mxu0 0.0
  %75 = vmatprep.subr.mxu0 0.0
  %76 = vmatpush1.msra.mxu0 0.0
  %77 = vmatprep.subr.mxu0 0.0
  %78 = vmatpush1.msra.mxu0 0.0
  %79 = vmatprep.subr.mxu0 0.0
  %80 = vmatpush1.msra.mxu0 0.0
  %81 = vmatprep.subr.mxu0 0.0
  %82 = vmatpush1.msra.mxu0 0.0
  %83 = vmatprep.subr.mxu0 0.0
  %84 = vmatpush1.msra.mxu0 0.0
  %85 = vmatprep.subr.mxu0 0.0
  %86 = vmatpush1.msra.mxu0 0.0
  %87 = vmatprep.subr.mxu0 0.0
  %88 = vmatpush1.msra.mxu0 0.0
  %89 = vmatprep.subr.mxu0 0.0
  %90 = vmatpush1.msra.mxu0 0.0
  %91 = vmatprep.subr.mxu0 0.0
  %92 = vmatpush1.msra.mxu0 0.0
  %93 = vmatprep.subr.mxu0 0.0
  %94 = vmatpush1.msra.mxu0 0.0
  %95 = vmatprep.subr.mxu0 0.0
  %96 = vmatpush1.msra.mxu0 0.0
  %97 = vmatprep.subr.mxu0 0.0
  %98 = vmatpush1.msra.mxu0 0.0
  %99 = vmatprep.subr.mxu0 0.0
  %100 = vmatpush1.msra.mxu0 0.0
  %101 = vmatprep.mubr.f32.mxu0 0.0
  %102 = vmatmul.mubr.f32.gmra.mrb[0].mxu0 %v32
  %v103 = vpop.f32.mrb[0].mxu0
  %v104 = vadd.f32 %v28, %v103
  %v105 = vpop.f32.mrb[0].mxu0
  %106 = vmatprep.mubr.f32.mxu0 0.0
  %107 = vmatmul.mubr.f32.gmra.mrb[0].mxu0 %v35
  %v108 = vpop.f32.mrb[0].mxu0
  %v109 = vadd.f32 %v28, %v108
  %v110 = vpop.f32.mrb[0].mxu0
  %111 = vdwg.mxu0
  %v112 = vld [vmem:[%s3] sm:$0xff]
  %v113 = vld [vmem:[%s3 + $0x8] sm:$0xff]
  %115 = vset.pattern.permute.xlu0 0
  %116 = vperm.xlu0 %115, %v112
  %v117 = vpop.permute.xlu0 %116
  %120 = vset.pattern.permute.xlu0 0
  %121 = vperm.xlu0 %120, %v113
  %v122 = vpop.permute.xlu0 %121
  %v124 = vmul.f32 %v104, %v117
  %v125 = vmul.f32 %v109, %v122
  %vm126 = vcmask 785408
  %127 = vst.msk [vmem:[%s4] sm:$0xff] %vm126, %v124
  %128 = vst.msk [vmem:[%s4 + $0x8] sm:$0xff] %vm126, %v125
  // Predicated region
  $region18: #{singleblock_apply.47} parent=0 // pred_check
    _
  $region19: #{singleblock_apply.47} parent=0 // pred_check_branch
    %130 = sbr.rel (0) target = $region21
  $region20: #{singleblock_apply.47} parent=0 // pred_region
    _
  $region21: #{singleblock_apply.47} parent=0 // pred_fallthru
    _
  // Predicated region
  $region22: #{singleblock_apply.47} parent=0 // pred_check
    _
  $region23: #{singleblock_apply.47} parent=0 // pred_check_branch
    %132 = sbr.rel (0) target = $region25
  $region24: #{singleblock_apply.47} parent=0 // pred_region
    _
  $region25: #{singleblock_apply.47} parent=0 // pred_fallthru
    _

// kernel: singleblock_apply.51
$region0: #{singleblock_apply.51}
  #allocation0 [shape = 'u32[]', space=smem, size = 0x4, offset = 0x4, fixed_abs, tag = 'smem constant byte address 0x4 - core index']
  #allocation1 [shape = 'u32[144,128]{1,0:T(1,128)}', space=vmem, size = 0x12000, scoped, tag = 'internal scratch']
  %s0 = inlined_call_operand.vmem [shape: f32[16,32], index: 0, kind: input, shape index: {}]
  %s1 = inlined_call_operand.vmem [shape: f32[16,32], index: 1, kind: input, shape index: {}]
  %s2 = inlined_call_operand.vmem [shape: f32[32,32], index: 2, kind: input, shape index: {}]
  %s3 = inlined_call_operand.vmem [shape: f32[1,32], index: 3, kind: input, shape index: {}]
  %s4 = inlined_call_operand.vmem [shape: f32[16,32], index: 4, kind: output, shape index: {}]
  %s5 = sld [smem:[#allocation0]]
  $region26: #{singleblock_apply.51} parent=0
    _
  %s7 = ssub.s32 1, %s5
  %s8 = scalar_select 0, %s7, %s5
  // Predicated region
  $region2: #{singleblock_apply.51} parent=0 // pred_check
    _
  $region3: #{singleblock_apply.51} parent=0 // pred_check_branch
    %10 = sbr.rel (0) target = $region5
  $region4: #{singleblock_apply.51} parent=0 // pred_region
    _
  $region5: #{singleblock_apply.51} parent=0 // pred_fallthru
    _
  // Predicated region
  $region6: #{singleblock_apply.51} parent=0 // pred_check
    _
  $region7: #{singleblock_apply.51} parent=0 // pred_check_branch
    %12 = sbr.rel (0) target = $region9
  $region8: #{singleblock_apply.51} parent=0 // pred_region
    _
  $region9: #{singleblock_apply.51} parent=0 // pred_fallthru
    _
  // Predicated region
  $region10: #{singleblock_apply.51} parent=0 // pred_check
    _
  $region11: #{singleblock_apply.51} parent=0 // pred_check_branch
    %14 = sbr.rel (0) target = $region13
  $region12: #{singleblock_apply.51} parent=0 // pred_region
    _
  $region13: #{singleblock_apply.51} parent=0 // pred_fallthru
    _
  // Predicated region
  $region14: #{singleblock_apply.51} parent=0 // pred_check
    _
  $region15: #{singleblock_apply.51} parent=0 // pred_check_branch
    %16 = sbr.rel (0) target = $region17
  $region16: #{singleblock_apply.51} parent=0 // pred_region
    _
  $region17: #{singleblock_apply.51} parent=0 // pred_fallthru
    _
  %v17 = vld [vmem:[%s0] sm:$0xff]
  %v18 = vld [vmem:[%s0 + $0x8] sm:$0xff]
  %v19 = vld [vmem:[%s1] sm:$0xff]
  %v20 = vld [vmem:[%s1 + $0x8] sm:$0xff]
  %v21 = vadd.f32 %v17, %v19
  %v22 = vadd.f32 %v18, %v20
  %v23 = vld [vmem:[%s2] sm:$0xff]
  %v24 = vld [vmem:[%s2 + $0x8] sm:$0xff]
  %v25 = vld [vmem:[%s2 + $0x10] sm:$0xff]
  %v26 = vld [vmem:[%s2 + $0x18] sm:$0xff]
  %v27 = vld [vmem:[%s3] sm:$0x1]
  %v29 = vlaneseq
  %v30 = vshrl.u32 %v29, 7
  %v31 = vsub.s32 0, %v30
  %v32 = vrot.slane %v27, %v31
  %vm34 = vcmask 261120
  %v36 = vsel %vm34, %v21, 0
  %v39 = vsel %vm34, %v22, 0
  %41 = vmatprep.subr.mxu0 0.0
  %42 = vmatpush1.msra.mxu0 %v23
  %43 = vmatprep.subr.mxu0 0.0
  %44 = vmatpush1.msra.mxu0 %v24
  %45 = vmatprep.subr.mxu0 0.0
  %46 = vmatpush1.msra.mxu0 %v25
  %47 = vmatprep.subr.mxu0 0.0
  %48 = vmatpush1.msra.mxu0 %v26
  %49 = vmatprep.subr.mxu0 0.0
  %50 = vmatpush1.msra.mxu0 0.0
  %51 = vmatprep.subr.mxu0 0.0
  %52 = vmatpush1.msra.mxu0 0.0
  %53 = vmatprep.subr.mxu0 0.0
  %54 = vmatpush1.msra.mxu0 0.0
  %55 = vmatprep.subr.mxu0 0.0
  %56 = vmatpush1.msra.mxu0 0.0
  %57 = vmatprep.subr.mxu0 0.0
  %58 = vmatpush1.msra.mxu0 0.0
  %59 = vmatprep.subr.mxu0 0.0
  %60 = vmatpush1.msra.mxu0 0.0
  %61 = vmatprep.subr.mxu0 0.0
  %62 = vmatpush1.msra.mxu0 0.0
  %63 = vmatprep.subr.mxu0 0.0
  %64 = vmatpush1.msra.mxu0 0.0
  %65 = vmatprep.subr.mxu0 0.0
  %66 = vmatpush1.msra.mxu0 0.0
  %67 = vmatprep.subr.mxu0 0.0
  %68 = vmatpush1.msra.mxu0 0.0
  %69 = vmatprep.subr.mxu0 0.0
  %70 = vmatpush1.msra.mxu0 0.0
  %71 = vmatprep.subr.mxu0 0.0
  %72 = vmatpush1.msra.mxu0 0.0
  %73 = vmatprep.subr.mxu0 0.0
  %74 = vmatpush1.msra.mxu0 0.0
  %75 = vmatprep.subr.mxu0 0.0
  %76 = vmatpush1.msra.mxu0 0.0
  %77 = vmatprep.subr.mxu0 0.0
  %78 = vmatpush1.msra.mxu0 0.0
  %79 = vmatprep.subr.mxu0 0.0
  %80 = vmatpush1.msra.mxu0 0.0
  %81 = vmatprep.subr.mxu0 0.0
  %82 = vmatpush1.msra.mxu0 0.0
  %83 = vmatprep.subr.mxu0 0.0
  %84 = vmatpush1.msra.mxu0 0.0
  %85 = vmatprep.subr.mxu0 0.0
  %86 = vmatpush1.msra.mxu0 0.0
  %87 = vmatprep.subr.mxu0 0.0
  %88 = vmatpush1.msra.mxu0 0.0
  %89 = vmatprep.subr.mxu0 0.0
  %90 = vmatpush1.msra.mxu0 0.0
  %91 = vmatprep.subr.mxu0 0.0
  %92 = vmatpush1.msra.mxu0 0.0
  %93 = vmatprep.subr.mxu0 0.0
  %94 = vmatpush1.msra.mxu0 0.0
  %95 = vmatprep.subr.mxu0 0.0
  %96 = vmatpush1.msra.mxu0 0.0
  %97 = vmatprep.subr.mxu0 0.0
  %98 = vmatpush1.msra.mxu0 0.0
  %99 = vmatprep.subr.mxu0 0.0
  %100 = vmatpush1.msra.mxu0 0.0
  %101 = vmatprep.subr.mxu0 0.0
  %102 = vmatpush1.msra.mxu0 0.0
  %103 = vmatprep.subr.mxu0 0.0
  %104 = vmatpush1.msra.mxu0 0.0
  %105 = vmatprep.mubr.f32.mxu0 0.0
  %106 = vmatmul.mubr.f32.gmra.mrb[0].mxu0 %v36
  %v107 = vpop.f32.mrb[0].mxu0
  %v108 = vadd.f32 %v32, %v107
  %v109 = vpop.f32.mrb[0].mxu0
  %110 = vmatprep.mubr.f32.mxu0 0.0
  %111 = vmatmul.mubr.f32.gmra.mrb[0].mxu0 %v39
  %v112 = vpop.f32.mrb[0].mxu0
  %v113 = vadd.f32 %v32, %v112
  %v114 = vpop.f32.mrb[0].mxu0
  %115 = vdwg.mxu0
  %116 = vst.msk [vmem:[%s4] sm:$0xff] %vm34, %v108
  %117 = vst.msk [vmem:[%s4 + $0x8] sm:$0xff] %vm34, %v113
  // Predicated region
  $region18: #{singleblock_apply.51} parent=0 // pred_check
    _
  $region19: #{singleblock_apply.51} parent=0 // pred_check_branch
    %119 = sbr.rel (0) target = $region21
  $region20: #{singleblock_apply.51} parent=0 // pred_region
    _
  $region21: #{singleblock_apply.51} parent=0 // pred_fallthru
    _
  // Predicated region
  $region22: #{singleblock_apply.51} parent=0 // pred_check
    _
  $region23: #{singleblock_apply.51} parent=0 // pred_check_branch
    %121 = sbr.rel (0) target = $region25
  $region24: #{singleblock_apply.51} parent=0 // pred_region
    _
  $region25: #{singleblock_apply.51} parent=0 // pred_fallthru
    _

// kernel: singleblock_apply.49
$region0: #{singleblock_apply.49}
  #allocation0 [shape = 'u32[]', space=smem, size = 0x4, offset = 0x4, fixed_abs, tag = 'smem constant byte address 0x4 - core index']
  #allocation1 [shape = 'u32[144,128]{1,0:T(1,128)}', space=vmem, size = 0x12000, scoped, tag = 'internal scratch']
  %s0 = inlined_call_operand.vmem [shape: f32[2,4,8,8], index: 0, kind: input, shape index: {}]
  %s1 = inlined_call_operand.vmem [shape: f32[2,4,8,8], index: 1, kind: input, shape index: {}]
  %s2 = inlined_call_operand.vmem [shape: f32[2,4,8,8], index: 2, kind: input, shape index: {}]
  %s3 = inlined_call_operand.vmem [shape: f32[2,1,8], index: 3, kind: input, shape index: {}]
  %s4 = inlined_call_operand.vmem [shape: f32[2,4,1,8], index: 4, kind: input, shape index: {}]
  %s5 = inlined_call_operand.vmem [shape: f32[2,4,8,8], index: 5, kind: output, shape index: {}]
  %s6 = sld [smem:[#allocation0]]
  $region53: #{singleblock_apply.49} parent=0
    _
  %s8 = ssub.s32 1, %s6
  %s9 = scalar_select 0, %s8, %s6
  loop: start=0, step=1, limit=4
  $region2: #{singleblock_apply.49} parent=0 // loop_pre_header
    _
  $region3: #{singleblock_apply.49} parent=0 // loop_header
    %s11 = sphi 0, %s15
    %p12 = scmp.ge.s32.totalorder %s11, 4
    %s21 = sphi 0, %s23
    %s24 = sphi 0, %s21
    %s25 = sphi 0, %s24
    %s41 = sphi 0, %s25
    %s47 = sphi 0, %s49
    %s50 = sphi 0, %s47
    %s51 = sphi 0, %s50
    %s67 = sphi 0, %s51
    %s73 = sphi 0, %s75
    %s76 = sphi 0, %s73
    %s77 = sphi 0, %s76
    %s93 = sphi 0, %s77
    %s99 = sphi 0, %s101
    %s102 = sphi 0, %s99
    %s103 = sphi 0, %s102
    %s119 = sphi 0, %s103
    %s125 = sphi 0, %s127
    %s128 = sphi 0, %s125
    %s129 = sphi 0, %s128
    %s145 = sphi 0, %s129
    %s151 = sphi 0, %s153
    %s154 = sphi 0, %s151
    %s155 = sphi 0, %s154
    %s171 = sphi 0, %s155
  $region4: #{singleblock_apply.49} parent=0 // loop_header_branch
    %14 = sbr.rel (%p12) target = $region8
  $region5: #{singleblock_apply.49} parent=0 // loop_body
    %s16 = ssub.s32 %s11, 1
    %s17 = ssub.s32 %s11, 2
    %s18 = sadd.s32 %s11, 1
    %s19 = ssub.s32 %s11, %s18
    %p20 = scmp.eq.s32.totalorder %s19, 0
    %s22 = sadd.s32 %s21, 1
    %s23 = scalar_select %p20, %s21, %s22
    %p26 = pneg %p20
    %p27 = scmp.eq.s32.totalorder %s11, 1
    %p28 = por %p26, %p27
    %p29 = scmp.ne.s32.totalorder %s21, %s24
    %p30 = scmp.eq.s32.totalorder %s11, 0
    %p31 = por %p29, %p30
    %p32 = scmp.ne.s32.totalorder %s21, %s24
    %p33 = scmp.eq.s32.totalorder %s16, 1
    %p34 = por %p32, %p33
    %p35 = scmp.ne.s32.totalorder %s24, %s25
    %p36 = scmp.eq.s32.totalorder %s16, 0
    %p37 = por %p35, %p36
    %p38 = scmp.ne.s32.totalorder %s24, %s25
    %p39 = scmp.eq.s32.totalorder %s17, 1
    %p40 = por %p38, %p39
    %p42 = scmp.ne.s32.totalorder %s25, %s41
    %p43 = scmp.eq.s32.totalorder %s17, 0
    %p44 = por %p42, %p43
    %s45 = ssub.s32 %s11, %s18
    %p46 = scmp.eq.s32.totalorder %s45, 0
    %s48 = sadd.s32 %s47, 1
    %s49 = scalar_select %p46, %s47, %s48
    %p52 = pneg %p46
    %p53 = scmp.eq.s32.totalorder %s11, 1
    %p54 = por %p52, %p53
    %p55 = scmp.ne.s32.totalorder %s47, %s50
    %p56 = scmp.eq.s32.totalorder %s11, 0
    %p57 = por %p55, %p56
    %p58 = scmp.ne.s32.totalorder %s47, %s50
    %p59 = scmp.eq.s32.totalorder %s16, 1
    %p60 = por %p58, %p59
    %p61 = scmp.ne.s32.totalorder %s50, %s51
    %p62 = scmp.eq.s32.totalorder %s16, 0
    %p63 = por %p61, %p62
    %p64 = scmp.ne.s32.totalorder %s50, %s51
    %p65 = scmp.eq.s32.totalorder %s17, 1
    %p66 = por %p64, %p65
    %p68 = scmp.ne.s32.totalorder %s51, %s67
    %p69 = scmp.eq.s32.totalorder %s17, 0
    %p70 = por %p68, %p69
    %s71 = ssub.s32 %s11, %s18
    %p72 = scmp.eq.s32.totalorder %s71, 0
    %s74 = sadd.s32 %s73, 1
    %s75 = scalar_select %p72, %s73, %s74
    %p78 = pneg %p72
    %p79 = scmp.eq.s32.totalorder %s11, 1
    %p80 = por %p78, %p79
    %p81 = scmp.ne.s32.totalorder %s73, %s76
    %p82 = scmp.eq.s32.totalorder %s11, 0
    %p83 = por %p81, %p82
    %p84 = scmp.ne.s32.totalorder %s73, %s76
    %p85 = scmp.eq.s32.totalorder %s16, 1
    %p86 = por %p84, %p85
    %p87 = scmp.ne.s32.totalorder %s76, %s77
    %p88 = scmp.eq.s32.totalorder %s16, 0
    %p89 = por %p87, %p88
    %p90 = scmp.ne.s32.totalorder %s76, %s77
    %p91 = scmp.eq.s32.totalorder %s17, 1
    %p92 = por %p90, %p91
    %p94 = scmp.ne.s32.totalorder %s77, %s93
    %p95 = scmp.eq.s32.totalorder %s17, 0
    %p96 = por %p94, %p95
    %s97 = ssub.s32 %s11, %s18
    %p98 = scmp.eq.s32.totalorder %s97, 0
    %s100 = sadd.s32 %s99, 1
    %s101 = scalar_select %p98, %s99, %s100
    %p104 = pneg %p98
    %p105 = scmp.eq.s32.totalorder %s11, 1
    %p106 = por %p104, %p105
    %p107 = scmp.ne.s32.totalorder %s99, %s102
    %p108 = scmp.eq.s32.totalorder %s11, 0
    %p109 = por %p107, %p108
    %p110 = scmp.ne.s32.totalorder %s99, %s102
    %p111 = scmp.eq.s32.totalorder %s16, 1
    %p112 = por %p110, %p111
    %p113 = scmp.ne.s32.totalorder %s102, %s103
    %p114 = scmp.eq.s32.totalorder %s16, 0
    %p115 = por %p113, %p114
    %p116 = scmp.ne.s32.totalorder %s102, %s103
    %p117 = scmp.eq.s32.totalorder %s17, 1
    %p118 = por %p116, %p117
    %p120 = scmp.ne.s32.totalorder %s103, %s119
    %p121 = scmp.eq.s32.totalorder %s17, 0
    %p122 = por %p120, %p121
    %s123 = ssub.s32 %s11, %s18
    %p124 = scmp.eq.s32.totalorder %s123, 0
    %s126 = sadd.s32 %s125, 1
    %s127 = scalar_select %p124, %s125, %s126
    %p130 = pneg %p124
    %p131 = scmp.eq.s32.totalorder %s11, 1
    %p132 = por %p130, %p131
    %p133 = scmp.ne.s32.totalorder %s125, %s128
    %p134 = scmp.eq.s32.totalorder %s11, 0
    %p135 = por %p133, %p134
    %p136 = scmp.ne.s32.totalorder %s125, %s128
    %p137 = scmp.eq.s32.totalorder %s16, 1
    %p138 = por %p136, %p137
    %p139 = scmp.ne.s32.totalorder %s128, %s129
    %p140 = scmp.eq.s32.totalorder %s16, 0
    %p141 = por %p139, %p140
    %p142 = scmp.ne.s32.totalorder %s128, %s129
    %p143 = scmp.eq.s32.totalorder %s17, 1
    %p144 = por %p142, %p143
    %p146 = scmp.ne.s32.totalorder %s129, %s145
    %p147 = scmp.eq.s32.totalorder %s17, 0
    %p148 = por %p146, %p147
    %s149 = ssub.s32 %s11, %s18
    %p150 = scmp.eq.s32.totalorder %s149, 0
    %s152 = sadd.s32 %s151, 1
    %s153 = scalar_select %p150, %s151, %s152
    %p156 = pneg %p150
    %p157 = scmp.eq.s32.totalorder %s11, 1
    %p158 = por %p156, %p157
    %p159 = scmp.ne.s32.totalorder %s151, %s154
    %p160 = scmp.eq.s32.totalorder %s11, 0
    %p161 = por %p159, %p160
    %p162 = scmp.ne.s32.totalorder %s151, %s154
    %p163 = scmp.eq.s32.totalorder %s16, 1
    %p164 = por %p162, %p163
    %p165 = scmp.ne.s32.totalorder %s154, %s155
    %p166 = scmp.eq.s32.totalorder %s16, 0
    %p167 = por %p165, %p166
    %p168 = scmp.ne.s32.totalorder %s154, %s155
    %p169 = scmp.eq.s32.totalorder %s17, 1
    %p170 = por %p168, %p169
    %p172 = scmp.ne.s32.totalorder %s155, %s171
    %p173 = scmp.eq.s32.totalorder %s17, 0
    %p174 = por %p172, %p173
    %p175 = scmp.le.s32.totalorder 1, %s11
    %p176 = scmp.lt.s32.totalorder %s11, 3
    %p177 = pnand %p175, %p176
    %p178 = pneg %p177
    // Predicated region
    $region9: #{singleblock_apply.49} parent=5 // pred_check
      _
    $region10: #{singleblock_apply.49} parent=5 // pred_check_branch
      %180 = sbr.rel (%p177) target = $region12
    $region11: #{singleblock_apply.49} parent=5 // pred_region
      %s181 = ssub.s32 %s11, 1
    $region12: #{singleblock_apply.49} parent=5 // pred_fallthru
      _
    %p182 = scmp.lt.s32.totalorder %s11, 2
    // Predicated region
    $region13: #{singleblock_apply.49} parent=5 // pred_check
      %p183 = pneg %p182
    $region14: #{singleblock_apply.49} parent=5 // pred_check_branch
      %185 = sbr.rel (%p183) target = $region16
    $region15: #{singleblock_apply.49} parent=5 // pred_region
      // Predicated region
      $region17: #{singleblock_apply.49} parent=15 // pred_check
        %p186 = pneg %p31
      $region18: #{singleblock_apply.49} parent=15 // pred_check_branch
        %188 = sbr.rel (%p186) target = $region20
      $region19: #{singleblock_apply.49} parent=15 // pred_region
        %p189 = scmp.lt.s32.totalorder %s11, 1
        %s190 = scalar_select %p189, %s11, 1
        %s191 = smul.addr %s190, 4
        %s192 = smul.addr %s191, 8
        %s193 = scalar_lea.vmem %s0, %s192
      $region20: #{singleblock_apply.49} parent=15 // pred_fallthru
        _
      // Predicated region
      $region21: #{singleblock_apply.49} parent=15 // pred_check
        %p194 = pneg %p57
      $region22: #{singleblock_apply.49} parent=15 // pred_check_branch
        %196 = sbr.rel (%p194) target = $region24
      $region23: #{singleblock_apply.49} parent=15 // pred_region
        %p197 = scmp.lt.s32.totalorder %s11, 1
        %s198 = scalar_select %p197, %s11, 1
        %s199 = smul.addr %s198, 4
        %s200 = smul.addr %s199, 8
        %s201 = scalar_lea.vmem %s1, %s200
      $region24: #{singleblock_apply.49} parent=15 // pred_fallthru
        _
      // Predicated region
      $region25: #{singleblock_apply.49} parent=15 // pred_check
        %p202 = pneg %p83
      $region26: #{singleblock_apply.49} parent=15 // pred_check_branch
        %204 = sbr.rel (%p202) target = $region28
      $region27: #{singleblock_apply.49} parent=15 // pred_region
        %p205 = scmp.lt.s32.totalorder %s11, 1
        %s206 = scalar_select %p205, %s11, 1
        %s207 = smul.addr %s206, 4
        %s208 = smul.addr %s207, 8
        %s209 = scalar_lea.vmem %s2, %s208
      $region28: #{singleblock_apply.49} parent=15 // pred_fallthru
        _
      // Predicated region
      $region29: #{singleblock_apply.49} parent=15 // pred_check
        %p210 = pneg %p109
      $region30: #{singleblock_apply.49} parent=15 // pred_check_branch
        %212 = sbr.rel (%p210) target = $region32
      $region31: #{singleblock_apply.49} parent=15 // pred_region
        %p213 = scmp.lt.s32.totalorder %s11, 1
        %s214 = scalar_select %p213, %s11, 1
        %s215 = scalar_lea.vmem %s3, %s214
      $region32: #{singleblock_apply.49} parent=15 // pred_fallthru
        _
      // Predicated region
      $region33: #{singleblock_apply.49} parent=15 // pred_check
        %p216 = pneg %p135
      $region34: #{singleblock_apply.49} parent=15 // pred_check_branch
        %218 = sbr.rel (%p216) target = $region36
      $region35: #{singleblock_apply.49} parent=15 // pred_region
        %p219 = scmp.lt.s32.totalorder %s11, 1
        %s220 = scalar_select %p219, %s11, 1
        %s221 = smul.addr %s220, 4
        %s222 = scalar_lea.vmem %s4, %s221
      $region36: #{singleblock_apply.49} parent=15 // pred_fallthru
        _
    $region16: #{singleblock_apply.49} parent=5 // pred_fallthru
      _
    %p223 = scmp.le.s32.totalorder 1, %s11
    %p224 = scmp.lt.s32.totalorder %s11, 3
    %p225 = pnand %p223, %p224
    %p226 = pneg %p225
    // Predicated region
    $region37: #{singleblock_apply.49} parent=5 // pred_check
      _
    $region38: #{singleblock_apply.49} parent=5 // pred_check_branch
      %228 = sbr.rel (%p225) target = $region40
    $region39: #{singleblock_apply.49} parent=5 // pred_region
      %s229 = ssub.s32 %s11, 1
      %p230 = scmp.lt.s32.totalorder %s16, 1
      %s231 = scalar_select %p230, %s16, 1
      %s232 = smul.addr %s231, 4
      %s233 = smul.addr %s232, 8
      %s234 = scalar_lea.vmem %s0, %s233
      %p235 = pneg %p37
      %p236 = pneg %p34
      %p237 = scmp.lt.s32.totalorder %s16, 1
      %s238 = scalar_select %p237, %s16, 1
      %s239 = smul.addr %s238, 4
      %s240 = smul.addr %s239, 8
      %s241 = scalar_lea.vmem %s1, %s240
      %p242 = pneg %p63
      %p243 = pneg %p60
      %p244 = scmp.lt.s32.totalorder %s16, 1
      %s245 = scalar_select %p244, %s16, 1
      %s246 = smul.addr %s245, 4
      %s247 = smul.addr %s246, 8
      %s248 = scalar_lea.vmem %s2, %s247
      %p249 = pneg %p89
      %p250 = pneg %p86
      %p251 = scmp.lt.s32.totalorder %s16, 1
      %s252 = scalar_select %p251, %s16, 1
      %s253 = scalar_lea.vmem %s3, %s252
      %p254 = pneg %p115
      %p255 = pneg %p112
      %p256 = scmp.lt.s32.totalorder %s16, 1
      %s257 = scalar_select %p256, %s16, 1
      %s258 = smul.addr %s257, 4
      %s259 = scalar_lea.vmem %s4, %s258
      %p260 = pneg %p141
      %p261 = pneg %p138
      %p262 = pneg %p167
      %p263 = pneg %p164
      %p264 = scmp.lt.s32.totalorder %s16, 1
      %s265 = scalar_select %p264, %s16, 1
      %s266 = smul.addr %s265, 4
      %s267 = smul.addr %s266, 8
      %s268 = scalar_lea.vmem %s5, %s267
      %p269 = scmp.lt.s32.totalorder %s16, 1
      %s270 = scalar_select %p269, %s16, 1
      %s271 = smul.addr %s270, 4
      %s272 = smul.addr %s271, 8
      %s273 = scalar_lea.vmem %s0, %s272
      %p274 = scmp.lt.s32.totalorder %s16, 1
      %s275 = scalar_select %p274, %s16, 1
      %s276 = smul.addr %s275, 4
      %s277 = smul.addr %s276, 8
      %s278 = scalar_lea.vmem %s1, %s277
      %p279 = scmp.lt.s32.totalorder %s16, 1
      %s280 = scalar_select %p279, %s16, 1
      %s281 = smul.addr %s280, 4
      %s282 = smul.addr %s281, 8
      %s283 = scalar_lea.vmem %s2, %s282
      %p284 = scmp.lt.s32.totalorder %s16, 1
      %s285 = scalar_select %p284, %s16, 1
      %s286 = scalar_lea.vmem %s3, %s285
      %p287 = scmp.lt.s32.totalorder %s16, 1
      %s288 = scalar_select %p287, %s16, 1
      %s289 = smul.addr %s288, 4
      %s290 = scalar_lea.vmem %s4, %s289
      %p291 = scmp.lt.s32.totalorder %s16, 1
      %s292 = scalar_select %p291, %s16, 1
      %s293 = smul.addr %s292, 4
      %s294 = smul.addr %s293, 8
      %s295 = scalar_lea.vmem %s5, %s294
      %v296 = vld [vmem:[%s290] sm:$0x1]
      %v297 = vld [vmem:[%s290 + $0x1] sm:$0x1]
      %v298 = vld [vmem:[%s290 + $0x2] sm:$0x1]
      %v299 = vld [vmem:[%s290 + $0x3] sm:$0x1]
      %v300 = vld [vmem:[%s273] sm:$0xff]
      %v301 = vld [vmem:[%s273 + $0x8] sm:$0xff]
      %v302 = vld [vmem:[%s273 + $0x10] sm:$0xff]
      %v303 = vld [vmem:[%s273 + $0x18] sm:$0xff]
      %v304 = vmul.f32 %v296, 0.35355338
      %v305 = vmul.f32 %v297, 0.35355338
      %v306 = vmul.f32 %v298, 0.35355338
      %v307 = vmul.f32 %v299, 0.35355338
      %v312 = vlaneseq
      %v313 = vshrl.u32 %v312, 7
      %v314 = vsub.s32 0, %v313
      %v315 = vrot.slane %v304, %v314
      %v316 = vlaneseq
      %v317 = vshrl.u32 %v316, 7
      %v318 = vsub.s32 0, %v317
      %v319 = vrot.slane %v305, %v318
      %v320 = vlaneseq
      %v321 = vshrl.u32 %v320, 7
      %v322 = vsub.s32 0, %v321
      %v323 = vrot.slane %v306, %v322
      %v324 = vlaneseq
      %v325 = vshrl.u32 %v324, 7
      %v326 = vsub.s32 0, %v325
      %v327 = vrot.slane %v307, %v326
      %v332 = vmul.f32 %v300, %v315
      %v333 = vmul.f32 %v301, %v319
      %v334 = vmul.f32 %v302, %v323
      %v335 = vmul.f32 %v303, %v327
      %v336 = vld [vmem:[%s278] sm:$0xff]
      %v337 = vld [vmem:[%s278 + $0x8] sm:$0xff]
      %v338 = vld [vmem:[%s278 + $0x10] sm:$0xff]
      %v339 = vld [vmem:[%s278 + $0x18] sm:$0xff]
      %v344 = vlaneseq
      %v345 = vshrl.u32 %v344, 7
      %v346 = vsub.s32 0, %v345
      %v347 = vrot.slane %v296, %v346
      %v348 = vlaneseq
      %v349 = vshrl.u32 %v348, 7
      %v350 = vsub.s32 0, %v349
      %v351 = vrot.slane %v297, %v350
      %v352 = vlaneseq
      %v353 = vshrl.u32 %v352, 7
      %v354 = vsub.s32 0, %v353
      %v355 = vrot.slane %v298, %v354
      %v356 = vlaneseq
      %v357 = vshrl.u32 %v356, 7
      %v358 = vsub.s32 0, %v357
      %v359 = vrot.slane %v299, %v358
      %v364 = vmul.f32 %v336, %v347
      %v365 = vmul.f32 %v337, %v351
      %v366 = vmul.f32 %v338, %v355
      %v367 = vmul.f32 %v339, %v359
      %v368 = vld [vmem:[%s283] sm:$0xff]
      %v369 = vld [vmem:[%s283 + $0x8] sm:$0xff]
      %v370 = vld [vmem:[%s283 + $0x10] sm:$0xff]
      %v371 = vld [vmem:[%s283 + $0x18] sm:$0xff]
      %v372 = vmul.f32 %v368, %v347
      %v373 = vmul.f32 %v369, %v351
      %v374 = vmul.f32 %v370, %v355
      %v375 = vmul.f32 %v371, %v359
      %v376 = vld [vmem:[%s286] sm:$0x1]
      %v378 = vlaneseq
      %v379 = vshrl.u32 %v378, 7
      %v380 = vsub.s32 0, %v379
      %v381 = vrot.slane %v376, %v380
      %vm383 = vcmask 64512
      %v385 = vsel %vm383, %v332, 0
      %v388 = vsel %vm383, %v364, 0
      %390 = vmatprep.subr.mxu0 0.0
      %391 = vmatpush1.xpose.msra.mxu0 %v388
      %392 = vmatprep.subr.mxu0 0.0
      %393 = vmatpush1.xpose.msra.mxu0 0.0
      %394 = vmatprep.subr.mxu0 0.0
      %395 = vmatpush1.xpose.msra.mxu0 0.0
      %396 = vmatprep.subr.mxu0 0.0
      %397 = vmatpush1.xpose.msra.mxu0 0.0
      %398 = vmatprep.subr.mxu0 0.0
      %399 = vmatpush1.xpose.msra.mxu0 0.0
      %400 = vmatprep.subr.mxu0 0.0
      %401 = vmatpush1.xpose.msra.mxu0 0.0
      %402 = vmatprep.subr.mxu0 0.0
      %403 = vmatpush1.xpose.msra.mxu0 0.0
      %404 = vmatprep.subr.mxu0 0.0
      %405 = vmatpush1.xpose.msra.mxu0 0.0
      %406 = vmatprep.subr.mxu0 0.0
      %407 = vmatpush1.xpose.msra.mxu0 0.0
      %408 = vmatprep.subr.mxu0 0.0
      %409 = vmatpush1.xpose.msra.mxu0 0.0
      %410 = vmatprep.subr.mxu0 0.0
      %411 = vmatpush1.xpose.msra.mxu0 0.0
      %412 = vmatprep.subr.mxu0 0.0
      %413 = vmatpush1.xpose.msra.mxu0 0.0
      %414 = vmatprep.subr.mxu0 0.0
      %415 = vmatpush1.xpose.msra.mxu0 0.0
      %416 = vmatprep.subr.mxu0 0.0
      %417 = vmatpush1.xpose.msra.mxu0 0.0
      %418 = vmatprep.subr.mxu0 0.0
      %419 = vmatpush1.xpose.msra.mxu0 0.0
      %420 = vmatprep.subr.mxu0 0.0
      %421 = vmatpush1.xpose.msra.mxu0 0.0
      %422 = vmatprep.subr.mxu0 0.0
      %423 = vmatpush1.xpose.msra.mxu0 0.0
      %424 = vmatprep.subr.mxu0 0.0
      %425 = vmatpush1.xpose.msra.mxu0 0.0
      %426 = vmatprep.subr.mxu0 0.0
      %427 = vmatpush1.xpose.msra.mxu0 0.0
      %428 = vmatprep.subr.mxu0 0.0
      %429 = vmatpush1.xpose.msra.mxu0 0.0
      %430 = vmatprep.subr.mxu0 0.0
      %431 = vmatpush1.xpose.msra.mxu0 0.0
      %432 = vmatprep.subr.mxu0 0.0
      %433 = vmatpush1.xpose.msra.mxu0 0.0
      %434 = vmatprep.subr.mxu0 0.0
      %435 = vmatpush1.xpose.msra.mxu0 0.0
      %436 = vmatprep.subr.mxu0 0.0
      %437 = vmatpush1.xpose.msra.mxu0 0.0
      %438 = vmatprep.subr.mxu0 0.0
      %439 = vmatpush1.xpose.msra.mxu0 0.0
      %440 = vmatprep.subr.mxu0 0.0
      %441 = vmatpush1.xpose.msra.mxu0 0.0
      %442 = vmatprep.subr.mxu0 0.0
      %443 = vmatpush1.xpose.msra.mxu0 0.0
      %444 = vmatprep.subr.mxu0 0.0
      %445 = vmatpush1.xpose.msra.mxu0 0.0
      %446 = vmatprep.subr.mxu0 0.0
      %447 = vmatpush1.xpose.msra.mxu0 0.0
      %448 = vmatprep.subr.mxu0 0.0
      %449 = vmatpush1.xpose.msra.mxu0 0.0
      %450 = vmatprep.subr.mxu0 0.0
      %451 = vmatpush1.xpose.msra.mxu0 0.0
      %452 = vmatprep.subr.mxu0 0.0
      %453 = vmatpush1.xpose.msra.mxu0 0.0
      %454 = vmatprep.mubr.f32.mxu0 0.0
      %455 = vmatmul.mubr.f32.gmra.mrb[0].mxu0 %v385
      %v456 = vpop.f32.mrb[0].mxu0
      %v457 = vadd.f32 %v381, %v456
      %v458 = vpop.f32.mrb[0].mxu0
      %459 = vdwg.mxu0
      %v461 = vsel %vm383, %v333, 0
      %v464 = vsel %vm383, %v365, 0
      %466 = vmatprep.subr.mxu0 0.0
      %467 = vmatpush1.xpose.msra.mxu0 %v464
      %468 = vmatprep.subr.mxu0 0.0
      %469 = vmatpush1.xpose.msra.mxu0 0.0
      %470 = vmatprep.subr.mxu0 0.0
      %471 = vmatpush1.xpose.msra.mxu0 0.0
      %472 = vmatprep.subr.mxu0 0.0
      %473 = vmatpush1.xpose.msra.mxu0 0.0
      %474 = vmatprep.subr.mxu0 0.0
      %475 = vmatpush1.xpose.msra.mxu0 0.0
      %476 = vmatprep.subr.mxu0 0.0
      %477 = vmatpush1.xpose.msra.mxu0 0.0
      %478 = vmatprep.subr.mxu0 0.0
      %479 = vmatpush1.xpose.msra.mxu0 0.0
      %480 = vmatprep.subr.mxu0 0.0
      %481 = vmatpush1.xpose.msra.mxu0 0.0
      %482 = vmatprep.subr.mxu0 0.0
      %483 = vmatpush1.xpose.msra.mxu0 0.0
      %484 = vmatprep.subr.mxu0 0.0
      %485 = vmatpush1.xpose.msra.mxu0 0.0
      %486 = vmatprep.subr.mxu0 0.0
      %487 = vmatpush1.xpose.msra.mxu0 0.0
      %488 = vmatprep.subr.mxu0 0.0
      %489 = vmatpush1.xpose.msra.mxu0 0.0
      %490 = vmatprep.subr.mxu0 0.0
      %491 = vmatpush1.xpose.msra.mxu0 0.0
      %492 = vmatprep.subr.mxu0 0.0
      %493 = vmatpush1.xpose.msra.mxu0 0.0
      %494 = vmatprep.subr.mxu0 0.0
      %495 = vmatpush1.xpose.msra.mxu0 0.0
      %496 = vmatprep.subr.mxu0 0.0
      %497 = vmatpush1.xpose.msra.mxu0 0.0
      %498 = vmatprep.subr.mxu0 0.0
      %499 = vmatpush1.xpose.msra.mxu0 0.0
      %500 = vmatprep.subr.mxu0 0.0
      %501 = vmatpush1.xpose.msra.mxu0 0.0
      %502 = vmatprep.subr.mxu0 0.0
      %503 = vmatpush1.xpose.msra.mxu0 0.0
      %504 = vmatprep.subr.mxu0 0.0
      %505 = vmatpush1.xpose.msra.mxu0 0.0
      %506 = vmatprep.subr.mxu0 0.0
      %507 = vmatpush1.xpose.msra.mxu0 0.0
      %508 = vmatprep.subr.mxu0 0.0
      %509 = vmatpush1.xpose.msra.mxu0 0.0
      %510 = vmatprep.subr.mxu0 0.0
      %511 = vmatpush1.xpose.msra.mxu0 0.0
      %512 = vmatprep.subr.mxu0 0.0
      %513 = vmatpush1.xpose.msra.mxu0 0.0
      %514 = vmatprep.subr.mxu0 0.0
      %515 = vmatpush1.xpose.msra.mxu0 0.0
      %516 = vmatprep.subr.mxu0 0.0
      %517 = vmatpush1.xpose.msra.mxu0 0.0
      %518 = vmatprep.subr.mxu0 0.0
      %519 = vmatpush1.xpose.msra.mxu0 0.0
      %520 = vmatprep.subr.mxu0 0.0
      %521 = vmatpush1.xpose.msra.mxu0 0.0
      %522 = vmatprep.subr.mxu0 0.0
      %523 = vmatpush1.xpose.msra.mxu0 0.0
      %524 = vmatprep.subr.mxu0 0.0
      %525 = vmatpush1.xpose.msra.mxu0 0.0
      %526 = vmatprep.subr.mxu0 0.0
      %527 = vmatpush1.xpose.msra.mxu0 0.0
      %528 = vmatprep.subr.mxu0 0.0
      %529 = vmatpush1.xpose.msra.mxu0 0.0
      %530 = vmatprep.mubr.f32.mxu0 0.0
      %531 = vmatmul.mubr.f32.gmra.mrb[0].mxu0 %v461
      %v532 = vpop.f32.mrb[0].mxu0
      %v533 = vadd.f32 %v381, %v532
      %v534 = vpop.f32.mrb[0].mxu0
      %535 = vdwg.mxu0
      %v537 = vsel %vm383, %v334, 0
      %v540 = vsel %vm383, %v366, 0
      %542 = vmatprep.subr.mxu0 0.0
      %543 = vmatpush1.xpose.msra.mxu0 %v540
      %544 = vmatprep.subr.mxu0 0.0
      %545 = vmatpush1.xpose.msra.mxu0 0.0
      %546 = vmatprep.subr.mxu0 0.0
      %547 = vmatpush1.xpose.msra.mxu0 0.0
      %548 = vmatprep.subr.mxu0 0.0
      %549 = vmatpush1.xpose.msra.mxu0 0.0
      %550 = vmatprep.subr.mxu0 0.0
      %551 = vmatpush1.xpose.msra.mxu0 0.0
      %552 = vmatprep.subr.mxu0 0.0
      %553 = vmatpush1.xpose.msra.mxu0 0.0
      %554 = vmatprep.subr.mxu0 0.0
      %555 = vmatpush1.xpose.msra.mxu0 0.0
      %556 = vmatprep.subr.mxu0 0.0
      %557 = vmatpush1.xpose.msra.mxu0 0.0
      %558 = vmatprep.subr.mxu0 0.0
      %559 = vmatpush1.xpose.msra.mxu0 0.0
      %560 = vmatprep.subr.mxu0 0.0
      %561 = vmatpush1.xpose.msra.mxu0 0.0
      %562 = vmatprep.subr.mxu0 0.0
      %563 = vmatpush1.xpose.msra.mxu0 0.0
      %564 = vmatprep.subr.mxu0 0.0
      %565 = vmatpush1.xpose.msra.mxu0 0.0
      %566 = vmatprep.subr.mxu0 0.0
      %567 = vmatpush1.xpose.msra.mxu0 0.0
      %568 = vmatprep.subr.mxu0 0.0
      %569 = vmatpush1.xpose.msra.mxu0 0.0
      %570 = vmatprep.subr.mxu0 0.0
      %571 = vmatpush1.xpose.msra.mxu0 0.0
      %572 = vmatprep.subr.mxu0 0.0
      %573 = vmatpush1.xpose.msra.mxu0 0.0
      %574 = vmatprep.subr.mxu0 0.0
      %575 = vmatpush1.xpose.msra.mxu0 0.0
      %576 = vmatprep.subr.mxu0 0.0
      %577 = vmatpush1.xpose.msra.mxu0 0.0
      %578 = vmatprep.subr.mxu0 0.0
      %579 = vmatpush1.xpose.msra.mxu0 0.0
      %580 = vmatprep.subr.mxu0 0.0
      %581 = vmatpush1.xpose.msra.mxu0 0.0
      %582 = vmatprep.subr.mxu0 0.0
      %583 = vmatpush1.xpose.msra.mxu0 0.0
      %584 = vmatprep.subr.mxu0 0.0
      %585 = vmatpush1.xpose.msra.mxu0 0.0
      %586 = vmatprep.subr.mxu0 0.0
      %587 = vmatpush1.xpose.msra.mxu0 0.0
      %588 = vmatprep.subr.mxu0 0.0
      %589 = vmatpush1.xpose.msra.mxu0 0.0
      %590 = vmatprep.subr.mxu0 0.0
      %591 = vmatpush1.xpose.msra.mxu0 0.0
      %592 = vmatprep.subr.mxu0 0.0
      %593 = vmatpush1.xpose.msra.mxu0 0.0
      %594 = vmatprep.subr.mxu0 0.0
      %595 = vmatpush1.xpose.msra.mxu0 0.0
      %596 = vmatprep.subr.mxu0 0.0
      %597 = vmatpush1.xpose.msra.mxu0 0.0
      %598 = vmatprep.subr.mxu0 0.0
      %599 = vmatpush1.xpose.msra.mxu0 0.0
      %600 = vmatprep.subr.mxu0 0.0
      %601 = vmatpush1.xpose.msra.mxu0 0.0
      %602 = vmatprep.subr.mxu0 0.0
      %603 = vmatpush1.xpose.msra.mxu0 0.0
      %604 = vmatprep.subr.mxu0 0.0
      %605 = vmatpush1.xpose.msra.mxu0 0.0
      %606 = vmatprep.mubr.f32.mxu0 0.0
      %607 = vmatmul.mubr.f32.gmra.mrb[0].mxu0 %v537
      %v608 = vpop.f32.mrb[0].mxu0
      %v609 = vadd.f32 %v381, %v608
      %v610 = vpop.f32.mrb[0].mxu0
      %611 = vdwg.mxu0
      %v613 = vsel %vm383, %v335, 0
      %v616 = vsel %vm383, %v367, 0
      %618 = vmatprep.subr.mxu0 0.0
      %619 = vmatpush1.xpose.msra.mxu0 %v616
      %620 = vmatprep.subr.mxu0 0.0
      %621 = vmatpush1.xpose.msra.mxu0 0.0
      %622 = vmatprep.subr.mxu0 0.0
      %623 = vmatpush1.xpose.msra.mxu0 0.0
      %624 = vmatprep.subr.mxu0 0.0
      %625 = vmatpush1.xpose.msra.mxu0 0.0
      %626 = vmatprep.subr.mxu0 0.0
      %627 = vmatpush1.xpose.msra.mxu0 0.0
      %628 = vmatprep.subr.mxu0 0.0
      %629 = vmatpush1.xpose.msra.mxu0 0.0
      %630 = vmatprep.subr.mxu0 0.0
      %631 = vmatpush1.xpose.msra.mxu0 0.0
      %632 = vmatprep.subr.mxu0 0.0
      %633 = vmatpush1.xpose.msra.mxu0 0.0
      %634 = vmatprep.subr.mxu0 0.0
      %635 = vmatpush1.xpose.msra.mxu0 0.0
      %636 = vmatprep.subr.mxu0 0.0
      %637 = vmatpush1.xpose.msra.mxu0 0.0
      %638 = vmatprep.subr.mxu0 0.0
      %639 = vmatpush1.xpose.msra.mxu0 0.0
      %640 = vmatprep.subr.mxu0 0.0
      %641 = vmatpush1.xpose.msra.mxu0 0.0
      %642 = vmatprep.subr.mxu0 0.0
      %643 = vmatpush1.xpose.msra.mxu0 0.0
      %644 = vmatprep.subr.mxu0 0.0
      %645 = vmatpush1.xpose.msra.mxu0 0.0
      %646 = vmatprep.subr.mxu0 0.0
      %647 = vmatpush1.xpose.msra.mxu0 0.0
      %648 = vmatprep.subr.mxu0 0.0
      %649 = vmatpush1.xpose.msra.mxu0 0.0
      %650 = vmatprep.subr.mxu0 0.0
      %651 = vmatpush1.xpose.msra.mxu0 0.0
      %652 = vmatprep.subr.mxu0 0.0
      %653 = vmatpush1.xpose.msra.mxu0 0.0
      %654 = vmatprep.subr.mxu0 0.0
      %655 = vmatpush1.xpose.msra.mxu0 0.0
      %656 = vmatprep.subr.mxu0 0.0
      %657 = vmatpush1.xpose.msra.mxu0 0.0
      %658 = vmatprep.subr.mxu0 0.0
      %659 = vmatpush1.xpose.msra.mxu0 0.0
      %660 = vmatprep.subr.mxu0 0.0
      %661 = vmatpush1.xpose.msra.mxu0 0.0
      %662 = vmatprep.subr.mxu0 0.0
      %663 = vmatpush1.xpose.msra.mxu0 0.0
      %664 = vmatprep.subr.mxu0 0.0
      %665 = vmatpush1.xpose.msra.mxu0 0.0
      %666 = vmatprep.subr.mxu0 0.0
      %667 = vmatpush1.xpose.msra.mxu0 0.0
      %668 = vmatprep.subr.mxu0 0.0
      %669 = vmatpush1.xpose.msra.mxu0 0.0
      %670 = vmatprep.subr.mxu0 0.0
      %671 = vmatpush1.xpose.msra.mxu0 0.0
      %672 = vmatprep.subr.mxu0 0.0
      %673 = vmatpush1.xpose.msra.mxu0 0.0
      %674 = vmatprep.subr.mxu0 0.0
      %675 = vmatpush1.xpose.msra.mxu0 0.0
      %676 = vmatprep.subr.mxu0 0.0
      %677 = vmatpush1.xpose.msra.mxu0 0.0
      %678 = vmatprep.subr.mxu0 0.0
      %679 = vmatpush1.xpose.msra.mxu0 0.0
      %680 = vmatprep.subr.mxu0 0.0
      %681 = vmatpush1.xpose.msra.mxu0 0.0
      %682 = vmatprep.mubr.f32.mxu0 0.0
      %683 = vmatmul.mubr.f32.gmra.mrb[0].mxu0 %v613
      %v684 = vpop.f32.mrb[0].mxu0
      %v685 = vadd.f32 %v381, %v684
      %v686 = vpop.f32.mrb[0].mxu0
      %687 = vdwg.mxu0
      %v688 = vsel %vm383, %v457, -inf
      %689 = vmax.xlane.f32.xlu0 %v688
      %v690 = vpop.xlane.xlu0 %689
      %v691 = vsel %vm383, %v533, -inf
      %692 = vmax.xlane.f32.xlu0 %v691
      %v693 = vpop.xlane.xlu0 %692
      %v694 = vsel %vm383, %v609, -inf
      %695 = vmax.xlane.f32.xlu0 %v694
      %v696 = vpop.xlane.xlu0 %695
      %v697 = vsel %vm383, %v685, -inf
      %698 = vmax.xlane.f32.xlu0 %v697
      %v699 = vpop.xlane.xlu0 %698
      %v700 = vsub.f32 %v457, %v690
      %v701 = vsub.f32 %v533, %v693
      %v702 = vsub.f32 %v609, %v696
      %v703 = vsub.f32 %v685, %v699
      %v704 = vmul.f32 %v700, 1.442695
      %v705 = vpow.pop %v704
      %v706 = vmul.f32 %v701, 1.442695
      %v707 = vpow.pop %v706
      %v708 = vmul.f32 %v702, 1.442695
      %v709 = vpow.pop %v708
      %v710 = vmul.f32 %v703, 1.442695
      %v711 = vpow.pop %v710
      %v712 = vsel %vm383, %v705, 0.0
      %713 = vadd.xlane.f32.xlu0 %v712
      %v714 = vpop.xlane.xlu0 %713
      %v715 = vsel %vm383, %v707, 0.0
      %716 = vadd.xlane.f32.xlu0 %v715
      %v717 = vpop.xlane.xlu0 %716
      %v718 = vsel %vm383, %v709, 0.0
      %719 = vadd.xlane.f32.xlu0 %v718
      %v720 = vpop.xlane.xlu0 %719
      %v721 = vsel %vm383, %v711, 0.0
      %722 = vadd.xlane.f32.xlu0 %v721
      %v723 = vpop.xlane.xlu0 %722
      %v724 = vrcp.pop %v714
      %v725 = vrcp.pop %v717
      %v726 = vrcp.pop %v720
      %v727 = vrcp.pop %v723
      %v728 = vmul.f32 %v705, %v724
      %v729 = vmul.f32 %v707, %v725
      %v730 = vmul.f32 %v709, %v726
      %v731 = vmul.f32 %v711, %v727
      %v733 = vsel %vm383, %v728, 0
      %735 = vmatprep.subr.mxu0 0.0
      %736 = vmatpush1.msra.mxu0 %v372
      %737 = vmatprep.subr.mxu0 0.0
      %738 = vmatpush1.msra.mxu0 0.0
      %739 = vmatprep.subr.mxu0 0.0
      %740 = vmatpush1.msra.mxu0 0.0
      %741 = vmatprep.subr.mxu0 0.0
      %742 = vmatpush1.msra.mxu0 0.0
      %743 = vmatprep.subr.mxu0 0.0
      %744 = vmatpush1.msra.mxu0 0.0
      %745 = vmatprep.subr.mxu0 0.0
      %746 = vmatpush1.msra.mxu0 0.0
      %747 = vmatprep.subr.mxu0 0.0
      %748 = vmatpush1.msra.mxu0 0.0
      %749 = vmatprep.subr.mxu0 0.0
      %750 = vmatpush1.msra.mxu0 0.0
      %751 = vmatprep.subr.mxu0 0.0
      %752 = vmatpush1.msra.mxu0 0.0
      %753 = vmatprep.subr.mxu0 0.0
      %754 = vmatpush1.msra.mxu0 0.0
      %755 = vmatprep.subr.mxu0 0.0
      %756 = vmatpush1.msra.mxu0 0.0
      %757 = vmatprep.subr.mxu0 0.0
      %758 = vmatpush1.msra.mxu0 0.0
      %759 = vmatprep.subr.mxu0 0.0
      %760 = vmatpush1.msra.mxu0 0.0
      %761 = vmatprep.subr.mxu0 0.0
      %762 = vmatpush1.msra.mxu0 0.0
      %763 = vmatprep.subr.mxu0 0.0
      %764 = vmatpush1.msra.mxu0 0.0
      %765 = vmatprep.subr.mxu0 0.0
      %766 = vmatpush1.msra.mxu0 0.0
      %767 = vmatprep.subr.mxu0 0.0
      %768 = vmatpush1.msra.mxu0 0.0
      %769 = vmatprep.subr.mxu0 0.0
      %770 = vmatpush1.msra.mxu0 0.0
      %771 = vmatprep.subr.mxu0 0.0
      %772 = vmatpush1.msra.mxu0 0.0
      %773 = vmatprep.subr.mxu0 0.0
      %774 = vmatpush1.msra.mxu0 0.0
      %775 = vmatprep.subr.mxu0 0.0
      %776 = vmatpush1.msra.mxu0 0.0
      %777 = vmatprep.subr.mxu0 0.0
      %778 = vmatpush1.msra.mxu0 0.0
      %779 = vmatprep.subr.mxu0 0.0
      %780 = vmatpush1.msra.mxu0 0.0
      %781 = vmatprep.subr.mxu0 0.0
      %782 = vmatpush1.msra.mxu0 0.0
      %783 = vmatprep.subr.mxu0 0.0
      %784 = vmatpush1.msra.mxu0 0.0
      %785 = vmatprep.subr.mxu0 0.0
      %786 = vmatpush1.msra.mxu0 0.0
      %787 = vmatprep.subr.mxu0 0.0
      %788 = vmatpush1.msra.mxu0 0.0
      %789 = vmatprep.subr.mxu0 0.0
      %790 = vmatpush1.msra.mxu0 0.0
      %791 = vmatprep.subr.mxu0 0.0
      %792 = vmatpush1.msra.mxu0 0.0
      %793 = vmatprep.subr.mxu0 0.0
      %794 = vmatpush1.msra.mxu0 0.0
      %795 = vmatprep.subr.mxu0 0.0
      %796 = vmatpush1.msra.mxu0 0.0
      %797 = vmatprep.subr.mxu0 0.0
      %798 = vmatpush1.msra.mxu0 0.0
      %799 = vmatprep.mubr.f32.mxu0 0.0
      %800 = vmatmul.mubr.f32.gmra.mrb[0].mxu0 %v733
      %v801 = vpop.f32.mrb[0].mxu0
      %v802 = vadd.f32 0.0, %v801
      %v803 = vpop.f32.mrb[0].mxu0
      %804 = vdwg.mxu0
      %v806 = vsel %vm383, %v729, 0
      %808 = vmatprep.subr.mxu0 0.0
      %809 = vmatpush1.msra.mxu0 %v373
      %810 = vmatprep.subr.mxu0 0.0
      %811 = vmatpush1.msra.mxu0 0.0
      %812 = vmatprep.subr.mxu0 0.0
      %813 = vmatpush1.msra.mxu0 0.0
      %814 = vmatprep.subr.mxu0 0.0
      %815 = vmatpush1.msra.mxu0 0.0
      %816 = vmatprep.subr.mxu0 0.0
      %817 = vmatpush1.msra.mxu0 0.0
      %818 = vmatprep.subr.mxu0 0.0
      %819 = vmatpush1.msra.mxu0 0.0
      %820 = vmatprep.subr.mxu0 0.0
      %821 = vmatpush1.msra.mxu0 0.0
      %822 = vmatprep.subr.mxu0 0.0
      %823 = vmatpush1.msra.mxu0 0.0
      %824 = vmatprep.subr.mxu0 0.0
      %825 = vmatpush1.msra.mxu0 0.0
      %826 = vmatprep.subr.mxu0 0.0
      %827 = vmatpush1.msra.mxu0 0.0
      %828 = vmatprep.subr.mxu0 0.0
      %829 = vmatpush1.msra.mxu0 0.0
      %830 = vmatprep.subr.mxu0 0.0
      %831 = vmatpush1.msra.mxu0 0.0
      %832 = vmatprep.subr.mxu0 0.0
      %833 = vmatpush1.msra.mxu0 0.0
      %834 = vmatprep.subr.mxu0 0.0
      %835 = vmatpush1.msra.mxu0 0.0
      %836 = vmatprep.subr.mxu0 0.0
      %837 = vmatpush1.msra.mxu0 0.0
      %838 = vmatprep.subr.mxu0 0.0
      %839 = vmatpush1.msra.mxu0 0.0
      %840 = vmatprep.subr.mxu0 0.0
      %841 = vmatpush1.msra.mxu0 0.0
      %842 = vmatprep.subr.mxu0 0.0
      %843 = vmatpush1.msra.mxu0 0.0
      %844 = vmatprep.subr.mxu0 0.0
      %845 = vmatpush1.msra.mxu0 0.0
      %846 = vmatprep.subr.mxu0 0.0
      %847 = vmatpush1.msra.mxu0 0.0
      %848 = vmatprep.subr.mxu0 0.0
      %849 = vmatpush1.msra.mxu0 0.0
      %850 = vmatprep.subr.mxu0 0.0
      %851 = vmatpush1.msra.mxu0 0.0
      %852 = vmatprep.subr.mxu0 0.0
      %853 = vmatpush1.msra.mxu0 0.0
      %854 = vmatprep.subr.mxu0 0.0
      %855 = vmatpush1.msra.mxu0 0.0
      %856 = vmatprep.subr.mxu0 0.0
      %857 = vmatpush1.msra.mxu0 0.0
      %858 = vmatprep.subr.mxu0 0.0
      %859 = vmatpush1.msra.mxu0 0.0
      %860 = vmatprep.subr.mxu0 0.0
      %861 = vmatpush1.msra.mxu0 0.0
      %862 = vmatprep.subr.mxu0 0.0
      %863 = vmatpush1.msra.mxu0 0.0
      %864 = vmatprep.subr.mxu0 0.0
      %865 = vmatpush1.msra.mxu0 0.0
      %866 = vmatprep.subr.mxu0 0.0
      %867 = vmatpush1.msra.mxu0 0.0
      %868 = vmatprep.subr.mxu0 0.0
      %869 = vmatpush1.msra.mxu0 0.0
      %870 = vmatprep.subr.mxu0 0.0
      %871 = vmatpush1.msra.mxu0 0.0
      %872 = vmatprep.mubr.f32.mxu0 0.0
      %873 = vmatmul.mubr.f32.gmra.mrb[0].mxu0 %v806
      %v874 = vpop.f32.mrb[0].mxu0
      %v875 = vadd.f32 0.0, %v874
      %v876 = vpop.f32.mrb[0].mxu0
      %877 = vdwg.mxu0
      %v879 = vsel %vm383, %v730, 0
      %881 = vmatprep.subr.mxu0 0.0
      %882 = vmatpush1.msra.mxu0 %v374
      %883 = vmatprep.subr.mxu0 0.0
      %884 = vmatpush1.msra.mxu0 0.0
      %885 = vmatprep.subr.mxu0 0.0
      %886 = vmatpush1.msra.mxu0 0.0
      %887 = vmatprep.subr.mxu0 0.0
      %888 = vmatpush1.msra.mxu0 0.0
      %889 = vmatprep.subr.mxu0 0.0
      %890 = vmatpush1.msra.mxu0 0.0
      %891 = vmatprep.subr.mxu0 0.0
      %892 = vmatpush1.msra.mxu0 0.0
      %893 = vmatprep.subr.mxu0 0.0
      %894 = vmatpush1.msra.mxu0 0.0
      %895 = vmatprep.subr.mxu0 0.0
      %896 = vmatpush1.msra.mxu0 0.0
      %897 = vmatprep.subr.mxu0 0.0
      %898 = vmatpush1.msra.mxu0 0.0
      %899 = vmatprep.subr.mxu0 0.0
      %900 = vmatpush1.msra.mxu0 0.0
      %901 = vmatprep.subr.mxu0 0.0
      %902 = vmatpush1.msra.mxu0 0.0
      %903 = vmatprep.subr.mxu0 0.0
      %904 = vmatpush1.msra.mxu0 0.0
      %905 = vmatprep.subr.mxu0 0.0
      %906 = vmatpush1.msra.mxu0 0.0
      %907 = vmatprep.subr.mxu0 0.0
      %908 = vmatpush1.msra.mxu0 0.0
      %909 = vmatprep.subr.mxu0 0.0
      %910 = vmatpush1.msra.mxu0 0.0
      %911 = vmatprep.subr.mxu0 0.0
      %912 = vmatpush1.msra.mxu0 0.0
      %913 = vmatprep.subr.mxu0 0.0
      %914 = vmatpush1.msra.mxu0 0.0
      %915 = vmatprep.subr.mxu0 0.0
      %916 = vmatpush1.msra.mxu0 0.0
      %917 = vmatprep.subr.mxu0 0.0
      %918 = vmatpush1.msra.mxu0 0.0
      %919 = vmatprep.subr.mxu0 0.0
      %920 = vmatpush1.msra.mxu0 0.0
      %921 = vmatprep.subr.mxu0 0.0
      %922 = vmatpush1.msra.mxu0 0.0
      %923 = vmatprep.subr.mxu0 0.0
      %924 = vmatpush1.msra.mxu0 0.0
      %925 = vmatprep.subr.mxu0 0.0
      %926 = vmatpush1.msra.mxu0 0.0
      %927 = vmatprep.subr.mxu0 0.0
      %928 = vmatpush1.msra.mxu0 0.0
      %929 = vmatprep.subr.mxu0 0.0
      %930 = vmatpush1.msra.mxu0 0.0
      %931 = vmatprep.subr.mxu0 0.0
      %932 = vmatpush1.msra.mxu0 0.0
      %933 = vmatprep.subr.mxu0 0.0
      %934 = vmatpush1.msra.mxu0 0.0
      %935 = vmatprep.subr.mxu0 0.0
      %936 = vmatpush1.msra.mxu0 0.0
      %937 = vmatprep.subr.mxu0 0.0
      %938 = vmatpush1.msra.mxu0 0.0
      %939 = vmatprep.subr.mxu0 0.0
      %940 = vmatpush1.msra.mxu0 0.0
      %941 = vmatprep.subr.mxu0 0.0
      %942 = vmatpush1.msra.mxu0 0.0
      %943 = vmatprep.subr.mxu0 0.0
      %944 = vmatpush1.msra.mxu0 0.0
      %945 = vmatprep.mubr.f32.mxu0 0.0
      %946 = vmatmul.mubr.f32.gmra.mrb[0].mxu0 %v879
      %v947 = vpop.f32.mrb[0].mxu0
      %v948 = vadd.f32 0.0, %v947
      %v949 = vpop.f32.mrb[0].mxu0
      %950 = vdwg.mxu0
      %v952 = vsel %vm383, %v731, 0
      %954 = vmatprep.subr.mxu0 0.0
      %955 = vmatpush1.msra.mxu0 %v375
      %956 = vmatprep.subr.mxu0 0.0
      %957 = vmatpush1.msra.mxu0 0.0
      %958 = vmatprep.subr.mxu0 0.0
      %959 = vmatpush1.msra.mxu0 0.0
      %960 = vmatprep.subr.mxu0 0.0
      %961 = vmatpush1.msra.mxu0 0.0
      %962 = vmatprep.subr.mxu0 0.0
      %963 = vmatpush1.msra.mxu0 0.0
      %964 = vmatprep.subr.mxu0 0.0
      %965 = vmatpush1.msra.mxu0 0.0
      %966 = vmatprep.subr.mxu0 0.0
      %967 = vmatpush1.msra.mxu0 0.0
      %968 = vmatprep.subr.mxu0 0.0
      %969 = vmatpush1.msra.mxu0 0.0
      %970 = vmatprep.subr.mxu0 0.0
      %971 = vmatpush1.msra.mxu0 0.0
      %972 = vmatprep.subr.mxu0 0.0
      %973 = vmatpush1.msra.mxu0 0.0
      %974 = vmatprep.subr.mxu0 0.0
      %975 = vmatpush1.msra.mxu0 0.0
      %976 = vmatprep.subr.mxu0 0.0
      %977 = vmatpush1.msra.mxu0 0.0
      %978 = vmatprep.subr.mxu0 0.0
      %979 = vmatpush1.msra.mxu0 0.0
      %980 = vmatprep.subr.mxu0 0.0
      %981 = vmatpush1.msra.mxu0 0.0
      %982 = vmatprep.subr.mxu0 0.0
      %983 = vmatpush1.msra.mxu0 0.0
      %984 = vmatprep.subr.mxu0 0.0
      %985 = vmatpush1.msra.mxu0 0.0
      %986 = vmatprep.subr.mxu0 0.0
      %987 = vmatpush1.msra.mxu0 0.0
      %988 = vmatprep.subr.mxu0 0.0
      %989 = vmatpush1.msra.mxu0 0.0
      %990 = vmatprep.subr.mxu0 0.0
      %991 = vmatpush1.msra.mxu0 0.0
      %992 = vmatprep.subr.mxu0 0.0
      %993 = vmatpush1.msra.mxu0 0.0
      %994 = vmatprep.subr.mxu0 0.0
      %995 = vmatpush1.msra.mxu0 0.0
      %996 = vmatprep.subr.mxu0 0.0
      %997 = vmatpush1.msra.mxu0 0.0
      %998 = vmatprep.subr.mxu0 0.0
      %999 = vmatpush1.msra.mxu0 0.0
      %1000 = vmatprep.subr.mxu0 0.0
      %1001 = vmatpush1.msra.mxu0 0.0
      %1002 = vmatprep.subr.mxu0 0.0
      %1003 = vmatpush1.msra.mxu0 0.0
      %1004 = vmatprep.subr.mxu0 0.0
      %1005 = vmatpush1.msra.mxu0 0.0
      %1006 = vmatprep.subr.mxu0 0.0
      %1007 = vmatpush1.msra.mxu0 0.0
      %1008 = vmatprep.subr.mxu0 0.0
      %1009 = vmatpush1.msra.mxu0 0.0
      %1010 = vmatprep.subr.mxu0 0.0
      %1011 = vmatpush1.msra.mxu0 0.0
      %1012 = vmatprep.subr.mxu0 0.0
      %1013 = vmatpush1.msra.mxu0 0.0
      %1014 = vmatprep.subr.mxu0 0.0
      %1015 = vmatpush1.msra.mxu0 0.0
      %1016 = vmatprep.subr.mxu0 0.0
      %1017 = vmatpush1.msra.mxu0 0.0
      %1018 = vmatprep.mubr.f32.mxu0 0.0
      %1019 = vmatmul.mubr.f32.gmra.mrb[0].mxu0 %v952
      %v1020 = vpop.f32.mrb[0].mxu0
      %v1021 = vadd.f32 0.0, %v1020
      %v1022 = vpop.f32.mrb[0].mxu0
      %1023 = vdwg.mxu0
      %1024 = vst.msk [vmem:[%s295] sm:$0xff] %vm383, %v802
      %1025 = vst.msk [vmem:[%s295 + $0x8] sm:$0xff] %vm383, %v875
      %1026 = vst.msk [vmem:[%s295 + $0x10] sm:$0xff] %vm383, %v948
      %1027 = vst.msk [vmem:[%s295 + $0x18] sm:$0xff] %vm383, %v1021
      %p1028 = scmp.lt.s32.totalorder %s16, 1
      %s1029 = scalar_select %p1028, %s16, 1
      %s1030 = smul.addr %s1029, 4
      %s1031 = smul.addr %s1030, 8
      %s1032 = scalar_lea.vmem %s5, %s1031
      // Predicated region
      $region41: #{singleblock_apply.49} parent=39 // pred_check
        %p1033 = pneg %p164
      $region42: #{singleblock_apply.49} parent=39 // pred_check_branch
        %1035 = sbr.rel (%p1033) target = $region44
      $region43: #{singleblock_apply.49} parent=39 // pred_region
        _
      $region44: #{singleblock_apply.49} parent=39 // pred_fallthru
        _
    $region40: #{singleblock_apply.49} parent=5 // pred_fallthru
      _
    %p1036 = scmp.le.s32.totalorder 2, %s11
    // Predicated region
    $region45: #{singleblock_apply.49} parent=5 // pred_check
      %p1037 = pneg %p1036
    $region46: #{singleblock_apply.49} parent=5 // pred_check_branch
      %1039 = sbr.rel (%p1037) target = $region48
    $region47: #{singleblock_apply.49} parent=5 // pred_region
      %s1040 = ssub.s32 %s11, 2
      // Predicated region
      $region49: #{singleblock_apply.49} parent=47 // pred_check
        %p1041 = pneg %p170
      $region50: #{singleblock_apply.49} parent=47 // pred_check_branch
        %1043 = sbr.rel (%p1041) target = $region52
      $region51: #{singleblock_apply.49} parent=47 // pred_region
        %p1044 = scmp.lt.s32.totalorder %s17, 1
        %s1045 = scalar_select %p1044, %s17, 1
        %s1046 = smul.addr %s1045, 4
        %s1047 = smul.addr %s1046, 8
        %s1048 = scalar_lea.vmem %s5, %s1047
      $region52: #{singleblock_apply.49} parent=47 // pred_fallthru
        _
    $region48: #{singleblock_apply.49} parent=5 // pred_fallthru
      _
  $region6: #{singleblock_apply.49} parent=0 // loop_footer
    %s15 = sadd.s32 1, %s11
  $region7: #{singleblock_apply.49} parent=0 // loop_footer_branch
    %10 = sbr.rel target = $region3
  $region8: #{singleblock_apply.49} parent=0 // loop_exit
    _

</llo_original>
